<compile_context>
chip_gen: v6e
topology: v6e:2x2x1
jax: 0.10.0
libtpu: 0.0.40
codegen_flags: <defaults>
</compile_context>

<pallas_src>
import math
from functools import partial

import jax
import jax.numpy as jnp
from jax import lax
from jax.experimental import pallas as pl
from jax.experimental.pallas import tpu as pltpu


def _leaky(x):                           # nn.LeakyReLU(0.2)
    return jnp.where(x >= 0, x, 0.2 * x)


def _layernorm(x, g, b, eps=1e-5):
    mu = jnp.mean(x, axis=-1, keepdims=True)
    xc = x - mu
    var = jnp.mean(xc * xc, axis=-1, keepdims=True)
    return xc * lax.rsqrt(var + eps) * g + b


def gt_stack_kernel(h_in_ref, wqkv_ref, wkv_ref, wf_ref,
                    w1_ref, b1_ref, w2_ref, b2_ref,
                    ln1g_ref, ln1b_ref, ln2g_ref, ln2b_ref,
                    vq_embT_ref, vq_emb_ref, vq_esq_ref, w_pred_ref,
                    logits_ref, vq_ref,
                    h_scratch,
                    *, nheads, head_dim, n_seq, seq_len,
                    commitment_cost, inv_total_elems):
    layer = pl.program_id(1)
    n_layers = pl.num_programs(1)
    D = nheads * head_dim
    M = n_seq * seq_len

    @pl.when(layer == 0)
    def _():
        # Load this batch block's input h and zero the resident accumulators.
        h_scratch[...] = h_in_ref[...].reshape(M, D)
        vq_ref[...] = jnp.zeros_like(vq_ref)
        logits_ref[...] = jnp.zeros_like(logits_ref)

    h = h_scratch[...]                           # (M, D) f32, VMEM-resident

    # Current layer's weights: full-(L, ...) blocks are VMEM-resident
    # (constant index_map -> DMA'd once); slice the layer here.
    wqkv = wqkv_ref[layer]                       # (D, 3D) bf16
    wkv = wkv_ref[layer]                         # (D, 2D) bf16
    wf = wf_ref[layer]                           # (D, D)  bf16
    w1 = w1_ref[layer]
    b1 = b1_ref[layer]
    w2 = w2_ref[layer]
    b2 = b2_ref[layer]
    ln1g = ln1g_ref[layer]
    ln1b = ln1b_ref[layer]
    ln2g = ln2g_ref[layer]
    ln2b = ln2b_ref[layer]
    e_t = vq_embT_ref[layer]                     # (D, Ncp) bf16 (zero-padded)
    e_cb = vq_emb_ref[layer]                     # (Ncp, D) bf16 (zero-padded)
    e_sq = vq_esq_ref[layer]                     # (1, Ncp) f32 (+1e9 padding)

    def mm(a, b_bf16):                           # bf16 MXU matmul, f32 accum
        return jnp.dot(a.astype(jnp.bfloat16), b_bf16,
                       preferred_element_type=jnp.float32)

    # ---- fused Q/K/V projection over all rows of the batch block ----
    qkv = mm(h, wqkv)                            # (M, 3D) f32

    # ---- VectorQuantizer: softmax(-dist) soft assignment over codebook ----
    x_sq = jnp.sum(h * h, axis=1, keepdims=True)                 # (M, 1)
    xe = mm(h, e_t)                                              # (M, Ncp)
    neg = 2.0 * xe - x_sq - e_sq                                 # = -distances
    mneg = jnp.max(neg, axis=-1, keepdims=True)
    p = jnp.exp(neg - mneg)                      # padded codes underflow to 0
    w_soft = p * pl.reciprocal(jnp.sum(p, axis=-1, keepdims=True), approx=True)
    quant = mm(w_soft, e_cb)                                     # (M, D) f32
    diff = quant - h
    sq = jnp.sum(diff * diff, axis=1, keepdims=True)             # (M, 1)
    mse = jnp.sum(sq, axis=0, keepdims=True) * inv_total_elems   # (1, 1)
    # q_latent_loss + commitment_cost * e_latent_loss (same forward value)
    vq_ref[...] = vq_ref[...] + (1.0 + commitment_cost) * mse

    # fused K/V projection of the (straight-through) quantized features
    kvn = mm(quant, wkv)                                         # (M, 2D)

    # ---- attention per sequence: softmax over [K ; K_vq] via two score
    #      blocks sharing one max (no concatenation) ----
    scale = 1.0 / math.sqrt(head_dim)

    def heads(x2d):                              # (S, D) -> (nheads, S, hd)
        return jnp.swapaxes(x2d.reshape(seq_len, nheads, head_dim),
                            0, 1).astype(jnp.bfloat16)

    ctx_rows = []
    for s in range(n_seq):                       # static tiny loop
        r0 = s * seq_len
        q_h = heads(qkv[r0:r0 + seq_len, 0:D])
        k_h = heads(qkv[r0:r0 + seq_len, D:2 * D])
        v_h = heads(qkv[r0:r0 + seq_len, 2 * D:3 * D])
        kn_h = heads(kvn[r0:r0 + seq_len, 0:D])
        vn_h = heads(kvn[r0:r0 + seq_len, D:2 * D])

        s1 = jnp.einsum('hqd,hkd->hqk', q_h, k_h,
                        preferred_element_type=jnp.float32) * scale
        s2 = jnp.einsum('hqd,hkd->hqk', q_h, kn_h,
                        preferred_element_type=jnp.float32) * scale
        m = jnp.maximum(jnp.max(s1, axis=-1, keepdims=True),
                        jnp.max(s2, axis=-1, keepdims=True))
        p1 = jnp.exp(s1 - m)
        p2 = jnp.exp(s2 - m)
        denom = (jnp.sum(p1, axis=-1, keepdims=True)
                 + jnp.sum(p2, axis=-1, keepdims=True))
        ctx_h = (jnp.einsum('hqk,hkd->hqd', p1.astype(jnp.bfloat16), v_h,
                            preferred_element_type=jnp.float32)
                 + jnp.einsum('hqk,hkd->hqd', p2.astype(jnp.bfloat16), vn_h,
                              preferred_element_type=jnp.float32))
        ctx_h = ctx_h * pl.reciprocal(denom, approx=True)
        # TODO(synk): head split/merge is a small XLU relayout; a head-major
        # weight layout would remove it but is negligible at head_dim=32, S=8.
        ctx_rows.append(jnp.swapaxes(ctx_h, 0, 1).reshape(seq_len, D))
    ctx = jnp.concatenate(ctx_rows, axis=0)      # (M, D)

    # ---- out-proj + LeakyReLU, residual + LN1, FFN, residual + LN2 ----
    h_sa = _leaky(mm(ctx, wf))
    h1 = _layernorm(h_sa + h, ln1g, ln1b)
    hf = _leaky(mm(h1, w1) + b1)
    hf = mm(hf, w2) + b2
    h2 = _layernorm(h1 + hf, ln2g, ln2b)
    h_scratch[...] = h2

    # ---- fused predictor on the CLS (first) token of each sequence ----
    @pl.when(layer == n_layers - 1)
    def _():
        cls = jnp.concatenate(
            [h2[s * seq_len:s * seq_len + 1, :] for s in range(n_seq)], axis=0)
        logits_ref[...] = mm(cls, w_pred_ref[...])     # (bt, C_pad)


def gt_forward(h, params, w_pred_pad, *, nheads, num_class, seqs_per_block=None):
    """All GT layers + fused predictor in one gridded pallas_call."""
    B, S, D = h.shape
    L = params['wqkv'].shape[0]
    Ncp = params['vq_emb'].shape[1]
    Cpad = w_pred_pad.shape[1]
    head_dim = D // nheads
    bt = B if seqs_per_block is None else seqs_per_block
    assert B % bt == 0
    nb = B // bt   # NOTE: on v7x keep nb >= 2 so the parallel batch axis
                   # can be sharded across the 2 TensorCores.

    kernel = partial(gt_stack_kernel, nheads=nheads, head_dim=head_dim,
                     n_seq=bt, seq_len=S, commitment_cost=0.25,
                     inv_total_elems=1.0 / float(B * S * D))

    cw3 = lambda b, l: (0, 0, 0)     # stacked weights: whole array, DMA'd once
    cw2 = lambda b, l: (0, 0)
    pb3 = lambda b, l: (b, 0, 0)     # per-batch-block data
    pb2 = lambda b, l: (b, 0)

    in_specs = [
        pl.BlockSpec((bt, S, D), pb3),            # h (input hidden state)
        pl.BlockSpec((L, D, 3 * D), cw3),         # [Wq|Wk|Wv]  bf16
        pl.BlockSpec((L, D, 2 * D), cw3),         # [Wk|Wv]     bf16
        pl.BlockSpec((L, D, D), cw3),             # Wf          bf16
        pl.BlockSpec((L, D, D), cw3),             # FFN1 W      bf16
        pl.BlockSpec((L, 1, D), cw3),             # FFN1 b      f32
        pl.BlockSpec((L, D, D), cw3),             # FFN2 W      bf16
        pl.BlockSpec((L, 1, D), cw3),             # FFN2 b      f32
        pl.BlockSpec((L, 1, D), cw3),             # LN1 gamma
        pl.BlockSpec((L, 1, D), cw3),             # LN1 beta
        pl.BlockSpec((L, 1, D), cw3),             # LN2 gamma
        pl.BlockSpec((L, 1, D), cw3),             # LN2 beta
        pl.BlockSpec((L, D, Ncp), cw3),           # codebook^T  bf16 (padded)
        pl.BlockSpec((L, Ncp, D), cw3),           # codebook    bf16 (padded)
        pl.BlockSpec((L, 1, Ncp), cw3),           # sum(E^2)    f32 (+1e9 pad)
        pl.BlockSpec((D, Cpad), cw2),             # predictor W bf16 (padded)
    ]
    out_specs = (
        pl.BlockSpec((bt, Cpad), pb2),            # lane-dense padded logits
        pl.BlockSpec((1, 128), pb2),              # per-batch-block vq partial
    )
    out_shape = (jax.ShapeDtypeStruct((B, Cpad), jnp.float32),
                 jax.ShapeDtypeStruct((nb, 128), jnp.float32))

    logits_pad, vq = pl.pallas_call(
        kernel,
        out_shape=out_shape,
        grid=(nb, L),
        in_specs=in_specs,
        out_specs=out_specs,
        scratch_shapes=[pltpu.VMEM((bt * S, D), jnp.float32)],   # resident h
        compiler_params=pltpu.CompilerParams(
            dimension_semantics=("parallel", "arbitrary")),
    )(h, params['wqkv'], params['wkv'], params['wf'], params['w1'],
      params['b1'], params['w2'], params['b2'],
      params['ln1g'], params['ln1b'], params['ln2g'], params['ln2b'],
      params['vq_embT'], params['vq_emb'], params['vq_esq'], w_pred_pad)

    return logits_pad[:, :num_class], jnp.sum(vq[:, 0])


if __name__ == "__main__":
    key = jax.random.PRNGKey(0)
    keys = iter(jax.random.split(key, 128))

    # small config consistent with the module's forward
    B, Ltok = 2, 8               # batch of sequences, tokens per sequence
    emb_dim, id_dim = 16, 16     # embeddings_dimension, id_dim
    D = 2 * (emb_dim + id_dim)   # model dim (meta_path_flag = False) -> 64
    nheads = 2
    num_layers = 2
    num_class = 4
    vq_dim = 32                  # num quantized embeddings (Nc)
    Nc_pad = 128                 # lane-dense padded codebook size
    C_pad = 128                  # lane-dense padded predictor width
    N_nodes = 10

    # TODO(synk): myGAT hgnn backbone not provided; use deterministic features.
    features = jax.random.normal(next(keys), (N_nodes, emb_dim), jnp.float32)
    h_table = jnp.concatenate(
        [features, jnp.zeros((1, emb_dim), jnp.float32)], axis=0)   # (N+1, emb)

    node_token_id = jax.random.normal(next(keys), (1, id_dim), jnp.float32)
    seqs = jax.random.randint(next(keys), (B, 3, Ltok), 0, N_nodes + 1)

    # --- graph_seq construction (plain-JAX glue: gather / concat / reshape) ---
    seqs2 = seqs[:, 1:, :]                                   # (B, 2, L)
    h_node = h_table[seqs2]                                  # (B, 2, L, emb)
    tok = jnp.broadcast_to(node_token_id, (B, 2, Ltok, id_dim))
    h_node = jnp.concatenate([h_node, tok], axis=3)          # (B, 2, L, emb+id)
    graph_seq = jnp.transpose(h_node, (0, 2, 1, 3)).reshape(B, Ltok, D)
    h = graph_seq.astype(jnp.float32)                        # (B, S=L, D)

    # --- deterministic, stacked parameter init (fused + bf16 weights) ---
    def lin(k, din, dout, scale=0.1):
        return scale * jax.random.normal(k, (din, dout), jnp.float32)

    wqkv_l, wkv_l, wf_l, w1_l, b1_l, w2_l, b2_l = [], [], [], [], [], [], []
    ln1g_l, ln1b_l, ln2g_l, ln2b_l = [], [], [], []
    vqe_l, vqeT_l, vqs_l = [], [], []
    for _ in range(num_layers):
        wq = lin(next(keys), D, D)
        wk = lin(next(keys), D, D)
        wv = lin(next(keys), D, D)
        wqkv_l.append(jnp.concatenate([wq, wk, wv], axis=1))     # (D, 3D)
        wkv_l.append(jnp.concatenate([wk, wv], axis=1))          # (D, 2D)
        wf_l.append(lin(next(keys), D, D))
        w1_l.append(lin(next(keys), D, D))
        b1_l.append(0.1 * jax.random.normal(next(keys), (1, D), jnp.float32))
        w2_l.append(lin(next(keys), D, D))
        b2_l.append(0.1 * jax.random.normal(next(keys), (1, D), jnp.float32))
        ln1g_l.append(jnp.ones((1, D), jnp.float32))
        ln1b_l.append(jnp.zeros((1, D), jnp.float32))
        ln2g_l.append(jnp.ones((1, D), jnp.float32))
        ln2b_l.append(jnp.zeros((1, D), jnp.float32))
        E = jax.random.uniform(next(keys), (vq_dim, D), jnp.float32,
                               minval=-1.0 / vq_dim, maxval=1.0 / vq_dim)
        Eb = E.astype(jnp.bfloat16)
        # lane-dense padded codebook: zero rows beyond Nc, +1e9 padded sum(E^2)
        E_pad = jnp.zeros((Nc_pad, D), jnp.bfloat16).at[:vq_dim].set(Eb)
        esq = jnp.sum(Eb.astype(jnp.float32) ** 2, axis=1)
        esq_pad = jnp.full((Nc_pad,), 1e9, jnp.float32).at[:vq_dim].set(esq)
        vqe_l.append(E_pad)                       # (Ncp, D)
        vqeT_l.append(E_pad.T)                    # (D, Ncp) pre-transposed
        vqs_l.append(esq_pad.reshape(1, Nc_pad))  # (1, Ncp)

    bf16 = jnp.bfloat16
    params = dict(
        wqkv=jnp.stack(wqkv_l).astype(bf16),   # (L, D, 3D)
        wkv=jnp.stack(wkv_l).astype(bf16),     # (L, D, 2D)
        wf=jnp.stack(wf_l).astype(bf16),
        w1=jnp.stack(w1_l).astype(bf16),
        b1=jnp.stack(b1_l),
        w2=jnp.stack(w2_l).astype(bf16),
        b2=jnp.stack(b2_l),
        ln1g=jnp.stack(ln1g_l), ln1b=jnp.stack(ln1b_l),
        ln2g=jnp.stack(ln2g_l), ln2b=jnp.stack(ln2b_l),
        vq_emb=jnp.stack(vqe_l),               # (L, Ncp, D) bf16
        vq_embT=jnp.stack(vqeT_l),             # (L, D, Ncp) bf16
        vq_esq=jnp.stack(vqs_l),               # (L, 1, Ncp) f32
    )
    w_pred = lin(next(keys), D, num_class)
    w_pred_pad = jnp.zeros((D, C_pad), jnp.float32).at[:, :num_class].set(
        w_pred).astype(bf16)                   # lane-padded predictor weight

    # --- forward: all layers + predictor in one gridded pallas_call ---
    logits, vq_total = gt_forward(h, params, w_pred_pad,
                                  nheads=nheads, num_class=num_class)

    jax.block_until_ready((logits, vq_total))
    assert logits.shape == (B, num_class)
    assert bool(jnp.all(jnp.isfinite(logits))) and bool(jnp.isfinite(vq_total))
    print("KERNEL_OK")
</pallas_src>

<mosaic_0001>
module attributes {stable_mosaic.version = 11 : i64} {
  func.func @gt_stack_kernel(%arg0: i32, %arg1: i32, %arg2: memref<2x8x64xf32, #tpu.memory_space<vmem>>, %arg3: memref<2x64x192xbf16, #tpu.memory_space<vmem>>, %arg4: memref<2x64x128xbf16, #tpu.memory_space<vmem>>, %arg5: memref<2x64x64xbf16, #tpu.memory_space<vmem>>, %arg6: memref<2x64x64xbf16, #tpu.memory_space<vmem>>, %arg7: memref<2x1x64xf32, #tpu.memory_space<vmem>>, %arg8: memref<2x64x64xbf16, #tpu.memory_space<vmem>>, %arg9: memref<2x1x64xf32, #tpu.memory_space<vmem>>, %arg10: memref<2x1x64xf32, #tpu.memory_space<vmem>>, %arg11: memref<2x1x64xf32, #tpu.memory_space<vmem>>, %arg12: memref<2x1x64xf32, #tpu.memory_space<vmem>>, %arg13: memref<2x1x64xf32, #tpu.memory_space<vmem>>, %arg14: memref<2x64x128xbf16, #tpu.memory_space<vmem>>, %arg15: memref<2x128x64xbf16, #tpu.memory_space<vmem>>, %arg16: memref<2x1x128xf32, #tpu.memory_space<vmem>>, %arg17: memref<64x128xbf16, #tpu.memory_space<vmem>>, %arg18: memref<2x128xf32, #tpu.memory_space<vmem>>, %arg19: memref<1x128xf32, #tpu.memory_space<vmem>>, %arg20: memref<16x64xf32, #tpu.memory_space<vmem>>) attributes {dimension_semantics = [#tpu.dimension_semantics<parallel>, #tpu.dimension_semantics<arbitrary>], iteration_bounds = array<i64: 1, 2>, scalar_prefetch = 0 : i64, scratch_operands = 1 : i64, tpu.core_type = #tpu.core_type<tc>, window_params = [{transform_indices = @transform_0, window_bounds = array<i64: 2, 8, 64>}, {pipeline_mode = #tpu.pipeline_mode<synchronous>, transform_indices = @transform_1, window_bounds = array<i64: 2, 64, 192>}, {pipeline_mode = #tpu.pipeline_mode<synchronous>, transform_indices = @transform_2, window_bounds = array<i64: 2, 64, 128>}, {pipeline_mode = #tpu.pipeline_mode<synchronous>, transform_indices = @transform_3, window_bounds = array<i64: 2, 64, 64>}, {pipeline_mode = #tpu.pipeline_mode<synchronous>, transform_indices = @transform_4, window_bounds = array<i64: 2, 64, 64>}, {pipeline_mode = #tpu.pipeline_mode<synchronous>, transform_indices = @transform_5, window_bounds = array<i64: 2, 1, 64>}, {pipeline_mode = #tpu.pipeline_mode<synchronous>, transform_indices = @transform_6, window_bounds = array<i64: 2, 64, 64>}, {pipeline_mode = #tpu.pipeline_mode<synchronous>, transform_indices = @transform_7, window_bounds = array<i64: 2, 1, 64>}, {pipeline_mode = #tpu.pipeline_mode<synchronous>, transform_indices = @transform_8, window_bounds = array<i64: 2, 1, 64>}, {pipeline_mode = #tpu.pipeline_mode<synchronous>, transform_indices = @transform_9, window_bounds = array<i64: 2, 1, 64>}, {pipeline_mode = #tpu.pipeline_mode<synchronous>, transform_indices = @transform_10, window_bounds = array<i64: 2, 1, 64>}, {pipeline_mode = #tpu.pipeline_mode<synchronous>, transform_indices = @transform_11, window_bounds = array<i64: 2, 1, 64>}, {pipeline_mode = #tpu.pipeline_mode<synchronous>, transform_indices = @transform_12, window_bounds = array<i64: 2, 64, 128>}, {pipeline_mode = #tpu.pipeline_mode<synchronous>, transform_indices = @transform_13, window_bounds = array<i64: 2, 128, 64>}, {pipeline_mode = #tpu.pipeline_mode<synchronous>, transform_indices = @transform_14, window_bounds = array<i64: 2, 1, 128>}, {pipeline_mode = #tpu.pipeline_mode<synchronous>, transform_indices = @transform_15, window_bounds = array<i64: 64, 128>}, {transform_indices = @transform_16, window_bounds = array<i64: 2, 128>}, {transform_indices = @transform_17, window_bounds = array<i64: 1, 128>}]} {
    %c0_i32 = arith.constant 0 : i32
    %0 = arith.cmpi eq, %arg1, %c0_i32 : i32
    %1 = arith.extui %0 : i1 to i32
    %c0_i32_0 = arith.constant 0 : i32
    %2 = arith.cmpi ne, %1, %c0_i32_0 : i32
    scf.if %2 {
      %c0_85 = arith.constant 0 : index
      %c0_86 = arith.constant 0 : index
      %c0_87 = arith.constant 0 : index
      %258 = vector.load %arg2[%c0_85, %c0_86, %c0_87] : memref<2x8x64xf32, #tpu.memory_space<vmem>>, vector<2x8x64xf32>
      %259 = vector.shape_cast %258 : vector<2x8x64xf32> to vector<16x64xf32>
      %c0_88 = arith.constant 0 : index
      %c0_89 = arith.constant 0 : index
      %260 = vector.load %arg20[%c0_88, %c0_89] : memref<16x64xf32, #tpu.memory_space<vmem>>, vector<16x64xf32>
      tpu.vector_store %arg20[%c0_88, %c0_89], %259 {strides = array<i32>} : memref<16x64xf32, #tpu.memory_space<vmem>>, vector<16x64xf32>,
      %cst_90 = arith.constant 0.000000e+00 : f32
      %261 = vector.broadcast %cst_90 : f32 to vector<1x128xf32>
      %c0_91 = arith.constant 0 : index
      %c0_92 = arith.constant 0 : index
      %262 = vector.load %arg19[%c0_91, %c0_92] : memref<1x128xf32, #tpu.memory_space<vmem>>, vector<1x128xf32>
      tpu.vector_store %arg19[%c0_91, %c0_92], %261 {strides = array<i32>} : memref<1x128xf32, #tpu.memory_space<vmem>>, vector<1x128xf32>,
      %cst_93 = arith.constant 0.000000e+00 : f32
      %263 = vector.broadcast %cst_93 : f32 to vector<2x128xf32>
      %c0_94 = arith.constant 0 : index
      %c0_95 = arith.constant 0 : index
      %264 = vector.load %arg18[%c0_94, %c0_95] : memref<2x128xf32, #tpu.memory_space<vmem>>, vector<2x128xf32>
      tpu.vector_store %arg18[%c0_94, %c0_95], %263 {strides = array<i32>} : memref<2x128xf32, #tpu.memory_space<vmem>>, vector<2x128xf32>,
    } else {
    }
    %c0 = arith.constant 0 : index
    %c0_1 = arith.constant 0 : index
    %3 = vector.load %arg20[%c0, %c0_1] : memref<16x64xf32, #tpu.memory_space<vmem>>, vector<16x64xf32>
    %4 = arith.index_cast %arg1 : i32 to index
    %c0_2 = arith.constant 0 : index
    %c0_3 = arith.constant 0 : index
    %5 = vector.load %arg3[%4, %c0_2, %c0_3] : memref<2x64x192xbf16, #tpu.memory_space<vmem>>, vector<1x64x192xbf16>
    %6 = vector.shape_cast %5 : vector<1x64x192xbf16> to vector<64x192xbf16>
    %7 = arith.index_cast %arg1 : i32 to index
    %c0_4 = arith.constant 0 : index
    %c0_5 = arith.constant 0 : index
    %8 = vector.load %arg4[%7, %c0_4, %c0_5] : memref<2x64x128xbf16, #tpu.memory_space<vmem>>, vector<1x64x128xbf16>
    %9 = vector.shape_cast %8 : vector<1x64x128xbf16> to vector<64x128xbf16>
    %10 = arith.index_cast %arg1 : i32 to index
    %c0_6 = arith.constant 0 : index
    %c0_7 = arith.constant 0 : index
    %11 = vector.load %arg5[%10, %c0_6, %c0_7] : memref<2x64x64xbf16, #tpu.memory_space<vmem>>, vector<1x64x64xbf16>
    %12 = vector.shape_cast %11 : vector<1x64x64xbf16> to vector<64x64xbf16>
    %13 = arith.index_cast %arg1 : i32 to index
    %c0_8 = arith.constant 0 : index
    %c0_9 = arith.constant 0 : index
    %14 = vector.load %arg6[%13, %c0_8, %c0_9] : memref<2x64x64xbf16, #tpu.memory_space<vmem>>, vector<1x64x64xbf16>
    %15 = vector.shape_cast %14 : vector<1x64x64xbf16> to vector<64x64xbf16>
    %16 = arith.index_cast %arg1 : i32 to index
    %c0_10 = arith.constant 0 : index
    %c0_11 = arith.constant 0 : index
    %17 = vector.load %arg7[%16, %c0_10, %c0_11] : memref<2x1x64xf32, #tpu.memory_space<vmem>>, vector<1x1x64xf32>
    %18 = vector.shape_cast %17 : vector<1x1x64xf32> to vector<1x64xf32>
    %19 = arith.index_cast %arg1 : i32 to index
    %c0_12 = arith.constant 0 : index
    %c0_13 = arith.constant 0 : index
    %20 = vector.load %arg8[%19, %c0_12, %c0_13] : memref<2x64x64xbf16, #tpu.memory_space<vmem>>, vector<1x64x64xbf16>
    %21 = vector.shape_cast %20 : vector<1x64x64xbf16> to vector<64x64xbf16>
    %22 = arith.index_cast %arg1 : i32 to index
    %c0_14 = arith.constant 0 : index
    %c0_15 = arith.constant 0 : index
    %23 = vector.load %arg9[%22, %c0_14, %c0_15] : memref<2x1x64xf32, #tpu.memory_space<vmem>>, vector<1x1x64xf32>
    %24 = vector.shape_cast %23 : vector<1x1x64xf32> to vector<1x64xf32>
    %25 = arith.index_cast %arg1 : i32 to index
    %c0_16 = arith.constant 0 : index
    %c0_17 = arith.constant 0 : index
    %26 = vector.load %arg10[%25, %c0_16, %c0_17] : memref<2x1x64xf32, #tpu.memory_space<vmem>>, vector<1x1x64xf32>
    %27 = vector.shape_cast %26 : vector<1x1x64xf32> to vector<1x64xf32>
    %28 = arith.index_cast %arg1 : i32 to index
    %c0_18 = arith.constant 0 : index
    %c0_19 = arith.constant 0 : index
    %29 = vector.load %arg11[%28, %c0_18, %c0_19] : memref<2x1x64xf32, #tpu.memory_space<vmem>>, vector<1x1x64xf32>
    %30 = vector.shape_cast %29 : vector<1x1x64xf32> to vector<1x64xf32>
    %31 = arith.index_cast %arg1 : i32 to index
    %c0_20 = arith.constant 0 : index
    %c0_21 = arith.constant 0 : index
    %32 = vector.load %arg12[%31, %c0_20, %c0_21] : memref<2x1x64xf32, #tpu.memory_space<vmem>>, vector<1x1x64xf32>
    %33 = vector.shape_cast %32 : vector<1x1x64xf32> to vector<1x64xf32>
    %34 = arith.index_cast %arg1 : i32 to index
    %c0_22 = arith.constant 0 : index
    %c0_23 = arith.constant 0 : index
    %35 = vector.load %arg13[%34, %c0_22, %c0_23] : memref<2x1x64xf32, #tpu.memory_space<vmem>>, vector<1x1x64xf32>
    %36 = vector.shape_cast %35 : vector<1x1x64xf32> to vector<1x64xf32>
    %37 = arith.index_cast %arg1 : i32 to index
    %c0_24 = arith.constant 0 : index
    %c0_25 = arith.constant 0 : index
    %38 = vector.load %arg14[%37, %c0_24, %c0_25] : memref<2x64x128xbf16, #tpu.memory_space<vmem>>, vector<1x64x128xbf16>
    %39 = vector.shape_cast %38 : vector<1x64x128xbf16> to vector<64x128xbf16>
    %40 = arith.index_cast %arg1 : i32 to index
    %c0_26 = arith.constant 0 : index
    %c0_27 = arith.constant 0 : index
    %41 = vector.load %arg15[%40, %c0_26, %c0_27] : memref<2x128x64xbf16, #tpu.memory_space<vmem>>, vector<1x128x64xbf16>
    %42 = vector.shape_cast %41 : vector<1x128x64xbf16> to vector<128x64xbf16>
    %43 = arith.index_cast %arg1 : i32 to index
    %c0_28 = arith.constant 0 : index
    %c0_29 = arith.constant 0 : index
    %44 = vector.load %arg16[%43, %c0_28, %c0_29] : memref<2x1x128xf32, #tpu.memory_space<vmem>>, vector<1x1x128xf32>
    %45 = vector.shape_cast %44 : vector<1x1x128xf32> to vector<1x128xf32>
    %46 = arith.truncf %3 : vector<16x64xf32> to vector<16x64xbf16>
    %cst = arith.constant dense<0.000000e+00> : vector<16x192xf32>
    %47 = tpu.matmul %46, %6, %cst {dimension_numbers = #tpu.dot_dimension_numbers<[1], [0], [0], [1], [0, 0, 1, 1], [], []>} : vector<16x64xbf16>, vector<64x192xbf16>, vector<16x192xf32> -> vector<16x192xf32>
    %48 = arith.mulf %3, %3 : vector<16x64xf32>
    %cst_30 = arith.constant dense<0.000000e+00> : vector<16xf32>
    %49 = vector.multi_reduction <add>, %48, %cst_30 [1] : vector<16x64xf32> to vector<16xf32>
    %50 = vector.shape_cast %49 : vector<16xf32> to vector<16x1xf32>
    %51 = arith.truncf %3 : vector<16x64xf32> to vector<16x64xbf16>
    %cst_31 = arith.constant dense<0.000000e+00> : vector<16x128xf32>
    %52 = tpu.matmul %51, %39, %cst_31 {dimension_numbers = #tpu.dot_dimension_numbers<[1], [0], [0], [1], [0, 0, 1, 1], [], []>} : vector<16x64xbf16>, vector<64x128xbf16>, vector<16x128xf32> -> vector<16x128xf32>
    %cst_32 = arith.constant 2.000000e+00 : f32
    %53 = vector.broadcast %cst_32 : f32 to vector<16x128xf32>
    %54 = arith.mulf %53, %52 : vector<16x128xf32>
    %55 = vector.broadcast %50 : vector<16x1xf32> to vector<16x128xf32>
    %56 = arith.subf %54, %55 : vector<16x128xf32>
    %57 = vector.broadcast %45 : vector<1x128xf32> to vector<16x128xf32>
    %58 = arith.subf %56, %57 : vector<16x128xf32>
    %cst_33 = arith.constant dense<0xFF800000> : vector<16xf32>
    %59 = vector.multi_reduction <maximumf>, %58, %cst_33 [1] : vector<16x128xf32> to vector<16xf32>
    %60 = vector.shape_cast %59 : vector<16xf32> to vector<16x1xf32>
    %61 = vector.broadcast %60 : vector<16x1xf32> to vector<16x128xf32>
    %62 = arith.subf %58, %61 : vector<16x128xf32>
    %63 = math.exp %62 : vector<16x128xf32>
    %cst_34 = arith.constant dense<0.000000e+00> : vector<16xf32>
    %64 = vector.multi_reduction <add>, %63, %cst_34 [1] : vector<16x128xf32> to vector<16xf32>
    %65 = vector.shape_cast %64 : vector<16xf32> to vector<16x1xf32>
    %66 = tpu.reciprocal %65 {approx = true} : vector<16x1xf32> -> vector<16x1xf32>
    %67 = vector.broadcast %66 : vector<16x1xf32> to vector<16x128xf32>
    %68 = arith.mulf %63, %67 : vector<16x128xf32>
    %69 = arith.truncf %68 : vector<16x128xf32> to vector<16x128xbf16>
    %cst_35 = arith.constant dense<0.000000e+00> : vector<16x64xf32>
    %70 = tpu.matmul %69, %42, %cst_35 {dimension_numbers = #tpu.dot_dimension_numbers<[1], [0], [0], [1], [0, 0, 1, 1], [], []>} : vector<16x128xbf16>, vector<128x64xbf16>, vector<16x64xf32> -> vector<16x64xf32>
    %71 = arith.subf %70, %3 : vector<16x64xf32>
    %72 = arith.mulf %71, %71 : vector<16x64xf32>
    %cst_36 = arith.constant dense<0.000000e+00> : vector<16xf32>
    %73 = vector.multi_reduction <add>, %72, %cst_36 [1] : vector<16x64xf32> to vector<16xf32>
    %74 = vector.shape_cast %73 : vector<16xf32> to vector<16x1xf32>
    %cst_37 = arith.constant dense<0.000000e+00> : vector<1xf32>
    %75 = vector.multi_reduction <add>, %74, %cst_37 [0] : vector<16x1xf32> to vector<1xf32>
    %76 = vector.shape_cast %75 : vector<1xf32> to vector<1x1xf32>
    %cst_38 = arith.constant 9.765625E-4 : f32
    %77 = vector.broadcast %cst_38 : f32 to vector<1x1xf32>
    %78 = arith.mulf %76, %77 : vector<1x1xf32>
    %c0_39 = arith.constant 0 : index
    %c0_40 = arith.constant 0 : index
    %79 = vector.load %arg19[%c0_39, %c0_40] : memref<1x128xf32, #tpu.memory_space<vmem>>, vector<1x128xf32>
    %cst_41 = arith.constant 1.250000e+00 : f32
    %80 = vector.broadcast %cst_41 : f32 to vector<1x1xf32>
    %81 = arith.mulf %80, %78 : vector<1x1xf32>
    %82 = vector.broadcast %81 : vector<1x1xf32> to vector<1x128xf32>
    %83 = arith.addf %79, %82 : vector<1x128xf32>
    %c0_42 = arith.constant 0 : index
    %c0_43 = arith.constant 0 : index
    %84 = vector.load %arg19[%c0_42, %c0_43] : memref<1x128xf32, #tpu.memory_space<vmem>>, vector<1x128xf32>
    tpu.vector_store %arg19[%c0_42, %c0_43], %83 {strides = array<i32>} : memref<1x128xf32, #tpu.memory_space<vmem>>, vector<1x128xf32>,
    %85 = arith.truncf %70 : vector<16x64xf32> to vector<16x64xbf16>
    %cst_44 = arith.constant dense<0.000000e+00> : vector<16x128xf32>
    %86 = tpu.matmul %85, %9, %cst_44 {dimension_numbers = #tpu.dot_dimension_numbers<[1], [0], [0], [1], [0, 0, 1, 1], [], []>} : vector<16x64xbf16>, vector<64x128xbf16>, vector<16x128xf32> -> vector<16x128xf32>
    %87 = vector.extract_strided_slice %47 {offsets = [0, 0], sizes = [8, 64], strides = [1, 1]} : vector<16x192xf32> to vector<8x64xf32>
    %88 = vector.shape_cast %87 : vector<8x64xf32> to vector<8x2x32xf32>
    %89 = tpu.transpose %88, [1, 0, 2] : vector<8x2x32xf32> -> vector<2x8x32xf32>
    %90 = arith.truncf %89 : vector<2x8x32xf32> to vector<2x8x32xbf16>
    %91 = vector.extract_strided_slice %47 {offsets = [0, 64], sizes = [8, 64], strides = [1, 1]} : vector<16x192xf32> to vector<8x64xf32>
    %92 = vector.shape_cast %91 : vector<8x64xf32> to vector<8x2x32xf32>
    %93 = tpu.transpose %92, [1, 0, 2] : vector<8x2x32xf32> -> vector<2x8x32xf32>
    %94 = arith.truncf %93 : vector<2x8x32xf32> to vector<2x8x32xbf16>
    %95 = vector.extract_strided_slice %47 {offsets = [0, 128], sizes = [8, 64], strides = [1, 1]} : vector<16x192xf32> to vector<8x64xf32>
    %96 = vector.shape_cast %95 : vector<8x64xf32> to vector<8x2x32xf32>
    %97 = tpu.transpose %96, [1, 0, 2] : vector<8x2x32xf32> -> vector<2x8x32xf32>
    %98 = arith.truncf %97 : vector<2x8x32xf32> to vector<2x8x32xbf16>
    %99 = vector.extract_strided_slice %86 {offsets = [0, 0], sizes = [8, 64], strides = [1, 1]} : vector<16x128xf32> to vector<8x64xf32>
    %100 = vector.shape_cast %99 : vector<8x64xf32> to vector<8x2x32xf32>
    %101 = tpu.transpose %100, [1, 0, 2] : vector<8x2x32xf32> -> vector<2x8x32xf32>
    %102 = arith.truncf %101 : vector<2x8x32xf32> to vector<2x8x32xbf16>
    %103 = vector.extract_strided_slice %86 {offsets = [0, 64], sizes = [8, 64], strides = [1, 1]} : vector<16x128xf32> to vector<8x64xf32>
    %104 = vector.shape_cast %103 : vector<8x64xf32> to vector<8x2x32xf32>
    %105 = tpu.transpose %104, [1, 0, 2] : vector<8x2x32xf32> -> vector<2x8x32xf32>
    %106 = arith.truncf %105 : vector<2x8x32xf32> to vector<2x8x32xbf16>
    "tpu.trace_start"() <{level = 10 : i32, message = "hqd,hkd->hqk"}> : () -> ()
    %cst_45 = arith.constant dense<0.000000e+00> : vector<2x8x8xf32>
    %107 = tpu.matmul %90, %94, %cst_45 {dimension_numbers = #tpu.dot_dimension_numbers<[2], [2], [1], [1], [0, 0, 0, 1, 1, 1], [0], [0]>} : vector<2x8x32xbf16>, vector<2x8x32xbf16>, vector<2x8x8xf32> -> vector<2x8x8xf32>
    "tpu.trace_stop"() : () -> ()
    %cst_46 = arith.constant 0.176776692 : f32
    %108 = vector.broadcast %cst_46 : f32 to vector<2x8x8xf32>
    %109 = arith.mulf %107, %108 : vector<2x8x8xf32>
    "tpu.trace_start"() <{level = 10 : i32, message = "hqd,hkd->hqk"}> : () -> ()
    %cst_47 = arith.constant dense<0.000000e+00> : vector<2x8x8xf32>
    %110 = tpu.matmul %90, %102, %cst_47 {dimension_numbers = #tpu.dot_dimension_numbers<[2], [2], [1], [1], [0, 0, 0, 1, 1, 1], [0], [0]>} : vector<2x8x32xbf16>, vector<2x8x32xbf16>, vector<2x8x8xf32> -> vector<2x8x8xf32>
    "tpu.trace_stop"() : () -> ()
    %cst_48 = arith.constant 0.176776692 : f32
    %111 = vector.broadcast %cst_48 : f32 to vector<2x8x8xf32>
    %112 = arith.mulf %110, %111 : vector<2x8x8xf32>
    %cst_49 = arith.constant dense<0xFF800000> : vector<2x8xf32>
    %113 = vector.multi_reduction <maximumf>, %109, %cst_49 [2] : vector<2x8x8xf32> to vector<2x8xf32>
    %114 = vector.shape_cast %113 : vector<2x8xf32> to vector<2x8x1xf32>
    %cst_50 = arith.constant dense<0xFF800000> : vector<2x8xf32>
    %115 = vector.multi_reduction <maximumf>, %112, %cst_50 [2] : vector<2x8x8xf32> to vector<2x8xf32>
    %116 = vector.shape_cast %115 : vector<2x8xf32> to vector<2x8x1xf32>
    %117 = arith.maximumf %114, %116 : vector<2x8x1xf32>
    %118 = vector.broadcast %117 : vector<2x8x1xf32> to vector<2x8x8xf32>
    %119 = arith.subf %109, %118 : vector<2x8x8xf32>
    %120 = math.exp %119 : vector<2x8x8xf32>
    %121 = vector.broadcast %117 : vector<2x8x1xf32> to vector<2x8x8xf32>
    %122 = arith.subf %112, %121 : vector<2x8x8xf32>
    %123 = math.exp %122 : vector<2x8x8xf32>
    %cst_51 = arith.constant dense<0.000000e+00> : vector<2x8xf32>
    %124 = vector.multi_reduction <add>, %120, %cst_51 [2] : vector<2x8x8xf32> to vector<2x8xf32>
    %125 = vector.shape_cast %124 : vector<2x8xf32> to vector<2x8x1xf32>
    %cst_52 = arith.constant dense<0.000000e+00> : vector<2x8xf32>
    %126 = vector.multi_reduction <add>, %123, %cst_52 [2] : vector<2x8x8xf32> to vector<2x8xf32>
    %127 = vector.shape_cast %126 : vector<2x8xf32> to vector<2x8x1xf32>
    %128 = arith.addf %125, %127 : vector<2x8x1xf32>
    %129 = arith.truncf %120 : vector<2x8x8xf32> to vector<2x8x8xbf16>
    "tpu.trace_start"() <{level = 10 : i32, message = "hqk,hkd->hqd"}> : () -> ()
    %cst_53 = arith.constant dense<0.000000e+00> : vector<2x8x32xf32>
    %130 = tpu.matmul %129, %98, %cst_53 {dimension_numbers = #tpu.dot_dimension_numbers<[2], [1], [1], [2], [0, 0, 0, 1, 1, 2], [0], [0]>} : vector<2x8x8xbf16>, vector<2x8x32xbf16>, vector<2x8x32xf32> -> vector<2x8x32xf32>
    "tpu.trace_stop"() : () -> ()
    %131 = arith.truncf %123 : vector<2x8x8xf32> to vector<2x8x8xbf16>
    "tpu.trace_start"() <{level = 10 : i32, message = "hqk,hkd->hqd"}> : () -> ()
    %cst_54 = arith.constant dense<0.000000e+00> : vector<2x8x32xf32>
    %132 = tpu.matmul %131, %106, %cst_54 {dimension_numbers = #tpu.dot_dimension_numbers<[2], [1], [1], [2], [0, 0, 0, 1, 1, 2], [0], [0]>} : vector<2x8x8xbf16>, vector<2x8x32xbf16>, vector<2x8x32xf32> -> vector<2x8x32xf32>
    "tpu.trace_stop"() : () -> ()
    %133 = arith.addf %130, %132 : vector<2x8x32xf32>
    %134 = tpu.reciprocal %128 {approx = true} : vector<2x8x1xf32> -> vector<2x8x1xf32>
    %135 = vector.broadcast %134 : vector<2x8x1xf32> to vector<2x8x32xf32>
    %136 = arith.mulf %133, %135 : vector<2x8x32xf32>
    %137 = tpu.transpose %136, [1, 0, 2] : vector<2x8x32xf32> -> vector<8x2x32xf32>
    %138 = vector.shape_cast %137 : vector<8x2x32xf32> to vector<8x64xf32>
    %139 = vector.extract_strided_slice %47 {offsets = [8, 0], sizes = [8, 64], strides = [1, 1]} : vector<16x192xf32> to vector<8x64xf32>
    %140 = vector.shape_cast %139 : vector<8x64xf32> to vector<8x2x32xf32>
    %141 = tpu.transpose %140, [1, 0, 2] : vector<8x2x32xf32> -> vector<2x8x32xf32>
    %142 = arith.truncf %141 : vector<2x8x32xf32> to vector<2x8x32xbf16>
    %143 = vector.extract_strided_slice %47 {offsets = [8, 64], sizes = [8, 64], strides = [1, 1]} : vector<16x192xf32> to vector<8x64xf32>
    %144 = vector.shape_cast %143 : vector<8x64xf32> to vector<8x2x32xf32>
    %145 = tpu.transpose %144, [1, 0, 2] : vector<8x2x32xf32> -> vector<2x8x32xf32>
    %146 = arith.truncf %145 : vector<2x8x32xf32> to vector<2x8x32xbf16>
    %147 = vector.extract_strided_slice %47 {offsets = [8, 128], sizes = [8, 64], strides = [1, 1]} : vector<16x192xf32> to vector<8x64xf32>
    %148 = vector.shape_cast %147 : vector<8x64xf32> to vector<8x2x32xf32>
    %149 = tpu.transpose %148, [1, 0, 2] : vector<8x2x32xf32> -> vector<2x8x32xf32>
    %150 = arith.truncf %149 : vector<2x8x32xf32> to vector<2x8x32xbf16>
    %151 = vector.extract_strided_slice %86 {offsets = [8, 0], sizes = [8, 64], strides = [1, 1]} : vector<16x128xf32> to vector<8x64xf32>
    %152 = vector.shape_cast %151 : vector<8x64xf32> to vector<8x2x32xf32>
    %153 = tpu.transpose %152, [1, 0, 2] : vector<8x2x32xf32> -> vector<2x8x32xf32>
    %154 = arith.truncf %153 : vector<2x8x32xf32> to vector<2x8x32xbf16>
    %155 = vector.extract_strided_slice %86 {offsets = [8, 64], sizes = [8, 64], strides = [1, 1]} : vector<16x128xf32> to vector<8x64xf32>
    %156 = vector.shape_cast %155 : vector<8x64xf32> to vector<8x2x32xf32>
    %157 = tpu.transpose %156, [1, 0, 2] : vector<8x2x32xf32> -> vector<2x8x32xf32>
    %158 = arith.truncf %157 : vector<2x8x32xf32> to vector<2x8x32xbf16>
    "tpu.trace_start"() <{level = 10 : i32, message = "hqd,hkd->hqk"}> : () -> ()
    %cst_55 = arith.constant dense<0.000000e+00> : vector<2x8x8xf32>
    %159 = tpu.matmul %142, %146, %cst_55 {dimension_numbers = #tpu.dot_dimension_numbers<[2], [2], [1], [1], [0, 0, 0, 1, 1, 1], [0], [0]>} : vector<2x8x32xbf16>, vector<2x8x32xbf16>, vector<2x8x8xf32> -> vector<2x8x8xf32>
    "tpu.trace_stop"() : () -> ()
    %cst_56 = arith.constant 0.176776692 : f32
    %160 = vector.broadcast %cst_56 : f32 to vector<2x8x8xf32>
    %161 = arith.mulf %159, %160 : vector<2x8x8xf32>
    "tpu.trace_start"() <{level = 10 : i32, message = "hqd,hkd->hqk"}> : () -> ()
    %cst_57 = arith.constant dense<0.000000e+00> : vector<2x8x8xf32>
    %162 = tpu.matmul %142, %154, %cst_57 {dimension_numbers = #tpu.dot_dimension_numbers<[2], [2], [1], [1], [0, 0, 0, 1, 1, 1], [0], [0]>} : vector<2x8x32xbf16>, vector<2x8x32xbf16>, vector<2x8x8xf32> -> vector<2x8x8xf32>
    "tpu.trace_stop"() : () -> ()
    %cst_58 = arith.constant 0.176776692 : f32
    %163 = vector.broadcast %cst_58 : f32 to vector<2x8x8xf32>
    %164 = arith.mulf %162, %163 : vector<2x8x8xf32>
    %cst_59 = arith.constant dense<0xFF800000> : vector<2x8xf32>
    %165 = vector.multi_reduction <maximumf>, %161, %cst_59 [2] : vector<2x8x8xf32> to vector<2x8xf32>
    %166 = vector.shape_cast %165 : vector<2x8xf32> to vector<2x8x1xf32>
    %cst_60 = arith.constant dense<0xFF800000> : vector<2x8xf32>
    %167 = vector.multi_reduction <maximumf>, %164, %cst_60 [2] : vector<2x8x8xf32> to vector<2x8xf32>
    %168 = vector.shape_cast %167 : vector<2x8xf32> to vector<2x8x1xf32>
    %169 = arith.maximumf %166, %168 : vector<2x8x1xf32>
    %170 = vector.broadcast %169 : vector<2x8x1xf32> to vector<2x8x8xf32>
    %171 = arith.subf %161, %170 : vector<2x8x8xf32>
    %172 = math.exp %171 : vector<2x8x8xf32>
    %173 = vector.broadcast %169 : vector<2x8x1xf32> to vector<2x8x8xf32>
    %174 = arith.subf %164, %173 : vector<2x8x8xf32>
    %175 = math.exp %174 : vector<2x8x8xf32>
    %cst_61 = arith.constant dense<0.000000e+00> : vector<2x8xf32>
    %176 = vector.multi_reduction <add>, %172, %cst_61 [2] : vector<2x8x8xf32> to vector<2x8xf32>
    %177 = vector.shape_cast %176 : vector<2x8xf32> to vector<2x8x1xf32>
    %cst_62 = arith.constant dense<0.000000e+00> : vector<2x8xf32>
    %178 = vector.multi_reduction <add>, %175, %cst_62 [2] : vector<2x8x8xf32> to vector<2x8xf32>
    %179 = vector.shape_cast %178 : vector<2x8xf32> to vector<2x8x1xf32>
    %180 = arith.addf %177, %179 : vector<2x8x1xf32>
    %181 = arith.truncf %172 : vector<2x8x8xf32> to vector<2x8x8xbf16>
    "tpu.trace_start"() <{level = 10 : i32, message = "hqk,hkd->hqd"}> : () -> ()
    %cst_63 = arith.constant dense<0.000000e+00> : vector<2x8x32xf32>
    %182 = tpu.matmul %181, %150, %cst_63 {dimension_numbers = #tpu.dot_dimension_numbers<[2], [1], [1], [2], [0, 0, 0, 1, 1, 2], [0], [0]>} : vector<2x8x8xbf16>, vector<2x8x32xbf16>, vector<2x8x32xf32> -> vector<2x8x32xf32>
    "tpu.trace_stop"() : () -> ()
    %183 = arith.truncf %175 : vector<2x8x8xf32> to vector<2x8x8xbf16>
    "tpu.trace_start"() <{level = 10 : i32, message = "hqk,hkd->hqd"}> : () -> ()
    %cst_64 = arith.constant dense<0.000000e+00> : vector<2x8x32xf32>
    %184 = tpu.matmul %183, %158, %cst_64 {dimension_numbers = #tpu.dot_dimension_numbers<[2], [1], [1], [2], [0, 0, 0, 1, 1, 2], [0], [0]>} : vector<2x8x8xbf16>, vector<2x8x32xbf16>, vector<2x8x32xf32> -> vector<2x8x32xf32>
    "tpu.trace_stop"() : () -> ()
    %185 = arith.addf %182, %184 : vector<2x8x32xf32>
    %186 = tpu.reciprocal %180 {approx = true} : vector<2x8x1xf32> -> vector<2x8x1xf32>
    %187 = vector.broadcast %186 : vector<2x8x1xf32> to vector<2x8x32xf32>
    %188 = arith.mulf %185, %187 : vector<2x8x32xf32>
    %189 = tpu.transpose %188, [1, 0, 2] : vector<2x8x32xf32> -> vector<8x2x32xf32>
    %190 = vector.shape_cast %189 : vector<8x2x32xf32> to vector<8x64xf32>
    %191 = tpu.concatenate %138, %190 in 0 : vector<8x64xf32>, vector<8x64xf32> -> vector<16x64xf32>
    %192 = arith.truncf %191 : vector<16x64xf32> to vector<16x64xbf16>
    %cst_65 = arith.constant dense<0.000000e+00> : vector<16x64xf32>
    %193 = tpu.matmul %192, %12, %cst_65 {dimension_numbers = #tpu.dot_dimension_numbers<[1], [0], [0], [1], [0, 0, 1, 1], [], []>} : vector<16x64xbf16>, vector<64x64xbf16>, vector<16x64xf32> -> vector<16x64xf32>
    %cst_66 = arith.constant 0.000000e+00 : f32
    %194 = vector.broadcast %cst_66 : f32 to vector<16x64xf32>
    %195 = arith.cmpf oge, %193, %194 : vector<16x64xf32>
    %cst_67 = arith.constant 2.000000e-01 : f32
    %196 = vector.broadcast %cst_67 : f32 to vector<16x64xf32>
    %197 = arith.mulf %196, %193 : vector<16x64xf32>
    %198 = arith.select %195, %193, %197 : vector<16x64xi1>, vector<16x64xf32>
    %199 = arith.addf %198, %3 : vector<16x64xf32>
    %cst_68 = arith.constant dense<0.000000e+00> : vector<16xf32>
    %200 = vector.multi_reduction <add>, %199, %cst_68 [1] : vector<16x64xf32> to vector<16xf32>
    %201 = vector.shape_cast %200 : vector<16xf32> to vector<16x1xf32>
    %cst_69 = arith.constant 6.400000e+01 : f32
    %202 = vector.broadcast %cst_69 : f32 to vector<16x1xf32>
    %203 = arith.divf %201, %202 : vector<16x1xf32>
    %204 = vector.broadcast %203 : vector<16x1xf32> to vector<16x64xf32>
    %205 = arith.subf %199, %204 : vector<16x64xf32>
    %206 = arith.mulf %205, %205 : vector<16x64xf32>
    %cst_70 = arith.constant dense<0.000000e+00> : vector<16xf32>
    %207 = vector.multi_reduction <add>, %206, %cst_70 [1] : vector<16x64xf32> to vector<16xf32>
    %208 = vector.shape_cast %207 : vector<16xf32> to vector<16x1xf32>
    %cst_71 = arith.constant 6.400000e+01 : f32
    %209 = vector.broadcast %cst_71 : f32 to vector<16x1xf32>
    %210 = arith.divf %208, %209 : vector<16x1xf32>
    %cst_72 = arith.constant 9.99999974E-6 : f32
    %211 = vector.broadcast %cst_72 : f32 to vector<16x1xf32>
    %212 = arith.addf %210, %211 : vector<16x1xf32>
    %213 = math.rsqrt %212 : vector<16x1xf32>
    %214 = vector.broadcast %213 : vector<16x1xf32> to vector<16x64xf32>
    %215 = arith.mulf %205, %214 : vector<16x64xf32>
    %216 = vector.broadcast %27 : vector<1x64xf32> to vector<16x64xf32>
    %217 = arith.mulf %215, %216 : vector<16x64xf32>
    %218 = vector.broadcast %30 : vector<1x64xf32> to vector<16x64xf32>
    %219 = arith.addf %217, %218 : vector<16x64xf32>
    %220 = arith.truncf %219 : vector<16x64xf32> to vector<16x64xbf16>
    %cst_73 = arith.constant dense<0.000000e+00> : vector<16x64xf32>
    %221 = tpu.matmul %220, %15, %cst_73 {dimension_numbers = #tpu.dot_dimension_numbers<[1], [0], [0], [1], [0, 0, 1, 1], [], []>} : vector<16x64xbf16>, vector<64x64xbf16>, vector<16x64xf32> -> vector<16x64xf32>
    %222 = vector.broadcast %18 : vector<1x64xf32> to vector<16x64xf32>
    %223 = arith.addf %221, %222 : vector<16x64xf32>
    %cst_74 = arith.constant 0.000000e+00 : f32
    %224 = vector.broadcast %cst_74 : f32 to vector<16x64xf32>
    %225 = arith.cmpf oge, %223, %224 : vector<16x64xf32>
    %cst_75 = arith.constant 2.000000e-01 : f32
    %226 = vector.broadcast %cst_75 : f32 to vector<16x64xf32>
    %227 = arith.mulf %226, %223 : vector<16x64xf32>
    %228 = arith.select %225, %223, %227 : vector<16x64xi1>, vector<16x64xf32>
    %229 = arith.truncf %228 : vector<16x64xf32> to vector<16x64xbf16>
    %cst_76 = arith.constant dense<0.000000e+00> : vector<16x64xf32>
    %230 = tpu.matmul %229, %21, %cst_76 {dimension_numbers = #tpu.dot_dimension_numbers<[1], [0], [0], [1], [0, 0, 1, 1], [], []>} : vector<16x64xbf16>, vector<64x64xbf16>, vector<16x64xf32> -> vector<16x64xf32>
    %231 = vector.broadcast %24 : vector<1x64xf32> to vector<16x64xf32>
    %232 = arith.addf %230, %231 : vector<16x64xf32>
    %233 = arith.addf %219, %232 : vector<16x64xf32>
    %cst_77 = arith.constant dense<0.000000e+00> : vector<16xf32>
    %234 = vector.multi_reduction <add>, %233, %cst_77 [1] : vector<16x64xf32> to vector<16xf32>
    %235 = vector.shape_cast %234 : vector<16xf32> to vector<16x1xf32>
    %cst_78 = arith.constant 6.400000e+01 : f32
    %236 = vector.broadcast %cst_78 : f32 to vector<16x1xf32>
    %237 = arith.divf %235, %236 : vector<16x1xf32>
    %238 = vector.broadcast %237 : vector<16x1xf32> to vector<16x64xf32>
    %239 = arith.subf %233, %238 : vector<16x64xf32>
    %240 = arith.mulf %239, %239 : vector<16x64xf32>
    %cst_79 = arith.constant dense<0.000000e+00> : vector<16xf32>
    %241 = vector.multi_reduction <add>, %240, %cst_79 [1] : vector<16x64xf32> to vector<16xf32>
    %242 = vector.shape_cast %241 : vector<16xf32> to vector<16x1xf32>
    %cst_80 = arith.constant 6.400000e+01 : f32
    %243 = vector.broadcast %cst_80 : f32 to vector<16x1xf32>
    %244 = arith.divf %242, %243 : vector<16x1xf32>
    %cst_81 = arith.constant 9.99999974E-6 : f32
    %245 = vector.broadcast %cst_81 : f32 to vector<16x1xf32>
    %246 = arith.addf %244, %245 : vector<16x1xf32>
    %247 = math.rsqrt %246 : vector<16x1xf32>
    %248 = vector.broadcast %247 : vector<16x1xf32> to vector<16x64xf32>
    %249 = arith.mulf %239, %248 : vector<16x64xf32>
    %250 = vector.broadcast %33 : vector<1x64xf32> to vector<16x64xf32>
    %251 = arith.mulf %249, %250 : vector<16x64xf32>
    %252 = vector.broadcast %36 : vector<1x64xf32> to vector<16x64xf32>
    %253 = arith.addf %251, %252 : vector<16x64xf32>
    %c0_82 = arith.constant 0 : index
    %c0_83 = arith.constant 0 : index
    %254 = vector.load %arg20[%c0_82, %c0_83] : memref<16x64xf32, #tpu.memory_space<vmem>>, vector<16x64xf32>
    tpu.vector_store %arg20[%c0_82, %c0_83], %253 {strides = array<i32>} : memref<16x64xf32, #tpu.memory_space<vmem>>, vector<16x64xf32>,
    %c1_i32 = arith.constant 1 : i32
    %255 = arith.cmpi eq, %arg1, %c1_i32 : i32
    %256 = arith.extui %255 : i1 to i32
    %c0_i32_84 = arith.constant 0 : i32
    %257 = arith.cmpi ne, %256, %c0_i32_84 : i32
    scf.if %257 {
      %258 = vector.extract_strided_slice %253 {offsets = [0, 0], sizes = [1, 64], strides = [1, 1]} : vector<16x64xf32> to vector<1x64xf32>
      %259 = vector.extract_strided_slice %253 {offsets = [8, 0], sizes = [1, 64], strides = [1, 1]} : vector<16x64xf32> to vector<1x64xf32>
      %260 = tpu.concatenate %258, %259 in 0 : vector<1x64xf32>, vector<1x64xf32> -> vector<2x64xf32>
      %c0_85 = arith.constant 0 : index
      %c0_86 = arith.constant 0 : index
      %261 = vector.load %arg17[%c0_85, %c0_86] : memref<64x128xbf16, #tpu.memory_space<vmem>>, vector<64x128xbf16>
      %262 = arith.truncf %260 : vector<2x64xf32> to vector<2x64xbf16>
      %cst_87 = arith.constant dense<0.000000e+00> : vector<2x128xf32>
      %263 = tpu.matmul %262, %261, %cst_87 {dimension_numbers = #tpu.dot_dimension_numbers<[1], [0], [0], [1], [0, 0, 1, 1], [], []>} : vector<2x64xbf16>, vector<64x128xbf16>, vector<2x128xf32> -> vector<2x128xf32>
      %c0_88 = arith.constant 0 : index
      %c0_89 = arith.constant 0 : index
      %264 = vector.load %arg18[%c0_88, %c0_89] : memref<2x128xf32, #tpu.memory_space<vmem>>, vector<2x128xf32>
      tpu.vector_store %arg18[%c0_88, %c0_89], %263 {strides = array<i32>} : memref<2x128xf32, #tpu.memory_space<vmem>>, vector<2x128xf32>,
    } else {
    }
    return
  }
  func.func @transform_0(%arg0: i32, %arg1: i32) -> (i32, i32, i32) {
    %c0_i32 = arith.constant 0 : i32
    %c0_i32_0 = arith.constant 0 : i32
    %c0_i32_1 = arith.constant 0 : i32
    return %arg0, %c0_i32, %c0_i32_0 : i32, i32, i32
  }
  func.func @transform_1(%arg0: i32, %arg1: i32) -> (i32, i32, i32) {
    %c0_i32 = arith.constant 0 : i32
    %c0_i32_0 = arith.constant 0 : i32
    %c0_i32_1 = arith.constant 0 : i32
    %c0_i32_2 = arith.constant 0 : i32
    return %c0_i32, %c0_i32_0, %c0_i32_1 : i32, i32, i32
  }
  func.func @transform_2(%arg0: i32, %arg1: i32) -> (i32, i32, i32) {
    %c0_i32 = arith.constant 0 : i32
    %c0_i32_0 = arith.constant 0 : i32
    %c0_i32_1 = arith.constant 0 : i32
    %c0_i32_2 = arith.constant 0 : i32
    return %c0_i32, %c0_i32_0, %c0_i32_1 : i32, i32, i32
  }
  func.func @transform_3(%arg0: i32, %arg1: i32) -> (i32, i32, i32) {
    %c0_i32 = arith.constant 0 : i32
    %c0_i32_0 = arith.constant 0 : i32
    %c0_i32_1 = arith.constant 0 : i32
    %c0_i32_2 = arith.constant 0 : i32
    return %c0_i32, %c0_i32_0, %c0_i32_1 : i32, i32, i32
  }
  func.func @transform_4(%arg0: i32, %arg1: i32) -> (i32, i32, i32) {
    %c0_i32 = arith.constant 0 : i32
    %c0_i32_0 = arith.constant 0 : i32
    %c0_i32_1 = arith.constant 0 : i32
    %c0_i32_2 = arith.constant 0 : i32
    return %c0_i32, %c0_i32_0, %c0_i32_1 : i32, i32, i32
  }
  func.func @transform_5(%arg0: i32, %arg1: i32) -> (i32, i32, i32) {
    %c0_i32 = arith.constant 0 : i32
    %c0_i32_0 = arith.constant 0 : i32
    %c0_i32_1 = arith.constant 0 : i32
    %c0_i32_2 = arith.constant 0 : i32
    return %c0_i32, %c0_i32_0, %c0_i32_1 : i32, i32, i32
  }
  func.func @transform_6(%arg0: i32, %arg1: i32) -> (i32, i32, i32) {
    %c0_i32 = arith.constant 0 : i32
    %c0_i32_0 = arith.constant 0 : i32
    %c0_i32_1 = arith.constant 0 : i32
    %c0_i32_2 = arith.constant 0 : i32
    return %c0_i32, %c0_i32_0, %c0_i32_1 : i32, i32, i32
  }
  func.func @transform_7(%arg0: i32, %arg1: i32) -> (i32, i32, i32) {
    %c0_i32 = arith.constant 0 : i32
    %c0_i32_0 = arith.constant 0 : i32
    %c0_i32_1 = arith.constant 0 : i32
    %c0_i32_2 = arith.constant 0 : i32
    return %c0_i32, %c0_i32_0, %c0_i32_1 : i32, i32, i32
  }
  func.func @transform_8(%arg0: i32, %arg1: i32) -> (i32, i32, i32) {
    %c0_i32 = arith.constant 0 : i32
    %c0_i32_0 = arith.constant 0 : i32
    %c0_i32_1 = arith.constant 0 : i32
    %c0_i32_2 = arith.constant 0 : i32
    return %c0_i32, %c0_i32_0, %c0_i32_1 : i32, i32, i32
  }
  func.func @transform_9(%arg0: i32, %arg1: i32) -> (i32, i32, i32) {
    %c0_i32 = arith.constant 0 : i32
    %c0_i32_0 = arith.constant 0 : i32
    %c0_i32_1 = arith.constant 0 : i32
    %c0_i32_2 = arith.constant 0 : i32
    return %c0_i32, %c0_i32_0, %c0_i32_1 : i32, i32, i32
  }
  func.func @transform_10(%arg0: i32, %arg1: i32) -> (i32, i32, i32) {
    %c0_i32 = arith.constant 0 : i32
    %c0_i32_0 = arith.constant 0 : i32
    %c0_i32_1 = arith.constant 0 : i32
    %c0_i32_2 = arith.constant 0 : i32
    return %c0_i32, %c0_i32_0, %c0_i32_1 : i32, i32, i32
  }
  func.func @transform_11(%arg0: i32, %arg1: i32) -> (i32, i32, i32) {
    %c0_i32 = arith.constant 0 : i32
    %c0_i32_0 = arith.constant 0 : i32
    %c0_i32_1 = arith.constant 0 : i32
    %c0_i32_2 = arith.constant 0 : i32
    return %c0_i32, %c0_i32_0, %c0_i32_1 : i32, i32, i32
  }
  func.func @transform_12(%arg0: i32, %arg1: i32) -> (i32, i32, i32) {
    %c0_i32 = arith.constant 0 : i32
    %c0_i32_0 = arith.constant 0 : i32
    %c0_i32_1 = arith.constant 0 : i32
    %c0_i32_2 = arith.constant 0 : i32
    return %c0_i32, %c0_i32_0, %c0_i32_1 : i32, i32, i32
  }
  func.func @transform_13(%arg0: i32, %arg1: i32) -> (i32, i32, i32) {
    %c0_i32 = arith.constant 0 : i32
    %c0_i32_0 = arith.constant 0 : i32
    %c0_i32_1 = arith.constant 0 : i32
    %c0_i32_2 = arith.constant 0 : i32
    return %c0_i32, %c0_i32_0, %c0_i32_1 : i32, i32, i32
  }
  func.func @transform_14(%arg0: i32, %arg1: i32) -> (i32, i32, i32) {
    %c0_i32 = arith.constant 0 : i32
    %c0_i32_0 = arith.constant 0 : i32
    %c0_i32_1 = arith.constant 0 : i32
    %c0_i32_2 = arith.constant 0 : i32
    return %c0_i32, %c0_i32_0, %c0_i32_1 : i32, i32, i32
  }
  func.func @transform_15(%arg0: i32, %arg1: i32) -> (i32, i32) {
    %c0_i32 = arith.constant 0 : i32
    %c0_i32_0 = arith.constant 0 : i32
    %c0_i32_1 = arith.constant 0 : i32
    return %c0_i32, %c0_i32_0 : i32, i32
  }
  func.func @transform_16(%arg0: i32, %arg1: i32) -> (i32, i32) {
    %c0_i32 = arith.constant 0 : i32
    %c0_i32_0 = arith.constant 0 : i32
    return %arg0, %c0_i32 : i32, i32
  }
  func.func @transform_17(%arg0: i32, %arg1: i32) -> (i32, i32) {
    %c0_i32 = arith.constant 0 : i32
    %c0_i32_0 = arith.constant 0 : i32
    return %arg0, %c0_i32 : i32, i32
  }
}

</mosaic_0001>

<llo_original>
// kernel: tpu_custom_call.1
$region0: #{tpu_custom_call.1}
  #allocation0 [shape = 'u32[]', space=smem, size = 0x4, offset = 0x4, fixed_abs, tag = 'smem constant byte address 0x4 - core index']
  #allocation1 [shape = 'u32[144,128]{1,0:T(1,128)}', space=vmem, size = 0x12000, scoped, tag = 'internal scratch']
  #allocation2 [shape = 'f32[16,64]{1,0:T(8,128)}', space=vmem, size = 0x2000, scoped, tag = 'scratch operand']
  %s0 = inlined_call_operand.hbm [shape: f32[2,8,64], index: 0, kind: input, shape index: {}]
  %s1 = inlined_call_operand.vmem [shape: bf16[2,64,192], index: 1, kind: input, shape index: {}]
  %s2 = inlined_call_operand.vmem [shape: bf16[2,64,128], index: 2, kind: input, shape index: {}]
  %s3 = inlined_call_operand.hbm [shape: bf16[2,64,64], index: 3, kind: input, shape index: {}]
  %s4 = inlined_call_operand.hbm [shape: bf16[2,64,64], index: 4, kind: input, shape index: {}]
  %s5 = inlined_call_operand.vmem [shape: f32[2,1,64], index: 5, kind: input, shape index: {}]
  %s6 = inlined_call_operand.hbm [shape: bf16[2,64,64], index: 6, kind: input, shape index: {}]
  %s7 = inlined_call_operand.vmem [shape: f32[2,1,64], index: 7, kind: input, shape index: {}]
  %s8 = inlined_call_operand.vmem [shape: f32[2,1,64], index: 8, kind: input, shape index: {}]
  %s9 = inlined_call_operand.vmem [shape: f32[2,1,64], index: 9, kind: input, shape index: {}]
  %s10 = inlined_call_operand.vmem [shape: f32[2,1,64], index: 10, kind: input, shape index: {}]
  %s11 = inlined_call_operand.vmem [shape: f32[2,1,64], index: 11, kind: input, shape index: {}]
  %s12 = inlined_call_operand.hbm [shape: bf16[2,64,128], index: 12, kind: input, shape index: {}]
  %s13 = inlined_call_operand.vmem [shape: bf16[2,128,64], index: 13, kind: input, shape index: {}]
  %s14 = inlined_call_operand.vmem [shape: f32[2,1,128], index: 14, kind: input, shape index: {}]
  %s15 = inlined_call_operand.hbm [shape: bf16[64,128], index: 15, kind: input, shape index: {}]
  %s16 = inlined_call_operand.hbm [shape: f32[2,128], index: 16, kind: output, shape index: {0}]
  %s17 = inlined_call_operand.hbm [shape: f32[1,128], index: 17, kind: output, shape index: {1}]
  %18 = xla_tuple %s16, %s17
  %s19 = sld [smem:[#allocation0]]
  $region137: #{tpu_custom_call.1} parent=0
    _
  %s21 = ssub.s32 1, %s19
  %s22 = scalar_select 0, %s21, %s19
  $region1: #{tpu_custom_call.1} parent=0
    #allocation3 [shape = 'u8[8192]{0}', space=vmem, size = 0x2000, scoped, tag = 'input window, operand 0, single buffered']
    #allocation4 [shape = 's32[2]{0}', space=sflag, size = 0x8, scoped, tag = 'scoped memory for tpu_custom_call.1']
    #allocation5 [shape = 's32[2]{0}', space=sflag, size = 0x8, scoped, tag = 'scoped memory for tpu_custom_call.1']
    #allocation6 [shape = 'u8[32768]{0}', space=vmem, size = 0x8000, scoped, tag = 'input window, operand 3, single buffered']
    #allocation7 [shape = 's32[1]{0}', space=sflag, size = 0x4, scoped, tag = 'scoped memory for tpu_custom_call.1']
    #allocation8 [shape = 'u8[32768]{0}', space=vmem, size = 0x8000, scoped, tag = 'input window, operand 4, single buffered']
    #allocation9 [shape = 'u8[32768]{0}', space=vmem, size = 0x8000, scoped, tag = 'input window, operand 6, single buffered']
    #allocation10 [shape = 's32[1]{0}', space=sflag, size = 0x4, scoped, tag = 'scoped memory for tpu_custom_call.1']
    #allocation11 [shape = 'u8[32768]{0}', space=vmem, size = 0x8000, scoped, tag = 'input window, operand 12, single buffered']
    #allocation12 [shape = 'u8[16384]{0}', space=vmem, size = 0x4000, scoped, tag = 'input window, operand 15, single buffered']
    #allocation13 [shape = 's32[1]{0}', space=sflag, size = 0x4, scoped, tag = 'scoped memory for tpu_custom_call.1']
    #allocation14 [shape = 'u8[1024]{0}', space=vmem, size = 0x400, scoped, tag = 'output window, operand 0, single buffered']
    #allocation15 [shape = 'u8[512]{0}', space=vmem, size = 0x400, scoped, tag = 'output window, operand 1, single buffered']
    #allocation16 [shape = 's32[1]{0}', space=sflag, size = 0x4, scoped, tag = 'scoped memory for tpu_custom_call.1']
    %23 = vsyncpa [#allocation4], 0
    %24 = vsyncpa [#allocation7], 0
    %25 = vsyncpa [#allocation10], 0
    %26 = vsyncpa [#allocation13], 0
    %27 = vsyncpa [#allocation5], 0
    %28 = vsyncpa [#allocation16], 0
    loop: start=0, step=1, limit=4
    $region2: #{tpu_custom_call.1} parent=1 // loop_pre_header
      _
    $region3: #{tpu_custom_call.1} parent=1 // loop_header
      %s30 = sphi 0, %s34
      %p31 = scmp.ge.s32.totalorder %s30, 4
      %s37 = sphi 0, %s49
      %s38 = sphi 0, %s45
      %s39 = sphi 0, %s37
      %s40 = sphi 0, %s38
      %s41 = sphi 0, %s39
      %s42 = sphi 0, %s40
      %s52 = sphi 0, %s54
      %s55 = sphi 0, %s52
      %s56 = sphi 0, %s55
      %s72 = sphi 0, %s56
      %s76 = sphi 0, %s76
      %s78 = sphi 0, %s76
      %s79 = sphi 0, %s78
      %s93 = sphi 0, %s79
      %s97 = sphi 0, %s97
      %s99 = sphi 0, %s97
      %s100 = sphi 0, %s99
      %s114 = sphi 0, %s100
      %s118 = sphi 0, %s118
      %s120 = sphi 0, %s118
      %s121 = sphi 0, %s120
      %s135 = sphi 0, %s121
      %s139 = sphi 0, %s139
      %s141 = sphi 0, %s139
      %s142 = sphi 0, %s141
      %s156 = sphi 0, %s142
      %s160 = sphi 0, %s160
      %s162 = sphi 0, %s160
      %s163 = sphi 0, %s162
      %s177 = sphi 0, %s163
      %s181 = sphi 0, %s181
      %s183 = sphi 0, %s181
      %s184 = sphi 0, %s183
      %s198 = sphi 0, %s184
      %s202 = sphi 0, %s202
      %s204 = sphi 0, %s202
      %s205 = sphi 0, %s204
      %s219 = sphi 0, %s205
      %s223 = sphi 0, %s223
      %s225 = sphi 0, %s223
      %s226 = sphi 0, %s225
      %s240 = sphi 0, %s226
      %s244 = sphi 0, %s244
      %s246 = sphi 0, %s244
      %s247 = sphi 0, %s246
      %s261 = sphi 0, %s247
      %s265 = sphi 0, %s265
      %s267 = sphi 0, %s265
      %s268 = sphi 0, %s267
      %s282 = sphi 0, %s268
      %s286 = sphi 0, %s286
      %s288 = sphi 0, %s286
      %s289 = sphi 0, %s288
      %s303 = sphi 0, %s289
      %s307 = sphi 0, %s307
      %s309 = sphi 0, %s307
      %s310 = sphi 0, %s309
      %s324 = sphi 0, %s310
      %s328 = sphi 0, %s328
      %s330 = sphi 0, %s328
      %s331 = sphi 0, %s330
      %s345 = sphi 0, %s331
      %s349 = sphi 0, %s349
      %s351 = sphi 0, %s349
      %s352 = sphi 0, %s351
      %s366 = sphi 0, %s352
      %s370 = sphi 0, %s370
      %s372 = sphi 0, %s370
      %s373 = sphi 0, %s372
      %s387 = sphi 0, %s373
      %s393 = sphi 0, %s395
      %s396 = sphi 0, %s393
      %s397 = sphi 0, %s396
      %s413 = sphi 0, %s397
      %s419 = sphi 0, %s421
      %s422 = sphi 0, %s419
      %s423 = sphi 0, %s422
      %s439 = sphi 0, %s423
    $region4: #{tpu_custom_call.1} parent=1 // loop_header_branch
      %33 = sbr.rel (%p31) target = $region8
    $region5: #{tpu_custom_call.1} parent=1 // loop_body
      %s35 = ssub.s32 %s30, 1
      %s36 = ssub.s32 %s30, 2
      %s43 = sadd.s32 1, %s38
      %p44 = scmp.ge.s32.totalorder %s43, 2
      %s45 = scalar_select %p44, 0, %s43
      %s46 = sadd.s32 1, %s37
      %s47 = scalar_select %p44, %s46, %s37
      %p48 = scmp.ge.s32.totalorder %s47, 1
      %s49 = scalar_select %p48, 0, %s47
      %s50 = ssub.s32 %s37, %s49
      %p51 = scmp.eq.s32.totalorder %s50, 0
      %s53 = sadd.s32 %s52, 1
      %s54 = scalar_select %p51, %s52, %s53
      %p57 = pneg %p51
      %p58 = scmp.eq.s32.totalorder %s30, 1
      %p59 = por %p57, %p58
      %p60 = scmp.ne.s32.totalorder %s52, %s55
      %p61 = scmp.eq.s32.totalorder %s30, 0
      %p62 = por %p60, %p61
      %p63 = scmp.ne.s32.totalorder %s52, %s55
      %p64 = scmp.eq.s32.totalorder %s35, 1
      %p65 = por %p63, %p64
      %p66 = scmp.ne.s32.totalorder %s55, %s56
      %p67 = scmp.eq.s32.totalorder %s35, 0
      %p68 = por %p66, %p67
      %p69 = scmp.ne.s32.totalorder %s55, %s56
      %p70 = scmp.eq.s32.totalorder %s36, 1
      %p71 = por %p69, %p70
      %p73 = scmp.ne.s32.totalorder %s56, %s72
      %p74 = scmp.eq.s32.totalorder %s36, 0
      %p75 = por %p73, %p74
      %s77 = sadd.s32 %s76, 1
      %p80 = scmp.eq.s32.totalorder %s30, 1
      %p81 = scmp.ne.s32.totalorder %s76, %s78
      %p82 = scmp.eq.s32.totalorder %s30, 0
      %p83 = por %p81, %p82
      %p84 = scmp.ne.s32.totalorder %s76, %s78
      %p85 = scmp.eq.s32.totalorder %s35, 1
      %p86 = por %p84, %p85
      %p87 = scmp.ne.s32.totalorder %s78, %s79
      %p88 = scmp.eq.s32.totalorder %s35, 0
      %p89 = por %p87, %p88
      %p90 = scmp.ne.s32.totalorder %s78, %s79
      %p91 = scmp.eq.s32.totalorder %s36, 1
      %p92 = por %p90, %p91
      %p94 = scmp.ne.s32.totalorder %s79, %s93
      %p95 = scmp.eq.s32.totalorder %s36, 0
      %p96 = por %p94, %p95
      %s98 = sadd.s32 %s97, 1
      %p101 = scmp.eq.s32.totalorder %s30, 1
      %p102 = scmp.ne.s32.totalorder %s97, %s99
      %p103 = scmp.eq.s32.totalorder %s30, 0
      %p104 = por %p102, %p103
      %p105 = scmp.ne.s32.totalorder %s97, %s99
      %p106 = scmp.eq.s32.totalorder %s35, 1
      %p107 = por %p105, %p106
      %p108 = scmp.ne.s32.totalorder %s99, %s100
      %p109 = scmp.eq.s32.totalorder %s35, 0
      %p110 = por %p108, %p109
      %p111 = scmp.ne.s32.totalorder %s99, %s100
      %p112 = scmp.eq.s32.totalorder %s36, 1
      %p113 = por %p111, %p112
      %p115 = scmp.ne.s32.totalorder %s100, %s114
      %p116 = scmp.eq.s32.totalorder %s36, 0
      %p117 = por %p115, %p116
      %s119 = sadd.s32 %s118, 1
      %p122 = scmp.eq.s32.totalorder %s30, 1
      %p123 = scmp.ne.s32.totalorder %s118, %s120
      %p124 = scmp.eq.s32.totalorder %s30, 0
      %p125 = por %p123, %p124
      %p126 = scmp.ne.s32.totalorder %s118, %s120
      %p127 = scmp.eq.s32.totalorder %s35, 1
      %p128 = por %p126, %p127
      %p129 = scmp.ne.s32.totalorder %s120, %s121
      %p130 = scmp.eq.s32.totalorder %s35, 0
      %p131 = por %p129, %p130
      %p132 = scmp.ne.s32.totalorder %s120, %s121
      %p133 = scmp.eq.s32.totalorder %s36, 1
      %p134 = por %p132, %p133
      %p136 = scmp.ne.s32.totalorder %s121, %s135
      %p137 = scmp.eq.s32.totalorder %s36, 0
      %p138 = por %p136, %p137
      %s140 = sadd.s32 %s139, 1
      %p143 = scmp.eq.s32.totalorder %s30, 1
      %p144 = scmp.ne.s32.totalorder %s139, %s141
      %p145 = scmp.eq.s32.totalorder %s30, 0
      %p146 = por %p144, %p145
      %p147 = scmp.ne.s32.totalorder %s139, %s141
      %p148 = scmp.eq.s32.totalorder %s35, 1
      %p149 = por %p147, %p148
      %p150 = scmp.ne.s32.totalorder %s141, %s142
      %p151 = scmp.eq.s32.totalorder %s35, 0
      %p152 = por %p150, %p151
      %p153 = scmp.ne.s32.totalorder %s141, %s142
      %p154 = scmp.eq.s32.totalorder %s36, 1
      %p155 = por %p153, %p154
      %p157 = scmp.ne.s32.totalorder %s142, %s156
      %p158 = scmp.eq.s32.totalorder %s36, 0
      %p159 = por %p157, %p158
      %s161 = sadd.s32 %s160, 1
      %p164 = scmp.eq.s32.totalorder %s30, 1
      %p165 = scmp.ne.s32.totalorder %s160, %s162
      %p166 = scmp.eq.s32.totalorder %s30, 0
      %p167 = por %p165, %p166
      %p168 = scmp.ne.s32.totalorder %s160, %s162
      %p169 = scmp.eq.s32.totalorder %s35, 1
      %p170 = por %p168, %p169
      %p171 = scmp.ne.s32.totalorder %s162, %s163
      %p172 = scmp.eq.s32.totalorder %s35, 0
      %p173 = por %p171, %p172
      %p174 = scmp.ne.s32.totalorder %s162, %s163
      %p175 = scmp.eq.s32.totalorder %s36, 1
      %p176 = por %p174, %p175
      %p178 = scmp.ne.s32.totalorder %s163, %s177
      %p179 = scmp.eq.s32.totalorder %s36, 0
      %p180 = por %p178, %p179
      %s182 = sadd.s32 %s181, 1
      %p185 = scmp.eq.s32.totalorder %s30, 1
      %p186 = scmp.ne.s32.totalorder %s181, %s183
      %p187 = scmp.eq.s32.totalorder %s30, 0
      %p188 = por %p186, %p187
      %p189 = scmp.ne.s32.totalorder %s181, %s183
      %p190 = scmp.eq.s32.totalorder %s35, 1
      %p191 = por %p189, %p190
      %p192 = scmp.ne.s32.totalorder %s183, %s184
      %p193 = scmp.eq.s32.totalorder %s35, 0
      %p194 = por %p192, %p193
      %p195 = scmp.ne.s32.totalorder %s183, %s184
      %p196 = scmp.eq.s32.totalorder %s36, 1
      %p197 = por %p195, %p196
      %p199 = scmp.ne.s32.totalorder %s184, %s198
      %p200 = scmp.eq.s32.totalorder %s36, 0
      %p201 = por %p199, %p200
      %s203 = sadd.s32 %s202, 1
      %p206 = scmp.eq.s32.totalorder %s30, 1
      %p207 = scmp.ne.s32.totalorder %s202, %s204
      %p208 = scmp.eq.s32.totalorder %s30, 0
      %p209 = por %p207, %p208
      %p210 = scmp.ne.s32.totalorder %s202, %s204
      %p211 = scmp.eq.s32.totalorder %s35, 1
      %p212 = por %p210, %p211
      %p213 = scmp.ne.s32.totalorder %s204, %s205
      %p214 = scmp.eq.s32.totalorder %s35, 0
      %p215 = por %p213, %p214
      %p216 = scmp.ne.s32.totalorder %s204, %s205
      %p217 = scmp.eq.s32.totalorder %s36, 1
      %p218 = por %p216, %p217
      %p220 = scmp.ne.s32.totalorder %s205, %s219
      %p221 = scmp.eq.s32.totalorder %s36, 0
      %p222 = por %p220, %p221
      %s224 = sadd.s32 %s223, 1
      %p227 = scmp.eq.s32.totalorder %s30, 1
      %p228 = scmp.ne.s32.totalorder %s223, %s225
      %p229 = scmp.eq.s32.totalorder %s30, 0
      %p230 = por %p228, %p229
      %p231 = scmp.ne.s32.totalorder %s223, %s225
      %p232 = scmp.eq.s32.totalorder %s35, 1
      %p233 = por %p231, %p232
      %p234 = scmp.ne.s32.totalorder %s225, %s226
      %p235 = scmp.eq.s32.totalorder %s35, 0
      %p236 = por %p234, %p235
      %p237 = scmp.ne.s32.totalorder %s225, %s226
      %p238 = scmp.eq.s32.totalorder %s36, 1
      %p239 = por %p237, %p238
      %p241 = scmp.ne.s32.totalorder %s226, %s240
      %p242 = scmp.eq.s32.totalorder %s36, 0
      %p243 = por %p241, %p242
      %s245 = sadd.s32 %s244, 1
      %p248 = scmp.eq.s32.totalorder %s30, 1
      %p249 = scmp.ne.s32.totalorder %s244, %s246
      %p250 = scmp.eq.s32.totalorder %s30, 0
      %p251 = por %p249, %p250
      %p252 = scmp.ne.s32.totalorder %s244, %s246
      %p253 = scmp.eq.s32.totalorder %s35, 1
      %p254 = por %p252, %p253
      %p255 = scmp.ne.s32.totalorder %s246, %s247
      %p256 = scmp.eq.s32.totalorder %s35, 0
      %p257 = por %p255, %p256
      %p258 = scmp.ne.s32.totalorder %s246, %s247
      %p259 = scmp.eq.s32.totalorder %s36, 1
      %p260 = por %p258, %p259
      %p262 = scmp.ne.s32.totalorder %s247, %s261
      %p263 = scmp.eq.s32.totalorder %s36, 0
      %p264 = por %p262, %p263
      %s266 = sadd.s32 %s265, 1
      %p269 = scmp.eq.s32.totalorder %s30, 1
      %p270 = scmp.ne.s32.totalorder %s265, %s267
      %p271 = scmp.eq.s32.totalorder %s30, 0
      %p272 = por %p270, %p271
      %p273 = scmp.ne.s32.totalorder %s265, %s267
      %p274 = scmp.eq.s32.totalorder %s35, 1
      %p275 = por %p273, %p274
      %p276 = scmp.ne.s32.totalorder %s267, %s268
      %p277 = scmp.eq.s32.totalorder %s35, 0
      %p278 = por %p276, %p277
      %p279 = scmp.ne.s32.totalorder %s267, %s268
      %p280 = scmp.eq.s32.totalorder %s36, 1
      %p281 = por %p279, %p280
      %p283 = scmp.ne.s32.totalorder %s268, %s282
      %p284 = scmp.eq.s32.totalorder %s36, 0
      %p285 = por %p283, %p284
      %s287 = sadd.s32 %s286, 1
      %p290 = scmp.eq.s32.totalorder %s30, 1
      %p291 = scmp.ne.s32.totalorder %s286, %s288
      %p292 = scmp.eq.s32.totalorder %s30, 0
      %p293 = por %p291, %p292
      %p294 = scmp.ne.s32.totalorder %s286, %s288
      %p295 = scmp.eq.s32.totalorder %s35, 1
      %p296 = por %p294, %p295
      %p297 = scmp.ne.s32.totalorder %s288, %s289
      %p298 = scmp.eq.s32.totalorder %s35, 0
      %p299 = por %p297, %p298
      %p300 = scmp.ne.s32.totalorder %s288, %s289
      %p301 = scmp.eq.s32.totalorder %s36, 1
      %p302 = por %p300, %p301
      %p304 = scmp.ne.s32.totalorder %s289, %s303
      %p305 = scmp.eq.s32.totalorder %s36, 0
      %p306 = por %p304, %p305
      %s308 = sadd.s32 %s307, 1
      %p311 = scmp.eq.s32.totalorder %s30, 1
      %p312 = scmp.ne.s32.totalorder %s307, %s309
      %p313 = scmp.eq.s32.totalorder %s30, 0
      %p314 = por %p312, %p313
      %p315 = scmp.ne.s32.totalorder %s307, %s309
      %p316 = scmp.eq.s32.totalorder %s35, 1
      %p317 = por %p315, %p316
      %p318 = scmp.ne.s32.totalorder %s309, %s310
      %p319 = scmp.eq.s32.totalorder %s35, 0
      %p320 = por %p318, %p319
      %p321 = scmp.ne.s32.totalorder %s309, %s310
      %p322 = scmp.eq.s32.totalorder %s36, 1
      %p323 = por %p321, %p322
      %p325 = scmp.ne.s32.totalorder %s310, %s324
      %p326 = scmp.eq.s32.totalorder %s36, 0
      %p327 = por %p325, %p326
      %s329 = sadd.s32 %s328, 1
      %p332 = scmp.eq.s32.totalorder %s30, 1
      %p333 = scmp.ne.s32.totalorder %s328, %s330
      %p334 = scmp.eq.s32.totalorder %s30, 0
      %p335 = por %p333, %p334
      %p336 = scmp.ne.s32.totalorder %s328, %s330
      %p337 = scmp.eq.s32.totalorder %s35, 1
      %p338 = por %p336, %p337
      %p339 = scmp.ne.s32.totalorder %s330, %s331
      %p340 = scmp.eq.s32.totalorder %s35, 0
      %p341 = por %p339, %p340
      %p342 = scmp.ne.s32.totalorder %s330, %s331
      %p343 = scmp.eq.s32.totalorder %s36, 1
      %p344 = por %p342, %p343
      %p346 = scmp.ne.s32.totalorder %s331, %s345
      %p347 = scmp.eq.s32.totalorder %s36, 0
      %p348 = por %p346, %p347
      %s350 = sadd.s32 %s349, 1
      %p353 = scmp.eq.s32.totalorder %s30, 1
      %p354 = scmp.ne.s32.totalorder %s349, %s351
      %p355 = scmp.eq.s32.totalorder %s30, 0
      %p356 = por %p354, %p355
      %p357 = scmp.ne.s32.totalorder %s349, %s351
      %p358 = scmp.eq.s32.totalorder %s35, 1
      %p359 = por %p357, %p358
      %p360 = scmp.ne.s32.totalorder %s351, %s352
      %p361 = scmp.eq.s32.totalorder %s35, 0
      %p362 = por %p360, %p361
      %p363 = scmp.ne.s32.totalorder %s351, %s352
      %p364 = scmp.eq.s32.totalorder %s36, 1
      %p365 = por %p363, %p364
      %p367 = scmp.ne.s32.totalorder %s352, %s366
      %p368 = scmp.eq.s32.totalorder %s36, 0
      %p369 = por %p367, %p368
      %s371 = sadd.s32 %s370, 1
      %p374 = scmp.eq.s32.totalorder %s30, 1
      %p375 = scmp.ne.s32.totalorder %s370, %s372
      %p376 = scmp.eq.s32.totalorder %s30, 0
      %p377 = por %p375, %p376
      %p378 = scmp.ne.s32.totalorder %s370, %s372
      %p379 = scmp.eq.s32.totalorder %s35, 1
      %p380 = por %p378, %p379
      %p381 = scmp.ne.s32.totalorder %s372, %s373
      %p382 = scmp.eq.s32.totalorder %s35, 0
      %p383 = por %p381, %p382
      %p384 = scmp.ne.s32.totalorder %s372, %s373
      %p385 = scmp.eq.s32.totalorder %s36, 1
      %p386 = por %p384, %p385
      %p388 = scmp.ne.s32.totalorder %s373, %s387
      %p389 = scmp.eq.s32.totalorder %s36, 0
      %p390 = por %p388, %p389
      %s391 = ssub.s32 %s37, %s49
      %p392 = scmp.eq.s32.totalorder %s391, 0
      %s394 = sadd.s32 %s393, 1
      %s395 = scalar_select %p392, %s393, %s394
      %p398 = pneg %p392
      %p399 = scmp.eq.s32.totalorder %s30, 1
      %p400 = por %p398, %p399
      %p401 = scmp.ne.s32.totalorder %s393, %s396
      %p402 = scmp.eq.s32.totalorder %s30, 0
      %p403 = por %p401, %p402
      %p404 = scmp.ne.s32.totalorder %s393, %s396
      %p405 = scmp.eq.s32.totalorder %s35, 1
      %p406 = por %p404, %p405
      %p407 = scmp.ne.s32.totalorder %s396, %s397
      %p408 = scmp.eq.s32.totalorder %s35, 0
      %p409 = por %p407, %p408
      %p410 = scmp.ne.s32.totalorder %s396, %s397
      %p411 = scmp.eq.s32.totalorder %s36, 1
      %p412 = por %p410, %p411
      %p414 = scmp.ne.s32.totalorder %s397, %s413
      %p415 = scmp.eq.s32.totalorder %s36, 0
      %p416 = por %p414, %p415
      %s417 = ssub.s32 %s37, %s49
      %p418 = scmp.eq.s32.totalorder %s417, 0
      %s420 = sadd.s32 %s419, 1
      %s421 = scalar_select %p418, %s419, %s420
      %p424 = pneg %p418
      %p425 = scmp.eq.s32.totalorder %s30, 1
      %p426 = por %p424, %p425
      %p427 = scmp.ne.s32.totalorder %s419, %s422
      %p428 = scmp.eq.s32.totalorder %s30, 0
      %p429 = por %p427, %p428
      %p430 = scmp.ne.s32.totalorder %s419, %s422
      %p431 = scmp.eq.s32.totalorder %s35, 1
      %p432 = por %p430, %p431
      %p433 = scmp.ne.s32.totalorder %s422, %s423
      %p434 = scmp.eq.s32.totalorder %s35, 0
      %p435 = por %p433, %p434
      %p436 = scmp.ne.s32.totalorder %s422, %s423
      %p437 = scmp.eq.s32.totalorder %s36, 1
      %p438 = por %p436, %p437
      %p440 = scmp.ne.s32.totalorder %s423, %s439
      %p441 = scmp.eq.s32.totalorder %s36, 0
      %p442 = por %p440, %p441
      %p443 = scmp.le.s32.totalorder 1, %s30
      %p444 = scmp.lt.s32.totalorder %s30, 3
      %p445 = pnand %p443, %p444
      %p446 = pneg %p445
      // Predicated region
      $region9: #{tpu_custom_call.1} parent=5 // pred_check
        _
      $region10: #{tpu_custom_call.1} parent=5 // pred_check_branch
        %448 = sbr.rel (%p445) target = $region12
      $region11: #{tpu_custom_call.1} parent=5 // pred_region
        %s449 = ssub.s32 %s30, 1
        // Predicated region
        $region13: #{tpu_custom_call.1} parent=11 // pred_check
          %p450 = pneg %p68
        $region14: #{tpu_custom_call.1} parent=11 // pred_check_branch
          %452 = sbr.rel (%p450) target = $region16
        $region15: #{tpu_custom_call.1} parent=11 // pred_region
          %s453 = smul.u32 2, %s39
          %s455 = ssub.s32 256, 256
          %456 = vsyncadd [#allocation4], %s455
          %s457 = smul.addr %s453, 128
          %s458 = scalar_lea.hbm %s0, %s457
          %s459 = sshll.u32 [#allocation3], 4
          %s460 = int_to_ptr.vmem [resolvable:$true] %s459
          %465 = dma.hbm_to_vmem [thread:$0]  %s458, 256, %s460, [#allocation4], 128, 128, 8
        $region16: #{tpu_custom_call.1} parent=11 // pred_fallthru
          _
        // Predicated region
        $region17: #{tpu_custom_call.1} parent=11 // pred_check
          %p466 = pneg %p89
        $region18: #{tpu_custom_call.1} parent=11 // pred_check_branch
          %468 = sbr.rel (%p466) target = $region20
        $region19: #{tpu_custom_call.1} parent=11 // pred_region
          _
        $region20: #{tpu_custom_call.1} parent=11 // pred_fallthru
          _
        // Predicated region
        $region21: #{tpu_custom_call.1} parent=11 // pred_check
          %p469 = pneg %p110
        $region22: #{tpu_custom_call.1} parent=11 // pred_check_branch
          %471 = sbr.rel (%p469) target = $region24
        $region23: #{tpu_custom_call.1} parent=11 // pred_region
          _
        $region24: #{tpu_custom_call.1} parent=11 // pred_fallthru
          _
        // Predicated region
        $region25: #{tpu_custom_call.1} parent=11 // pred_check
          %p472 = pneg %p131
        $region26: #{tpu_custom_call.1} parent=11 // pred_check_branch
          %474 = sbr.rel (%p472) target = $region28
        $region27: #{tpu_custom_call.1} parent=11 // pred_region
          %s476 = ssub.s32 1024, 1024
          %477 = vsyncadd [#allocation7], %s476
          %s478 = sshll.u32 [#allocation6], 4
          %s479 = int_to_ptr.vmem [resolvable:$true] %s478
          %484 = dma.hbm_to_vmem [thread:$0]  %s3, 1024, %s479, [#allocation7], 64, 64, 4
        $region28: #{tpu_custom_call.1} parent=11 // pred_fallthru
          _
        // Predicated region
        $region29: #{tpu_custom_call.1} parent=11 // pred_check
          %p485 = pneg %p152
        $region30: #{tpu_custom_call.1} parent=11 // pred_check_branch
          %487 = sbr.rel (%p485) target = $region32
        $region31: #{tpu_custom_call.1} parent=11 // pred_region
          %s489 = ssub.s32 1024, 1024
          %490 = vsyncadd [#allocation7], %s489
          %s491 = sshll.u32 [#allocation8], 4
          %s492 = int_to_ptr.vmem [resolvable:$true] %s491
          %497 = dma.hbm_to_vmem [thread:$0]  %s4, 1024, %s492, [#allocation7], 64, 64, 4
        $region32: #{tpu_custom_call.1} parent=11 // pred_fallthru
          _
        // Predicated region
        $region33: #{tpu_custom_call.1} parent=11 // pred_check
          %p498 = pneg %p173
        $region34: #{tpu_custom_call.1} parent=11 // pred_check_branch
          %500 = sbr.rel (%p498) target = $region36
        $region35: #{tpu_custom_call.1} parent=11 // pred_region
          _
        $region36: #{tpu_custom_call.1} parent=11 // pred_fallthru
          _
        // Predicated region
        $region37: #{tpu_custom_call.1} parent=11 // pred_check
          %p501 = pneg %p194
        $region38: #{tpu_custom_call.1} parent=11 // pred_check_branch
          %503 = sbr.rel (%p501) target = $region40
        $region39: #{tpu_custom_call.1} parent=11 // pred_region
          %s505 = ssub.s32 1024, 1024
          %506 = vsyncadd [#allocation10], %s505
          %s507 = sshll.u32 [#allocation9], 4
          %s508 = int_to_ptr.vmem [resolvable:$true] %s507
          %513 = dma.hbm_to_vmem [thread:$0]  %s6, 1024, %s508, [#allocation10], 64, 64, 4
        $region40: #{tpu_custom_call.1} parent=11 // pred_fallthru
          _
        // Predicated region
        $region41: #{tpu_custom_call.1} parent=11 // pred_check
          %p514 = pneg %p215
        $region42: #{tpu_custom_call.1} parent=11 // pred_check_branch
          %516 = sbr.rel (%p514) target = $region44
        $region43: #{tpu_custom_call.1} parent=11 // pred_region
          _
        $region44: #{tpu_custom_call.1} parent=11 // pred_fallthru
          _
        // Predicated region
        $region45: #{tpu_custom_call.1} parent=11 // pred_check
          %p517 = pneg %p236
        $region46: #{tpu_custom_call.1} parent=11 // pred_check_branch
          %519 = sbr.rel (%p517) target = $region48
        $region47: #{tpu_custom_call.1} parent=11 // pred_region
          _
        $region48: #{tpu_custom_call.1} parent=11 // pred_fallthru
          _
        // Predicated region
        $region49: #{tpu_custom_call.1} parent=11 // pred_check
          %p520 = pneg %p257
        $region50: #{tpu_custom_call.1} parent=11 // pred_check_branch
          %522 = sbr.rel (%p520) target = $region52
        $region51: #{tpu_custom_call.1} parent=11 // pred_region
          _
        $region52: #{tpu_custom_call.1} parent=11 // pred_fallthru
          _
        // Predicated region
        $region53: #{tpu_custom_call.1} parent=11 // pred_check
          %p523 = pneg %p278
        $region54: #{tpu_custom_call.1} parent=11 // pred_check_branch
          %525 = sbr.rel (%p523) target = $region56
        $region55: #{tpu_custom_call.1} parent=11 // pred_region
          _
        $region56: #{tpu_custom_call.1} parent=11 // pred_fallthru
          _
        // Predicated region
        $region57: #{tpu_custom_call.1} parent=11 // pred_check
          %p526 = pneg %p299
        $region58: #{tpu_custom_call.1} parent=11 // pred_check_branch
          %528 = sbr.rel (%p526) target = $region60
        $region59: #{tpu_custom_call.1} parent=11 // pred_region
          _
        $region60: #{tpu_custom_call.1} parent=11 // pred_fallthru
          _
        // Predicated region
        $region61: #{tpu_custom_call.1} parent=11 // pred_check
          %p529 = pneg %p320
        $region62: #{tpu_custom_call.1} parent=11 // pred_check_branch
          %531 = sbr.rel (%p529) target = $region64
        $region63: #{tpu_custom_call.1} parent=11 // pred_region
          %s533 = ssub.s32 1024, 1024
          %534 = vsyncadd [#allocation10], %s533
          %s535 = sshll.u32 [#allocation11], 4
          %s536 = int_to_ptr.vmem [resolvable:$true] %s535
          %541 = dma.hbm_to_vmem [thread:$0]  %s12, 1024, %s536, [#allocation10], 64, 64, 4
        $region64: #{tpu_custom_call.1} parent=11 // pred_fallthru
          _
        // Predicated region
        $region65: #{tpu_custom_call.1} parent=11 // pred_check
          %p542 = pneg %p341
        $region66: #{tpu_custom_call.1} parent=11 // pred_check_branch
          %544 = sbr.rel (%p542) target = $region68
        $region67: #{tpu_custom_call.1} parent=11 // pred_region
          _
        $region68: #{tpu_custom_call.1} parent=11 // pred_fallthru
          _
        // Predicated region
        $region69: #{tpu_custom_call.1} parent=11 // pred_check
          %p545 = pneg %p362
        $region70: #{tpu_custom_call.1} parent=11 // pred_check_branch
          %547 = sbr.rel (%p545) target = $region72
        $region71: #{tpu_custom_call.1} parent=11 // pred_region
          _
        $region72: #{tpu_custom_call.1} parent=11 // pred_fallthru
          _
        // Predicated region
        $region73: #{tpu_custom_call.1} parent=11 // pred_check
          %p548 = pneg %p383
        $region74: #{tpu_custom_call.1} parent=11 // pred_check_branch
          %550 = sbr.rel (%p548) target = $region76
        $region75: #{tpu_custom_call.1} parent=11 // pred_region
          %s552 = ssub.s32 512, 512
          %553 = vsyncadd [#allocation13], %s552
          %s554 = sshll.u32 [#allocation12], 4
          %s555 = int_to_ptr.vmem [resolvable:$true] %s554
          %560 = dma.hbm_to_vmem [thread:$0]  %s15, 512, %s555, [#allocation13], 64, 64, 4
        $region76: #{tpu_custom_call.1} parent=11 // pred_fallthru
          _
      $region12: #{tpu_custom_call.1} parent=5 // pred_fallthru
        _
      %p561 = scmp.lt.s32.totalorder %s30, 2
      // Predicated region
      $region77: #{tpu_custom_call.1} parent=5 // pred_check
        %p562 = pneg %p561
      $region78: #{tpu_custom_call.1} parent=5 // pred_check_branch
        %564 = sbr.rel (%p562) target = $region80
      $region79: #{tpu_custom_call.1} parent=5 // pred_region
        _
      $region80: #{tpu_custom_call.1} parent=5 // pred_fallthru
        _
      %p565 = scmp.le.s32.totalorder 1, %s30
      %p566 = scmp.lt.s32.totalorder %s30, 3
      %p567 = pnand %p565, %p566
      %p568 = pneg %p567
      // Predicated region
      $region81: #{tpu_custom_call.1} parent=5 // pred_check
        _
      $region82: #{tpu_custom_call.1} parent=5 // pred_check_branch
        %570 = sbr.rel (%p567) target = $region84
      $region83: #{tpu_custom_call.1} parent=5 // pred_region
        %s571 = ssub.s32 %s30, 1
        // Predicated region
        $region85: #{tpu_custom_call.1} parent=83 // pred_check
          %p572 = pneg %p68
        $region86: #{tpu_custom_call.1} parent=83 // pred_check_branch
          %574 = sbr.rel (%p572) target = $region88
        $region87: #{tpu_custom_call.1} parent=83 // pred_region
          %575 = dma.done [#allocation4], 256
        $region88: #{tpu_custom_call.1} parent=83 // pred_fallthru
          _
        // Predicated region
        $region89: #{tpu_custom_call.1} parent=83 // pred_check
          %p576 = pneg %p131
        $region90: #{tpu_custom_call.1} parent=83 // pred_check_branch
          %578 = sbr.rel (%p576) target = $region92
        $region91: #{tpu_custom_call.1} parent=83 // pred_region
          %579 = dma.done [#allocation7], 1024
        $region92: #{tpu_custom_call.1} parent=83 // pred_fallthru
          _
        // Predicated region
        $region93: #{tpu_custom_call.1} parent=83 // pred_check
          %p580 = pneg %p152
        $region94: #{tpu_custom_call.1} parent=83 // pred_check_branch
          %582 = sbr.rel (%p580) target = $region96
        $region95: #{tpu_custom_call.1} parent=83 // pred_region
          %583 = dma.done [#allocation7], 1024
        $region96: #{tpu_custom_call.1} parent=83 // pred_fallthru
          _
        // Predicated region
        $region97: #{tpu_custom_call.1} parent=83 // pred_check
          %p584 = pneg %p194
        $region98: #{tpu_custom_call.1} parent=83 // pred_check_branch
          %586 = sbr.rel (%p584) target = $region100
        $region99: #{tpu_custom_call.1} parent=83 // pred_region
          %587 = dma.done [#allocation10], 1024
        $region100: #{tpu_custom_call.1} parent=83 // pred_fallthru
          _
        // Predicated region
        $region101: #{tpu_custom_call.1} parent=83 // pred_check
          %p588 = pneg %p320
        $region102: #{tpu_custom_call.1} parent=83 // pred_check_branch
          %590 = sbr.rel (%p588) target = $region104
        $region103: #{tpu_custom_call.1} parent=83 // pred_region
          %591 = dma.done [#allocation10], 1024
        $region104: #{tpu_custom_call.1} parent=83 // pred_fallthru
          _
        // Predicated region
        $region105: #{tpu_custom_call.1} parent=83 // pred_check
          %p592 = pneg %p383
        $region106: #{tpu_custom_call.1} parent=83 // pred_check_branch
          %594 = sbr.rel (%p592) target = $region108
        $region107: #{tpu_custom_call.1} parent=83 // pred_region
          %595 = dma.done [#allocation13], 512
        $region108: #{tpu_custom_call.1} parent=83 // pred_fallthru
          _
        %p596 = pneg %p68
        %p597 = pneg %p65
        %p598 = pneg %p89
        %p599 = pneg %p86
        %p600 = pneg %p110
        %p601 = pneg %p107
        %p602 = pneg %p131
        %p603 = pneg %p128
        %p604 = pneg %p152
        %p605 = pneg %p149
        %p606 = pneg %p173
        %p607 = pneg %p170
        %p608 = pneg %p194
        %p609 = pneg %p191
        %p610 = pneg %p215
        %p611 = pneg %p212
        %p612 = pneg %p236
        %p613 = pneg %p233
        %p614 = pneg %p257
        %p615 = pneg %p254
        %p616 = pneg %p278
        %p617 = pneg %p275
        %p618 = pneg %p299
        %p619 = pneg %p296
        %p620 = pneg %p320
        %p621 = pneg %p317
        %p622 = pneg %p341
        %p623 = pneg %p338
        %p624 = pneg %p362
        %p625 = pneg %p359
        %p626 = pneg %p383
        %p627 = pneg %p380
        %p628 = pneg %p409
        %p629 = pneg %p406
        %p630 = pneg %p435
        %p631 = pneg %p432
        %s632 = smul.u32 2, %s39
        %p634 = scmp.eq.s32.totalorder %s40, 0
        // Predicated region
        $region109: #{tpu_custom_call.1} parent=83 // pred_check
          %p635 = pneg %p634
        $region110: #{tpu_custom_call.1} parent=83 // pred_check_branch
          %637 = sbr.rel (%p635) target = $region112
        $region111: #{tpu_custom_call.1} parent=83 // pred_region
          %v638 = vld [vmem:[#allocation3] sm:$0xff]
          %v639 = vld [vmem:[#allocation3 + $0x8] sm:$0xff]
          %vm640 = vcmask 523264
          %641 = vst.msk [vmem:[#allocation2] sm:$0xff] %vm640, %v638
          %642 = vst.msk [vmem:[#allocation2 + $0x8] sm:$0xff] %vm640, %v639
          %643 = vst [vmem:[#allocation15] sm:$0x1] 0.0
          %644 = vst [vmem:[#allocation14] sm:$0x3] 0.0
        $region112: #{tpu_custom_call.1} parent=83 // pred_fallthru
          _
        %v645 = vld [vmem:[#allocation2] sm:$0xff]
        %v646 = vld [vmem:[#allocation2 + $0x8] sm:$0xff]
        %s647 = smul.u32 %s40, 16
        %s648 = smul.addr %s647, 4
        %s649 = scalar_lea.vmem %s1, %s648
        %v650 = vld [vmem:[%s649] sm:$0xff]
        %v651 = vld [vmem:[%s649 + $0x8] sm:$0xff]
        %v652 = vld [vmem:[%s649 + $0x10] sm:$0xff]
        %v653 = vld [vmem:[%s649 + $0x18] sm:$0xff]
        %v654 = vld [vmem:[%s649 + $0x20] sm:$0xff]
        %v655 = vld [vmem:[%s649 + $0x28] sm:$0xff]
        %v656 = vld [vmem:[%s649 + $0x30] sm:$0xff]
        %v657 = vld [vmem:[%s649 + $0x38] sm:$0xff]
        %s658 = smul.u32 %s40, 8
        %s659 = smul.addr %s658, 4
        %s660 = scalar_lea.vmem %s2, %s659
        %v661 = vld [vmem:[%s660] sm:$0xf]
        %v662 = vld [vmem:[%s660 + $0x4] sm:$0xf]
        %v663 = vld [vmem:[%s660 + $0x8] sm:$0xf]
        %v664 = vld [vmem:[%s660 + $0xc] sm:$0xf]
        %v665 = vld [vmem:[%s660 + $0x10] sm:$0xf]
        %v666 = vld [vmem:[%s660 + $0x14] sm:$0xf]
        %v667 = vld [vmem:[%s660 + $0x18] sm:$0xf]
        %v668 = vld [vmem:[%s660 + $0x1c] sm:$0xf]
        %s669 = smul.addr %s658, 4
        %s670 = scalar_lea.vmem [#allocation6], %s669
        %v671 = vld [vmem:[%s670] sm:$0xf]
        %v672 = vld [vmem:[%s670 + $0x4] sm:$0xf]
        %v673 = vld [vmem:[%s670 + $0x8] sm:$0xf]
        %v674 = vld [vmem:[%s670 + $0xc] sm:$0xf]
        %v675 = vld [vmem:[%s670 + $0x10] sm:$0xf]
        %v676 = vld [vmem:[%s670 + $0x14] sm:$0xf]
        %v677 = vld [vmem:[%s670 + $0x18] sm:$0xf]
        %v678 = vld [vmem:[%s670 + $0x1c] sm:$0xf]
        %s679 = smul.addr %s658, 4
        %s680 = scalar_lea.vmem [#allocation8], %s679
        %v681 = vld [vmem:[%s680] sm:$0xf]
        %v682 = vld [vmem:[%s680 + $0x4] sm:$0xf]
        %v683 = vld [vmem:[%s680 + $0x8] sm:$0xf]
        %v684 = vld [vmem:[%s680 + $0xc] sm:$0xf]
        %v685 = vld [vmem:[%s680 + $0x10] sm:$0xf]
        %v686 = vld [vmem:[%s680 + $0x14] sm:$0xf]
        %v687 = vld [vmem:[%s680 + $0x18] sm:$0xf]
        %v688 = vld [vmem:[%s680 + $0x1c] sm:$0xf]
        %s689 = scalar_lea.vmem %s5, %s40
        %v690 = vld [vmem:[%s689] sm:$0x1]
        %s691 = smul.addr %s658, 4
        %s692 = scalar_lea.vmem [#allocation9], %s691
        %v693 = vld [vmem:[%s692] sm:$0xf]
        %v694 = vld [vmem:[%s692 + $0x4] sm:$0xf]
        %v695 = vld [vmem:[%s692 + $0x8] sm:$0xf]
        %v696 = vld [vmem:[%s692 + $0xc] sm:$0xf]
        %v697 = vld [vmem:[%s692 + $0x10] sm:$0xf]
        %v698 = vld [vmem:[%s692 + $0x14] sm:$0xf]
        %v699 = vld [vmem:[%s692 + $0x18] sm:$0xf]
        %v700 = vld [vmem:[%s692 + $0x1c] sm:$0xf]
        %s701 = scalar_lea.vmem %s7, %s40
        %v702 = vld [vmem:[%s701] sm:$0x1]
        %s703 = scalar_lea.vmem %s8, %s40
        %v704 = vld [vmem:[%s703] sm:$0x1]
        %s705 = scalar_lea.vmem %s9, %s40
        %v706 = vld [vmem:[%s705] sm:$0x1]
        %s707 = scalar_lea.vmem %s10, %s40
        %v708 = vld [vmem:[%s707] sm:$0x1]
        %s709 = scalar_lea.vmem %s11, %s40
        %v710 = vld [vmem:[%s709] sm:$0x1]
        %s711 = smul.addr %s658, 4
        %s712 = scalar_lea.vmem [#allocation11], %s711
        %v713 = vld [vmem:[%s712] sm:$0xf]
        %v714 = vld [vmem:[%s712 + $0x4] sm:$0xf]
        %v715 = vld [vmem:[%s712 + $0x8] sm:$0xf]
        %v716 = vld [vmem:[%s712 + $0xc] sm:$0xf]
        %v717 = vld [vmem:[%s712 + $0x10] sm:$0xf]
        %v718 = vld [vmem:[%s712 + $0x14] sm:$0xf]
        %v719 = vld [vmem:[%s712 + $0x18] sm:$0xf]
        %v720 = vld [vmem:[%s712 + $0x1c] sm:$0xf]
        %s721 = smul.addr %s647, 4
        %s722 = scalar_lea.vmem %s13, %s721
        %v723 = vld [vmem:[%s722] sm:$0xf]
        %v724 = vld [vmem:[%s722 + $0x4] sm:$0xf]
        %v725 = vld [vmem:[%s722 + $0x8] sm:$0xf]
        %v726 = vld [vmem:[%s722 + $0xc] sm:$0xf]
        %v727 = vld [vmem:[%s722 + $0x10] sm:$0xf]
        %v728 = vld [vmem:[%s722 + $0x14] sm:$0xf]
        %v729 = vld [vmem:[%s722 + $0x18] sm:$0xf]
        %v730 = vld [vmem:[%s722 + $0x1c] sm:$0xf]
        %v731 = vld [vmem:[%s722 + $0x20] sm:$0xf]
        %v732 = vld [vmem:[%s722 + $0x24] sm:$0xf]
        %v733 = vld [vmem:[%s722 + $0x28] sm:$0xf]
        %v734 = vld [vmem:[%s722 + $0x2c] sm:$0xf]
        %v735 = vld [vmem:[%s722 + $0x30] sm:$0xf]
        %v736 = vld [vmem:[%s722 + $0x34] sm:$0xf]
        %v737 = vld [vmem:[%s722 + $0x38] sm:$0xf]
        %v738 = vld [vmem:[%s722 + $0x3c] sm:$0xf]
        %s739 = scalar_lea.vmem %s14, %s40
        %v740 = vld [vmem:[%s739] sm:$0x1]
        %v741 = vpack.c.bf16 %v646, %v645
        %v750 = vunpack.c.l.b16 %v650
        %v751 = vunpack.c.h.b16 %v650
        %v752 = vunpack.c.l.b16 %v651
        %v753 = vunpack.c.h.b16 %v651
        %v754 = vunpack.c.l.b16 %v652
        %v755 = vunpack.c.h.b16 %v652
        %v756 = vunpack.c.l.b16 %v653
        %v757 = vunpack.c.h.b16 %v653
        %v758 = vunpack.c.l.b16 %v654
        %v759 = vunpack.c.h.b16 %v654
        %v760 = vunpack.c.l.b16 %v655
        %v761 = vunpack.c.h.b16 %v655
        %v762 = vunpack.c.l.b16 %v656
        %v763 = vunpack.c.h.b16 %v656
        %v764 = vunpack.c.l.b16 %v657
        %v765 = vunpack.c.h.b16 %v657
        %v766 = vpack.c.b16 %v752, %v750
        %v767 = vpack.c.b16 %v753, %v751
        %v768 = vpack.c.b16 %v756, %v754
        %v769 = vpack.c.b16 %v757, %v755
        %v770 = vpack.c.b16 %v760, %v758
        %v771 = vpack.c.b16 %v761, %v759
        %v772 = vpack.c.b16 %v764, %v762
        %v773 = vpack.c.b16 %v765, %v763
        %vm782 = vcmask 523264
        %v784 = vsel %vm782, %v741, 0
        %786 = vmatprep.subr.bf16.mxu0 0
        %787 = vmatpush1.bf16.msra.mxu0 0
        %788 = vmatprep.subr.bf16.mxu0 0
        %789 = vmatpush1.bf16.msra.mxu0 0
        %790 = vmatprep.subr.bf16.mxu0 0
        %791 = vmatpush1.bf16.msra.mxu0 0
        %792 = vmatprep.subr.bf16.mxu0 0
        %793 = vmatpush1.bf16.msra.mxu0 0
        %794 = vmatprep.subr.bf16.mxu0 %v773
        %795 = vmatpush1.bf16.msra.mxu0 %v772
        %796 = vmatprep.subr.bf16.mxu0 %v771
        %797 = vmatpush1.bf16.msra.mxu0 %v770
        %798 = vmatprep.subr.bf16.mxu0 %v769
        %799 = vmatpush1.bf16.msra.mxu0 %v768
        %800 = vmatprep.subr.bf16.mxu0 %v767
        %801 = vmatpush1.bf16.msra.mxu0 %v766
        %802 = vmatprep.subr.bf16.mxu0 0
        %803 = vmatpush2.bf16.msra.mxu0 0
        %804 = vmatprep.subr.bf16.mxu0 0
        %805 = vmatpush2.bf16.msra.mxu0 0
        %806 = vmatprep.subr.bf16.mxu0 0
        %807 = vmatpush2.bf16.msra.mxu0 0
        %808 = vmatprep.subr.bf16.mxu0 0
        %809 = vmatpush2.bf16.msra.mxu0 0
        %810 = vmatprep.subr.bf16.mxu0 0
        %811 = vmatpush2.bf16.msra.mxu0 0
        %812 = vmatprep.subr.bf16.mxu0 0
        %813 = vmatpush2.bf16.msra.mxu0 0
        %814 = vmatprep.subr.bf16.mxu0 0
        %815 = vmatpush2.bf16.msra.mxu0 0
        %816 = vmatprep.subr.bf16.mxu0 0
        %817 = vmatpush2.bf16.msra.mxu0 0
        %818 = vmatprep.mubr.bf16.mxu0 0
        %819 = vmatmul.mubr.bf16.gmra.mxu0 %v784
        %v820 = vpop.f32.mrf.mxu0
        %v821 = vadd.f32 0.0, %v820
        %v822 = vpop.f32.mrf.mxu0
        %v823 = vadd.f32 0.0, %v822
        %v824 = vpop.f32.mrf.mxu0
        %v825 = vadd.f32 0.0, %v824
        %v826 = vpop.f32.mrf.mxu0
        %v827 = vadd.f32 0.0, %v826
        %828 = vdwg.mxu0
        %v829 = vmul.f32 %v645, %v645
        %v830 = vmul.f32 %v646, %v646
        %v831 = vsel %vm782, %v829, 0.0
        %832 = vadd.xlane.f32.xlu0 %v831
        %v833 = vpop.xlane.xlu0 %832
        %v834 = vsel %vm782, %v830, 0.0
        %835 = vadd.xlane.f32.xlu0 %v834
        %v836 = vpop.xlane.xlu0 %835
        %v845 = vunpack.c.l.b16 %v713
        %v846 = vunpack.c.l.b16 %v714
        %v847 = vunpack.c.l.b16 %v715
        %v848 = vunpack.c.l.b16 %v716
        %v849 = vunpack.c.l.b16 %v717
        %v850 = vunpack.c.l.b16 %v718
        %v851 = vunpack.c.l.b16 %v719
        %v852 = vunpack.c.l.b16 %v720
        %v853 = vpack.c.b16 %v846, %v845
        %v854 = vpack.c.b16 %v848, %v847
        %v855 = vpack.c.b16 %v850, %v849
        %v856 = vpack.c.b16 %v852, %v851
        %861 = vmatprep.subr.bf16.mxu0 0
        %862 = vmatpush1.bf16.msra.mxu0 0
        %863 = vmatprep.subr.bf16.mxu0 0
        %864 = vmatpush1.bf16.msra.mxu0 0
        %865 = vmatprep.subr.bf16.mxu0 0
        %866 = vmatpush1.bf16.msra.mxu0 0
        %867 = vmatprep.subr.bf16.mxu0 0
        %868 = vmatpush1.bf16.msra.mxu0 0
        %869 = vmatprep.subr.bf16.mxu0 0
        %870 = vmatpush1.bf16.msra.mxu0 %v856
        %871 = vmatprep.subr.bf16.mxu0 0
        %872 = vmatpush1.bf16.msra.mxu0 %v855
        %873 = vmatprep.subr.bf16.mxu0 0
        %874 = vmatpush1.bf16.msra.mxu0 %v854
        %875 = vmatprep.subr.bf16.mxu0 0
        %876 = vmatpush1.bf16.msra.mxu0 %v853
        %877 = vmatprep.subr.bf16.mxu0 0
        %878 = vmatpush2.bf16.msra.mxu0 0
        %879 = vmatprep.subr.bf16.mxu0 0
        %880 = vmatpush2.bf16.msra.mxu0 0
        %881 = vmatprep.subr.bf16.mxu0 0
        %882 = vmatpush2.bf16.msra.mxu0 0
        %883 = vmatprep.subr.bf16.mxu0 0
        %884 = vmatpush2.bf16.msra.mxu0 0
        %885 = vmatprep.subr.bf16.mxu0 0
        %886 = vmatpush2.bf16.msra.mxu0 0
        %887 = vmatprep.subr.bf16.mxu0 0
        %888 = vmatpush2.bf16.msra.mxu0 0
        %889 = vmatprep.subr.bf16.mxu0 0
        %890 = vmatpush2.bf16.msra.mxu0 0
        %891 = vmatprep.subr.bf16.mxu0 0
        %892 = vmatpush2.bf16.msra.mxu0 0
        %893 = vmatprep.mubr.bf16.mxu0 0
        %894 = vmatmul.mubr.bf16.gmra.mxu0 %v784
        %v895 = vpop.f32.mrf.mxu0
        %v896 = vadd.f32 0.0, %v895
        %v897 = vpop.f32.mrf.mxu0
        %v898 = vpop.f32.mrf.mxu0
        %v899 = vadd.f32 0.0, %v898
        %v900 = vpop.f32.mrf.mxu0
        %901 = vdwg.mxu0
        %v902 = vmul.f32 %v896, 2.0
        %v903 = vmul.f32 %v899, 2.0
        %v904 = vsub.f32 %v902, %v833
        %v905 = vsub.f32 %v903, %v836
        %v907 = vlaneseq
        %v908 = vshrl.u32 %v907, 7
        %v909 = vsub.s32 0, %v908
        %v910 = vrot.slane %v740, %v909
        %v912 = vsub.f32 %v904, %v910
        %v913 = vsub.f32 %v905, %v910
        %914 = vmax.xlane.f32.xlu0 %v912
        %v915 = vpop.xlane.xlu0 %914
        %916 = vmax.xlane.f32.xlu0 %v913
        %v917 = vpop.xlane.xlu0 %916
        %v918 = vsub.f32 %v912, %v915
        %v919 = vsub.f32 %v913, %v917
        %v920 = vmul.f32 %v918, 1.442695
        %v921 = vpow.pop %v920
        %v922 = vmul.f32 %v919, 1.442695
        %v923 = vpow.pop %v922
        %924 = vadd.xlane.f32.xlu0 %v921
        %v925 = vpop.xlane.xlu0 %924
        %926 = vadd.xlane.f32.xlu0 %v923
        %v927 = vpop.xlane.xlu0 %926
        %v928 = vrcp.pop %v925
        %v929 = vrcp.pop %v927
        %v930 = vmul.f32 %v921, %v928
        %v931 = vmul.f32 %v923, %v929
        %v932 = vpack.c.bf16 %v931, %v930
        %v949 = vunpack.c.l.b16 %v723
        %v950 = vunpack.c.l.b16 %v724
        %v951 = vunpack.c.l.b16 %v725
        %v952 = vunpack.c.l.b16 %v726
        %v953 = vunpack.c.l.b16 %v727
        %v954 = vunpack.c.l.b16 %v728
        %v955 = vunpack.c.l.b16 %v729
        %v956 = vunpack.c.l.b16 %v730
        %v957 = vunpack.c.l.b16 %v731
        %v958 = vunpack.c.l.b16 %v732
        %v959 = vunpack.c.l.b16 %v733
        %v960 = vunpack.c.l.b16 %v734
        %v961 = vunpack.c.l.b16 %v735
        %v962 = vunpack.c.l.b16 %v736
        %v963 = vunpack.c.l.b16 %v737
        %v964 = vunpack.c.l.b16 %v738
        %v965 = vpack.c.b16 %v950, %v949
        %v966 = vpack.c.b16 %v952, %v951
        %v967 = vpack.c.b16 %v954, %v953
        %v968 = vpack.c.b16 %v956, %v955
        %v969 = vpack.c.b16 %v958, %v957
        %v970 = vpack.c.b16 %v960, %v959
        %v971 = vpack.c.b16 %v962, %v961
        %v972 = vpack.c.b16 %v964, %v963
        %981 = vmatprep.subr.bf16.mxu0 0
        %982 = vmatpush1.bf16.msra.mxu0 %v972
        %983 = vmatprep.subr.bf16.mxu0 0
        %984 = vmatpush1.bf16.msra.mxu0 %v971
        %985 = vmatprep.subr.bf16.mxu0 0
        %986 = vmatpush1.bf16.msra.mxu0 %v970
        %987 = vmatprep.subr.bf16.mxu0 0
        %988 = vmatpush1.bf16.msra.mxu0 %v969
        %989 = vmatprep.subr.bf16.mxu0 0
        %990 = vmatpush1.bf16.msra.mxu0 %v968
        %991 = vmatprep.subr.bf16.mxu0 0
        %992 = vmatpush1.bf16.msra.mxu0 %v967
        %993 = vmatprep.subr.bf16.mxu0 0
        %994 = vmatpush1.bf16.msra.mxu0 %v966
        %995 = vmatprep.subr.bf16.mxu0 0
        %996 = vmatpush1.bf16.msra.mxu0 %v965
        %997 = vmatprep.subr.bf16.mxu0 0
        %998 = vmatpush2.bf16.msra.mxu0 0
        %999 = vmatprep.subr.bf16.mxu0 0
        %1000 = vmatpush2.bf16.msra.mxu0 0
        %1001 = vmatprep.subr.bf16.mxu0 0
        %1002 = vmatpush2.bf16.msra.mxu0 0
        %1003 = vmatprep.subr.bf16.mxu0 0
        %1004 = vmatpush2.bf16.msra.mxu0 0
        %1005 = vmatprep.subr.bf16.mxu0 0
        %1006 = vmatpush2.bf16.msra.mxu0 0
        %1007 = vmatprep.subr.bf16.mxu0 0
        %1008 = vmatpush2.bf16.msra.mxu0 0
        %1009 = vmatprep.subr.bf16.mxu0 0
        %1010 = vmatpush2.bf16.msra.mxu0 0
        %1011 = vmatprep.subr.bf16.mxu0 0
        %1012 = vmatpush2.bf16.msra.mxu0 0
        %1013 = vmatprep.mubr.bf16.mxu0 0
        %1014 = vmatmul.mubr.bf16.gmra.mxu0 %v932
        %v1015 = vpop.f32.mrf.mxu0
        %v1016 = vadd.f32 0.0, %v1015
        %v1017 = vpop.f32.mrf.mxu0
        %v1018 = vpop.f32.mrf.mxu0
        %v1019 = vadd.f32 0.0, %v1018
        %v1020 = vpop.f32.mrf.mxu0
        %1021 = vdwg.mxu0
        %v1022 = vsub.f32 %v1016, %v645
        %v1023 = vsub.f32 %v1019, %v646
        %v1024 = vmul.f32 %v1022, %v1022
        %v1025 = vmul.f32 %v1023, %v1023
        %v1026 = vsel %vm782, %v1024, 0.0
        %1027 = vadd.xlane.f32.xlu0 %v1026
        %v1028 = vpop.xlane.xlu0 %1027
        %v1029 = vsel %vm782, %v1025, 0.0
        %1030 = vadd.xlane.f32.xlu0 %v1029
        %v1031 = vpop.xlane.xlu0 %1030
        %v1032 = vadd.f32 %v1028, %v1031
        %v1033 = vrot.slane %v1032, 4
        %v1034 = vadd.f32 %v1032, %v1033
        %v1035 = vrot.slane %v1034, 2
        %v1036 = vadd.f32 %v1034, %v1035
        %v1037 = vrot.slane %v1036, 1
        %v1038 = vadd.f32 %v1036, %v1037
        %v1039 = vmul.f32 %v1038, 0.0009765625
        %v1040 = vld [vmem:[#allocation15] sm:$0x1]
        %v1041 = vmul.f32 %v1039, 1.25
        %v1042 = vadd.f32 %v1040, %v1041
        %1043 = vst [vmem:[#allocation15] sm:$0x1] %v1042
        %v1044 = vpack.c.bf16 %v1019, %v1016
        %v1053 = vunpack.c.l.b16 %v661
        %v1054 = vunpack.c.l.b16 %v662
        %v1055 = vunpack.c.l.b16 %v663
        %v1056 = vunpack.c.l.b16 %v664
        %v1057 = vunpack.c.l.b16 %v665
        %v1058 = vunpack.c.l.b16 %v666
        %v1059 = vunpack.c.l.b16 %v667
        %v1060 = vunpack.c.l.b16 %v668
        %v1061 = vpack.c.b16 %v1054, %v1053
        %v1062 = vpack.c.b16 %v1056, %v1055
        %v1063 = vpack.c.b16 %v1058, %v1057
        %v1064 = vpack.c.b16 %v1060, %v1059
        %v1070 = vsel %vm782, %v1044, 0
        %1072 = vmatprep.subr.bf16.mxu0 0
        %1073 = vmatpush1.bf16.msra.mxu0 0
        %1074 = vmatprep.subr.bf16.mxu0 0
        %1075 = vmatpush1.bf16.msra.mxu0 0
        %1076 = vmatprep.subr.bf16.mxu0 0
        %1077 = vmatpush1.bf16.msra.mxu0 0
        %1078 = vmatprep.subr.bf16.mxu0 0
        %1079 = vmatpush1.bf16.msra.mxu0 0
        %1080 = vmatprep.subr.bf16.mxu0 0
        %1081 = vmatpush1.bf16.msra.mxu0 %v1064
        %1082 = vmatprep.subr.bf16.mxu0 0
        %1083 = vmatpush1.bf16.msra.mxu0 %v1063
        %1084 = vmatprep.subr.bf16.mxu0 0
        %1085 = vmatpush1.bf16.msra.mxu0 %v1062
        %1086 = vmatprep.subr.bf16.mxu0 0
        %1087 = vmatpush1.bf16.msra.mxu0 %v1061
        %1088 = vmatprep.subr.bf16.mxu0 0
        %1089 = vmatpush2.bf16.msra.mxu0 0
        %1090 = vmatprep.subr.bf16.mxu0 0
        %1091 = vmatpush2.bf16.msra.mxu0 0
        %1092 = vmatprep.subr.bf16.mxu0 0
        %1093 = vmatpush2.bf16.msra.mxu0 0
        %1094 = vmatprep.subr.bf16.mxu0 0
        %1095 = vmatpush2.bf16.msra.mxu0 0
        %1096 = vmatprep.subr.bf16.mxu0 0
        %1097 = vmatpush2.bf16.msra.mxu0 0
        %1098 = vmatprep.subr.bf16.mxu0 0
        %1099 = vmatpush2.bf16.msra.mxu0 0
        %1100 = vmatprep.subr.bf16.mxu0 0
        %1101 = vmatpush2.bf16.msra.mxu0 0
        %1102 = vmatprep.subr.bf16.mxu0 0
        %1103 = vmatpush2.bf16.msra.mxu0 0
        %1104 = vmatprep.mubr.bf16.mxu0 0
        %1105 = vmatmul.mubr.bf16.gmra.mxu0 %v1070
        %v1106 = vpop.f32.mrf.mxu0
        %v1107 = vadd.f32 0.0, %v1106
        %v1108 = vpop.f32.mrf.mxu0
        %v1109 = vpop.f32.mrf.mxu0
        %v1110 = vadd.f32 0.0, %v1109
        %v1111 = vpop.f32.mrf.mxu0
        %1112 = vdwg.mxu0
        %1114 = vrot.lane.b32.xlu0 %v821, 96
        %v1115 = vpop.permute.xlu0 %1114
        %v1117 = vcombine.high %v821, 0.0
        %v1119 = vunpack.c.l.s4 1983009808
        %v1120 = vunpack.c.0.s8 %v1119
        %v1121 = vlaneseq
        %v1122 = vshrl.u32 %v1121, 7
        %v1123 = vsub.s32 %v1120, %v1122
        %v1124 = vrot.slane %v821, %v1123
        %v1126 = vunpack.c.l.s4 1983009808
        %v1127 = vunpack.c.0.s8 %v1126
        %v1128 = vlaneseq
        %v1129 = vshrl.u32 %v1128, 7
        %v1130 = vsub.s32 %v1127, %v1129
        %v1131 = vrot.slane %v1117, %v1130
        %v1132 = vcombine.high %v1115, 0.0
        %v1134 = vunpack.c.l.s4 1983009808
        %v1135 = vunpack.c.0.s8 %v1134
        %v1136 = vlaneseq
        %v1137 = vshrl.u32 %v1136, 7
        %v1138 = vsub.s32 %v1135, %v1137
        %v1139 = vrot.slane %v1115, %v1138
        %v1141 = vunpack.c.l.s4 1983009808
        %v1142 = vunpack.c.0.s8 %v1141
        %v1143 = vlaneseq
        %v1144 = vshrl.u32 %v1143, 7
        %v1145 = vsub.s32 %v1142, %v1144
        %v1146 = vrot.slane %v1132, %v1145
        %v1147 = vcombine.low %v1124, %v1139
        %v1148 = vcombine.high %v1124, %v1139
        %v1150 = vunpack.c.l.s4 1934713408
        %v1151 = vunpack.c.0.s8 %v1150
        %v1152 = vlaneseq
        %v1153 = vshrl.u32 %v1152, 7
        %v1154 = vsub.s32 %v1151, %v1153
        %v1155 = vrot.slane %v1147, %v1154
        %v1157 = vunpack.c.l.s4 1934713408
        %v1158 = vunpack.c.0.s8 %v1157
        %v1159 = vlaneseq
        %v1160 = vshrl.u32 %v1159, 7
        %v1161 = vsub.s32 %v1158, %v1160
        %v1162 = vrot.slane %v1148, %v1161
        %v1163 = vcombine.low %v1131, %v1146
        %v1164 = vcombine.high %v1131, %v1146
        %v1166 = vunpack.c.l.s4 1934713408
        %v1167 = vunpack.c.0.s8 %v1166
        %v1168 = vlaneseq
        %v1169 = vshrl.u32 %v1168, 7
        %v1170 = vsub.s32 %v1167, %v1169
        %v1171 = vrot.slane %v1163, %v1170
        %v1173 = vunpack.c.l.s4 1934713408
        %v1174 = vunpack.c.0.s8 %v1173
        %v1175 = vlaneseq
        %v1176 = vshrl.u32 %v1175, 7
        %v1177 = vsub.s32 %v1174, %v1176
        %v1178 = vrot.slane %v1164, %v1177
        %v1179 = vcombine.high %v1155, 0.0
        %v1180 = vcombine.high %v1162, 0.0
        %v1181 = vcombine.high %v1171, 0.0
        %v1182 = vcombine.high %v1178, 0.0
        %v1183 = vcombine.low %v1155, %v1162
        %v1185 = vunpack.c.l.s4 1983009808
        %v1186 = vunpack.c.0.s8 %v1185
        %v1187 = vlaneseq
        %v1188 = vshrl.u32 %v1187, 7
        %v1189 = vsub.s32 %v1186, %v1188
        %v1190 = vrot.slane %v1183, %v1189
        %v1191 = vcombine.low %v1179, %v1180
        %v1193 = vunpack.c.l.s4 1983009808
        %v1194 = vunpack.c.0.s8 %v1193
        %v1195 = vlaneseq
        %v1196 = vshrl.u32 %v1195, 7
        %v1197 = vsub.s32 %v1194, %v1196
        %v1198 = vrot.slane %v1191, %v1197
        %v1199 = vcombine.low %v1171, %v1178
        %v1201 = vunpack.c.l.s4 1983009808
        %v1202 = vunpack.c.0.s8 %v1201
        %v1203 = vlaneseq
        %v1204 = vshrl.u32 %v1203, 7
        %v1205 = vsub.s32 %v1202, %v1204
        %v1206 = vrot.slane %v1199, %v1205
        %v1207 = vcombine.low %v1181, %v1182
        %v1209 = vunpack.c.l.s4 1983009808
        %v1210 = vunpack.c.0.s8 %v1209
        %v1211 = vlaneseq
        %v1212 = vshrl.u32 %v1211, 7
        %v1213 = vsub.s32 %v1210, %v1212
        %v1214 = vrot.slane %v1207, %v1213
        %v1215 = vcombine.low %v1190, %v1198
        %v1217 = vunpack.c.l.s4 1934713408
        %v1218 = vunpack.c.0.s8 %v1217
        %v1219 = vlaneseq
        %v1220 = vshrl.u32 %v1219, 7
        %v1221 = vsub.s32 %v1218, %v1220
        %v1222 = vrot.slane %v1215, %v1221
        %v1223 = vcombine.low %v1206, %v1214
        %v1225 = vunpack.c.l.s4 1934713408
        %v1226 = vunpack.c.0.s8 %v1225
        %v1227 = vlaneseq
        %v1228 = vshrl.u32 %v1227, 7
        %v1229 = vsub.s32 %v1226, %v1228
        %v1230 = vrot.slane %v1223, %v1229
        %v1231 = vcombine.low %v1222, %v1230
        %v1232 = vcombine.high %v1222, %v1230
        %v1233 = vpack.c.bf16 %v1231, %v1231
        %v1234 = vpack.c.bf16 %v1232, %v1232
        %1235 = vrot.lane.b32.xlu0 %v821, 64
        %v1236 = vpop.permute.xlu0 %1235
        %1237 = vrot.lane.b32.xlu0 %v1115, 64
        %v1238 = vpop.permute.xlu0 %1237
        %v1241 = vcombine.high %v1236, 0.0
        %v1243 = vunpack.c.l.s4 1983009808
        %v1244 = vunpack.c.0.s8 %v1243
        %v1245 = vlaneseq
        %v1246 = vshrl.u32 %v1245, 7
        %v1247 = vsub.s32 %v1244, %v1246
        %v1248 = vrot.slane %v1236, %v1247
        %v1250 = vunpack.c.l.s4 1983009808
        %v1251 = vunpack.c.0.s8 %v1250
        %v1252 = vlaneseq
        %v1253 = vshrl.u32 %v1252, 7
        %v1254 = vsub.s32 %v1251, %v1253
        %v1255 = vrot.slane %v1241, %v1254
        %v1256 = vcombine.high %v1238, 0.0
        %v1258 = vunpack.c.l.s4 1983009808
        %v1259 = vunpack.c.0.s8 %v1258
        %v1260 = vlaneseq
        %v1261 = vshrl.u32 %v1260, 7
        %v1262 = vsub.s32 %v1259, %v1261
        %v1263 = vrot.slane %v1238, %v1262
        %v1265 = vunpack.c.l.s4 1983009808
        %v1266 = vunpack.c.0.s8 %v1265
        %v1267 = vlaneseq
        %v1268 = vshrl.u32 %v1267, 7
        %v1269 = vsub.s32 %v1266, %v1268
        %v1270 = vrot.slane %v1256, %v1269
        %v1271 = vcombine.low %v1248, %v1263
        %v1272 = vcombine.high %v1248, %v1263
        %v1274 = vunpack.c.l.s4 1934713408
        %v1275 = vunpack.c.0.s8 %v1274
        %v1276 = vlaneseq
        %v1277 = vshrl.u32 %v1276, 7
        %v1278 = vsub.s32 %v1275, %v1277
        %v1279 = vrot.slane %v1271, %v1278
        %v1281 = vunpack.c.l.s4 1934713408
        %v1282 = vunpack.c.0.s8 %v1281
        %v1283 = vlaneseq
        %v1284 = vshrl.u32 %v1283, 7
        %v1285 = vsub.s32 %v1282, %v1284
        %v1286 = vrot.slane %v1272, %v1285
        %v1287 = vcombine.low %v1255, %v1270
        %v1288 = vcombine.high %v1255, %v1270
        %v1290 = vunpack.c.l.s4 1934713408
        %v1291 = vunpack.c.0.s8 %v1290
        %v1292 = vlaneseq
        %v1293 = vshrl.u32 %v1292, 7
        %v1294 = vsub.s32 %v1291, %v1293
        %v1295 = vrot.slane %v1287, %v1294
        %v1297 = vunpack.c.l.s4 1934713408
        %v1298 = vunpack.c.0.s8 %v1297
        %v1299 = vlaneseq
        %v1300 = vshrl.u32 %v1299, 7
        %v1301 = vsub.s32 %v1298, %v1300
        %v1302 = vrot.slane %v1288, %v1301
        %v1303 = vcombine.high %v1279, 0.0
        %v1304 = vcombine.high %v1286, 0.0
        %v1305 = vcombine.high %v1295, 0.0
        %v1306 = vcombine.high %v1302, 0.0
        %v1307 = vcombine.low %v1279, %v1286
        %v1309 = vunpack.c.l.s4 1983009808
        %v1310 = vunpack.c.0.s8 %v1309
        %v1311 = vlaneseq
        %v1312 = vshrl.u32 %v1311, 7
        %v1313 = vsub.s32 %v1310, %v1312
        %v1314 = vrot.slane %v1307, %v1313
        %v1315 = vcombine.low %v1303, %v1304
        %v1317 = vunpack.c.l.s4 1983009808
        %v1318 = vunpack.c.0.s8 %v1317
        %v1319 = vlaneseq
        %v1320 = vshrl.u32 %v1319, 7
        %v1321 = vsub.s32 %v1318, %v1320
        %v1322 = vrot.slane %v1315, %v1321
        %v1323 = vcombine.low %v1295, %v1302
        %v1325 = vunpack.c.l.s4 1983009808
        %v1326 = vunpack.c.0.s8 %v1325
        %v1327 = vlaneseq
        %v1328 = vshrl.u32 %v1327, 7
        %v1329 = vsub.s32 %v1326, %v1328
        %v1330 = vrot.slane %v1323, %v1329
        %v1331 = vcombine.low %v1305, %v1306
        %v1333 = vunpack.c.l.s4 1983009808
        %v1334 = vunpack.c.0.s8 %v1333
        %v1335 = vlaneseq
        %v1336 = vshrl.u32 %v1335, 7
        %v1337 = vsub.s32 %v1334, %v1336
        %v1338 = vrot.slane %v1331, %v1337
        %v1339 = vcombine.low %v1314, %v1322
        %v1341 = vunpack.c.l.s4 1934713408
        %v1342 = vunpack.c.0.s8 %v1341
        %v1343 = vlaneseq
        %v1344 = vshrl.u32 %v1343, 7
        %v1345 = vsub.s32 %v1342, %v1344
        %v1346 = vrot.slane %v1339, %v1345
        %v1347 = vcombine.low %v1330, %v1338
        %v1349 = vunpack.c.l.s4 1934713408
        %v1350 = vunpack.c.0.s8 %v1349
        %v1351 = vlaneseq
        %v1352 = vshrl.u32 %v1351, 7
        %v1353 = vsub.s32 %v1350, %v1352
        %v1354 = vrot.slane %v1347, %v1353
        %v1355 = vcombine.low %v1346, %v1354
        %v1356 = vcombine.high %v1346, %v1354
        %v1357 = vpack.c.bf16 %v1355, %v1355
        %v1358 = vpack.c.bf16 %v1356, %v1356
        %1360 = vrot.lane.b32.xlu0 %v823, 96
        %v1361 = vpop.permute.xlu0 %1360
        %v1363 = vcombine.high %v823, 0.0
        %v1365 = vunpack.c.l.s4 1983009808
        %v1366 = vunpack.c.0.s8 %v1365
        %v1367 = vlaneseq
        %v1368 = vshrl.u32 %v1367, 7
        %v1369 = vsub.s32 %v1366, %v1368
        %v1370 = vrot.slane %v823, %v1369
        %v1372 = vunpack.c.l.s4 1983009808
        %v1373 = vunpack.c.0.s8 %v1372
        %v1374 = vlaneseq
        %v1375 = vshrl.u32 %v1374, 7
        %v1376 = vsub.s32 %v1373, %v1375
        %v1377 = vrot.slane %v1363, %v1376
        %v1378 = vcombine.high %v1361, 0.0
        %v1380 = vunpack.c.l.s4 1983009808
        %v1381 = vunpack.c.0.s8 %v1380
        %v1382 = vlaneseq
        %v1383 = vshrl.u32 %v1382, 7
        %v1384 = vsub.s32 %v1381, %v1383
        %v1385 = vrot.slane %v1361, %v1384
        %v1387 = vunpack.c.l.s4 1983009808
        %v1388 = vunpack.c.0.s8 %v1387
        %v1389 = vlaneseq
        %v1390 = vshrl.u32 %v1389, 7
        %v1391 = vsub.s32 %v1388, %v1390
        %v1392 = vrot.slane %v1378, %v1391
        %v1393 = vcombine.low %v1370, %v1385
        %v1394 = vcombine.high %v1370, %v1385
        %v1396 = vunpack.c.l.s4 1934713408
        %v1397 = vunpack.c.0.s8 %v1396
        %v1398 = vlaneseq
        %v1399 = vshrl.u32 %v1398, 7
        %v1400 = vsub.s32 %v1397, %v1399
        %v1401 = vrot.slane %v1393, %v1400
        %v1403 = vunpack.c.l.s4 1934713408
        %v1404 = vunpack.c.0.s8 %v1403
        %v1405 = vlaneseq
        %v1406 = vshrl.u32 %v1405, 7
        %v1407 = vsub.s32 %v1404, %v1406
        %v1408 = vrot.slane %v1394, %v1407
        %v1409 = vcombine.low %v1377, %v1392
        %v1410 = vcombine.high %v1377, %v1392
        %v1412 = vunpack.c.l.s4 1934713408
        %v1413 = vunpack.c.0.s8 %v1412
        %v1414 = vlaneseq
        %v1415 = vshrl.u32 %v1414, 7
        %v1416 = vsub.s32 %v1413, %v1415
        %v1417 = vrot.slane %v1409, %v1416
        %v1419 = vunpack.c.l.s4 1934713408
        %v1420 = vunpack.c.0.s8 %v1419
        %v1421 = vlaneseq
        %v1422 = vshrl.u32 %v1421, 7
        %v1423 = vsub.s32 %v1420, %v1422
        %v1424 = vrot.slane %v1410, %v1423
        %v1425 = vcombine.high %v1401, 0.0
        %v1426 = vcombine.high %v1408, 0.0
        %v1427 = vcombine.high %v1417, 0.0
        %v1428 = vcombine.high %v1424, 0.0
        %v1429 = vcombine.low %v1401, %v1408
        %v1431 = vunpack.c.l.s4 1983009808
        %v1432 = vunpack.c.0.s8 %v1431
        %v1433 = vlaneseq
        %v1434 = vshrl.u32 %v1433, 7
        %v1435 = vsub.s32 %v1432, %v1434
        %v1436 = vrot.slane %v1429, %v1435
        %v1437 = vcombine.low %v1425, %v1426
        %v1439 = vunpack.c.l.s4 1983009808
        %v1440 = vunpack.c.0.s8 %v1439
        %v1441 = vlaneseq
        %v1442 = vshrl.u32 %v1441, 7
        %v1443 = vsub.s32 %v1440, %v1442
        %v1444 = vrot.slane %v1437, %v1443
        %v1445 = vcombine.low %v1417, %v1424
        %v1447 = vunpack.c.l.s4 1983009808
        %v1448 = vunpack.c.0.s8 %v1447
        %v1449 = vlaneseq
        %v1450 = vshrl.u32 %v1449, 7
        %v1451 = vsub.s32 %v1448, %v1450
        %v1452 = vrot.slane %v1445, %v1451
        %v1453 = vcombine.low %v1427, %v1428
        %v1455 = vunpack.c.l.s4 1983009808
        %v1456 = vunpack.c.0.s8 %v1455
        %v1457 = vlaneseq
        %v1458 = vshrl.u32 %v1457, 7
        %v1459 = vsub.s32 %v1456, %v1458
        %v1460 = vrot.slane %v1453, %v1459
        %v1461 = vcombine.low %v1436, %v1444
        %v1463 = vunpack.c.l.s4 1934713408
        %v1464 = vunpack.c.0.s8 %v1463
        %v1465 = vlaneseq
        %v1466 = vshrl.u32 %v1465, 7
        %v1467 = vsub.s32 %v1464, %v1466
        %v1468 = vrot.slane %v1461, %v1467
        %v1469 = vcombine.low %v1452, %v1460
        %v1471 = vunpack.c.l.s4 1934713408
        %v1472 = vunpack.c.0.s8 %v1471
        %v1473 = vlaneseq
        %v1474 = vshrl.u32 %v1473, 7
        %v1475 = vsub.s32 %v1472, %v1474
        %v1476 = vrot.slane %v1469, %v1475
        %v1477 = vcombine.low %v1468, %v1476
        %v1478 = vcombine.high %v1468, %v1476
        %v1479 = vpack.c.bf16 %v1477, %v1477
        %v1480 = vpack.c.bf16 %v1478, %v1478
        %1482 = vrot.lane.b32.xlu0 %v1107, 96
        %v1483 = vpop.permute.xlu0 %1482
        %v1485 = vcombine.high %v1107, 0.0
        %v1487 = vunpack.c.l.s4 1983009808
        %v1488 = vunpack.c.0.s8 %v1487
        %v1489 = vlaneseq
        %v1490 = vshrl.u32 %v1489, 7
        %v1491 = vsub.s32 %v1488, %v1490
        %v1492 = vrot.slane %v1107, %v1491
        %v1494 = vunpack.c.l.s4 1983009808
        %v1495 = vunpack.c.0.s8 %v1494
        %v1496 = vlaneseq
        %v1497 = vshrl.u32 %v1496, 7
        %v1498 = vsub.s32 %v1495, %v1497
        %v1499 = vrot.slane %v1485, %v1498
        %v1500 = vcombine.high %v1483, 0.0
        %v1502 = vunpack.c.l.s4 1983009808
        %v1503 = vunpack.c.0.s8 %v1502
        %v1504 = vlaneseq
        %v1505 = vshrl.u32 %v1504, 7
        %v1506 = vsub.s32 %v1503, %v1505
        %v1507 = vrot.slane %v1483, %v1506
        %v1509 = vunpack.c.l.s4 1983009808
        %v1510 = vunpack.c.0.s8 %v1509
        %v1511 = vlaneseq
        %v1512 = vshrl.u32 %v1511, 7
        %v1513 = vsub.s32 %v1510, %v1512
        %v1514 = vrot.slane %v1500, %v1513
        %v1515 = vcombine.low %v1492, %v1507
        %v1516 = vcombine.high %v1492, %v1507
        %v1518 = vunpack.c.l.s4 1934713408
        %v1519 = vunpack.c.0.s8 %v1518
        %v1520 = vlaneseq
        %v1521 = vshrl.u32 %v1520, 7
        %v1522 = vsub.s32 %v1519, %v1521
        %v1523 = vrot.slane %v1515, %v1522
        %v1525 = vunpack.c.l.s4 1934713408
        %v1526 = vunpack.c.0.s8 %v1525
        %v1527 = vlaneseq
        %v1528 = vshrl.u32 %v1527, 7
        %v1529 = vsub.s32 %v1526, %v1528
        %v1530 = vrot.slane %v1516, %v1529
        %v1531 = vcombine.low %v1499, %v1514
        %v1532 = vcombine.high %v1499, %v1514
        %v1534 = vunpack.c.l.s4 1934713408
        %v1535 = vunpack.c.0.s8 %v1534
        %v1536 = vlaneseq
        %v1537 = vshrl.u32 %v1536, 7
        %v1538 = vsub.s32 %v1535, %v1537
        %v1539 = vrot.slane %v1531, %v1538
        %v1541 = vunpack.c.l.s4 1934713408
        %v1542 = vunpack.c.0.s8 %v1541
        %v1543 = vlaneseq
        %v1544 = vshrl.u32 %v1543, 7
        %v1545 = vsub.s32 %v1542, %v1544
        %v1546 = vrot.slane %v1532, %v1545
        %v1547 = vcombine.high %v1523, 0.0
        %v1548 = vcombine.high %v1530, 0.0
        %v1549 = vcombine.high %v1539, 0.0
        %v1550 = vcombine.high %v1546, 0.0
        %v1551 = vcombine.low %v1523, %v1530
        %v1553 = vunpack.c.l.s4 1983009808
        %v1554 = vunpack.c.0.s8 %v1553
        %v1555 = vlaneseq
        %v1556 = vshrl.u32 %v1555, 7
        %v1557 = vsub.s32 %v1554, %v1556
        %v1558 = vrot.slane %v1551, %v1557
        %v1559 = vcombine.low %v1547, %v1548
        %v1561 = vunpack.c.l.s4 1983009808
        %v1562 = vunpack.c.0.s8 %v1561
        %v1563 = vlaneseq
        %v1564 = vshrl.u32 %v1563, 7
        %v1565 = vsub.s32 %v1562, %v1564
        %v1566 = vrot.slane %v1559, %v1565
        %v1567 = vcombine.low %v1539, %v1546
        %v1569 = vunpack.c.l.s4 1983009808
        %v1570 = vunpack.c.0.s8 %v1569
        %v1571 = vlaneseq
        %v1572 = vshrl.u32 %v1571, 7
        %v1573 = vsub.s32 %v1570, %v1572
        %v1574 = vrot.slane %v1567, %v1573
        %v1575 = vcombine.low %v1549, %v1550
        %v1577 = vunpack.c.l.s4 1983009808
        %v1578 = vunpack.c.0.s8 %v1577
        %v1579 = vlaneseq
        %v1580 = vshrl.u32 %v1579, 7
        %v1581 = vsub.s32 %v1578, %v1580
        %v1582 = vrot.slane %v1575, %v1581
        %v1583 = vcombine.low %v1558, %v1566
        %v1585 = vunpack.c.l.s4 1934713408
        %v1586 = vunpack.c.0.s8 %v1585
        %v1587 = vlaneseq
        %v1588 = vshrl.u32 %v1587, 7
        %v1589 = vsub.s32 %v1586, %v1588
        %v1590 = vrot.slane %v1583, %v1589
        %v1591 = vcombine.low %v1574, %v1582
        %v1593 = vunpack.c.l.s4 1934713408
        %v1594 = vunpack.c.0.s8 %v1593
        %v1595 = vlaneseq
        %v1596 = vshrl.u32 %v1595, 7
        %v1597 = vsub.s32 %v1594, %v1596
        %v1598 = vrot.slane %v1591, %v1597
        %v1599 = vcombine.low %v1590, %v1598
        %v1600 = vcombine.high %v1590, %v1598
        %v1601 = vpack.c.bf16 %v1599, %v1599
        %v1602 = vpack.c.bf16 %v1600, %v1600
        %1603 = vrot.lane.b32.xlu0 %v1107, 64
        %v1604 = vpop.permute.xlu0 %1603
        %1605 = vrot.lane.b32.xlu0 %v1483, 64
        %v1606 = vpop.permute.xlu0 %1605
        %v1609 = vcombine.high %v1604, 0.0
        %v1611 = vunpack.c.l.s4 1983009808
        %v1612 = vunpack.c.0.s8 %v1611
        %v1613 = vlaneseq
        %v1614 = vshrl.u32 %v1613, 7
        %v1615 = vsub.s32 %v1612, %v1614
        %v1616 = vrot.slane %v1604, %v1615
        %v1618 = vunpack.c.l.s4 1983009808
        %v1619 = vunpack.c.0.s8 %v1618
        %v1620 = vlaneseq
        %v1621 = vshrl.u32 %v1620, 7
        %v1622 = vsub.s32 %v1619, %v1621
        %v1623 = vrot.slane %v1609, %v1622
        %v1624 = vcombine.high %v1606, 0.0
        %v1626 = vunpack.c.l.s4 1983009808
        %v1627 = vunpack.c.0.s8 %v1626
        %v1628 = vlaneseq
        %v1629 = vshrl.u32 %v1628, 7
        %v1630 = vsub.s32 %v1627, %v1629
        %v1631 = vrot.slane %v1606, %v1630
        %v1633 = vunpack.c.l.s4 1983009808
        %v1634 = vunpack.c.0.s8 %v1633
        %v1635 = vlaneseq
        %v1636 = vshrl.u32 %v1635, 7
        %v1637 = vsub.s32 %v1634, %v1636
        %v1638 = vrot.slane %v1624, %v1637
        %v1639 = vcombine.low %v1616, %v1631
        %v1640 = vcombine.high %v1616, %v1631
        %v1642 = vunpack.c.l.s4 1934713408
        %v1643 = vunpack.c.0.s8 %v1642
        %v1644 = vlaneseq
        %v1645 = vshrl.u32 %v1644, 7
        %v1646 = vsub.s32 %v1643, %v1645
        %v1647 = vrot.slane %v1639, %v1646
        %v1649 = vunpack.c.l.s4 1934713408
        %v1650 = vunpack.c.0.s8 %v1649
        %v1651 = vlaneseq
        %v1652 = vshrl.u32 %v1651, 7
        %v1653 = vsub.s32 %v1650, %v1652
        %v1654 = vrot.slane %v1640, %v1653
        %v1655 = vcombine.low %v1623, %v1638
        %v1656 = vcombine.high %v1623, %v1638
        %v1658 = vunpack.c.l.s4 1934713408
        %v1659 = vunpack.c.0.s8 %v1658
        %v1660 = vlaneseq
        %v1661 = vshrl.u32 %v1660, 7
        %v1662 = vsub.s32 %v1659, %v1661
        %v1663 = vrot.slane %v1655, %v1662
        %v1665 = vunpack.c.l.s4 1934713408
        %v1666 = vunpack.c.0.s8 %v1665
        %v1667 = vlaneseq
        %v1668 = vshrl.u32 %v1667, 7
        %v1669 = vsub.s32 %v1666, %v1668
        %v1670 = vrot.slane %v1656, %v1669
        %v1671 = vcombine.high %v1647, 0.0
        %v1672 = vcombine.high %v1654, 0.0
        %v1673 = vcombine.high %v1663, 0.0
        %v1674 = vcombine.high %v1670, 0.0
        %v1675 = vcombine.low %v1647, %v1654
        %v1677 = vunpack.c.l.s4 1983009808
        %v1678 = vunpack.c.0.s8 %v1677
        %v1679 = vlaneseq
        %v1680 = vshrl.u32 %v1679, 7
        %v1681 = vsub.s32 %v1678, %v1680
        %v1682 = vrot.slane %v1675, %v1681
        %v1683 = vcombine.low %v1671, %v1672
        %v1685 = vunpack.c.l.s4 1983009808
        %v1686 = vunpack.c.0.s8 %v1685
        %v1687 = vlaneseq
        %v1688 = vshrl.u32 %v1687, 7
        %v1689 = vsub.s32 %v1686, %v1688
        %v1690 = vrot.slane %v1683, %v1689
        %v1691 = vcombine.low %v1663, %v1670
        %v1693 = vunpack.c.l.s4 1983009808
        %v1694 = vunpack.c.0.s8 %v1693
        %v1695 = vlaneseq
        %v1696 = vshrl.u32 %v1695, 7
        %v1697 = vsub.s32 %v1694, %v1696
        %v1698 = vrot.slane %v1691, %v1697
        %v1699 = vcombine.low %v1673, %v1674
        %v1701 = vunpack.c.l.s4 1983009808
        %v1702 = vunpack.c.0.s8 %v1701
        %v1703 = vlaneseq
        %v1704 = vshrl.u32 %v1703, 7
        %v1705 = vsub.s32 %v1702, %v1704
        %v1706 = vrot.slane %v1699, %v1705
        %v1707 = vcombine.low %v1682, %v1690
        %v1709 = vunpack.c.l.s4 1934713408
        %v1710 = vunpack.c.0.s8 %v1709
        %v1711 = vlaneseq
        %v1712 = vshrl.u32 %v1711, 7
        %v1713 = vsub.s32 %v1710, %v1712
        %v1714 = vrot.slane %v1707, %v1713
        %v1715 = vcombine.low %v1698, %v1706
        %v1717 = vunpack.c.l.s4 1934713408
        %v1718 = vunpack.c.0.s8 %v1717
        %v1719 = vlaneseq
        %v1720 = vshrl.u32 %v1719, 7
        %v1721 = vsub.s32 %v1718, %v1720
        %v1722 = vrot.slane %v1715, %v1721
        %v1723 = vcombine.low %v1714, %v1722
        %v1724 = vcombine.high %v1714, %v1722
        %v1725 = vpack.c.bf16 %v1723, %v1723
        %v1726 = vpack.c.bf16 %v1724, %v1724
        %vm1727 = vcmask 261120
        %v1729 = vsel %vm1727, %v1233, 0
        %v1732 = vsel %vm1727, %v1357, 0
        %1734 = vmatprep.subr.bf16.mxu0 0
        %1735 = vmatpush1.bf16.xpose.msra.mxu0 0
        %1736 = vmatprep.subr.bf16.mxu0 0
        %1737 = vmatpush1.bf16.xpose.msra.mxu0 0
        %1738 = vmatprep.subr.bf16.mxu0 0
        %1739 = vmatpush1.bf16.xpose.msra.mxu0 0
        %1740 = vmatprep.subr.bf16.mxu0 0
        %1741 = vmatpush1.bf16.xpose.msra.mxu0 0
        %1742 = vmatprep.subr.bf16.mxu0 0
        %1743 = vmatpush1.bf16.xpose.msra.mxu0 0
        %1744 = vmatprep.subr.bf16.mxu0 0
        %1745 = vmatpush1.bf16.xpose.msra.mxu0 0
        %1746 = vmatprep.subr.bf16.mxu0 0
        %1747 = vmatpush1.bf16.xpose.msra.mxu0 0
        %1748 = vmatprep.subr.bf16.mxu0 0
        %1749 = vmatpush1.bf16.xpose.msra.mxu0 %v1732
        %1750 = vmatprep.subr.bf16.mxu0 0
        %1751 = vmatpush2.bf16.xpose.msra.mxu0 0
        %1752 = vmatprep.subr.bf16.mxu0 0
        %1753 = vmatpush2.bf16.xpose.msra.mxu0 0
        %1754 = vmatprep.subr.bf16.mxu0 0
        %1755 = vmatpush2.bf16.xpose.msra.mxu0 0
        %1756 = vmatprep.subr.bf16.mxu0 0
        %1757 = vmatpush2.bf16.xpose.msra.mxu0 0
        %1758 = vmatprep.subr.bf16.mxu0 0
        %1759 = vmatpush2.bf16.xpose.msra.mxu0 0
        %1760 = vmatprep.subr.bf16.mxu0 0
        %1761 = vmatpush2.bf16.xpose.msra.mxu0 0
        %1762 = vmatprep.subr.bf16.mxu0 0
        %1763 = vmatpush2.bf16.xpose.msra.mxu0 0
        %1764 = vmatprep.subr.bf16.mxu0 0
        %1765 = vmatpush2.bf16.xpose.msra.mxu0 0
        %1766 = vmatprep.mubr.bf16.mxu0 0
        %1767 = vmatmul.mubr.bf16.gmra.mxu0 %v1729
        %v1768 = vpop.f32.mrf.mxu0
        %v1769 = vadd.f32 0.0, %v1768
        %v1770 = vpop.f32.mrf.mxu0
        %v1771 = vpop.f32.mrf.mxu0
        %v1772 = vpop.f32.mrf.mxu0
        %1773 = vdwg.mxu0
        %v1775 = vsel %vm1727, %v1234, 0
        %v1778 = vsel %vm1727, %v1358, 0
        %1780 = vmatprep.subr.bf16.mxu0 0
        %1781 = vmatpush1.bf16.xpose.msra.mxu0 0
        %1782 = vmatprep.subr.bf16.mxu0 0
        %1783 = vmatpush1.bf16.xpose.msra.mxu0 0
        %1784 = vmatprep.subr.bf16.mxu0 0
        %1785 = vmatpush1.bf16.xpose.msra.mxu0 0
        %1786 = vmatprep.subr.bf16.mxu0 0
        %1787 = vmatpush1.bf16.xpose.msra.mxu0 0
        %1788 = vmatprep.subr.bf16.mxu0 0
        %1789 = vmatpush1.bf16.xpose.msra.mxu0 0
        %1790 = vmatprep.subr.bf16.mxu0 0
        %1791 = vmatpush1.bf16.xpose.msra.mxu0 0
        %1792 = vmatprep.subr.bf16.mxu0 0
        %1793 = vmatpush1.bf16.xpose.msra.mxu0 0
        %1794 = vmatprep.subr.bf16.mxu0 0
        %1795 = vmatpush1.bf16.xpose.msra.mxu0 %v1778
        %1796 = vmatprep.subr.bf16.mxu0 0
        %1797 = vmatpush2.bf16.xpose.msra.mxu0 0
        %1798 = vmatprep.subr.bf16.mxu0 0
        %1799 = vmatpush2.bf16.xpose.msra.mxu0 0
        %1800 = vmatprep.subr.bf16.mxu0 0
        %1801 = vmatpush2.bf16.xpose.msra.mxu0 0
        %1802 = vmatprep.subr.bf16.mxu0 0
        %1803 = vmatpush2.bf16.xpose.msra.mxu0 0
        %1804 = vmatprep.subr.bf16.mxu0 0
        %1805 = vmatpush2.bf16.xpose.msra.mxu0 0
        %1806 = vmatprep.subr.bf16.mxu0 0
        %1807 = vmatpush2.bf16.xpose.msra.mxu0 0
        %1808 = vmatprep.subr.bf16.mxu0 0
        %1809 = vmatpush2.bf16.xpose.msra.mxu0 0
        %1810 = vmatprep.subr.bf16.mxu0 0
        %1811 = vmatpush2.bf16.xpose.msra.mxu0 0
        %1812 = vmatprep.mubr.bf16.mxu0 0
        %1813 = vmatmul.mubr.bf16.gmra.mxu0 %v1775
        %v1814 = vpop.f32.mrf.mxu0
        %v1815 = vadd.f32 0.0, %v1814
        %v1816 = vpop.f32.mrf.mxu0
        %v1817 = vpop.f32.mrf.mxu0
        %v1818 = vpop.f32.mrf.mxu0
        %1819 = vdwg.mxu0
        %v1820 = vmul.f32 %v1769, 0.17677669
        %v1821 = vmul.f32 %v1815, 0.17677669
        %v1823 = vsel %vm1727, %v1601, 0
        %1825 = vmatprep.subr.bf16.mxu0 0
        %1826 = vmatpush1.bf16.xpose.msra.mxu0 0
        %1827 = vmatprep.subr.bf16.mxu0 0
        %1828 = vmatpush1.bf16.xpose.msra.mxu0 0
        %1829 = vmatprep.subr.bf16.mxu0 0
        %1830 = vmatpush1.bf16.xpose.msra.mxu0 0
        %1831 = vmatprep.subr.bf16.mxu0 0
        %1832 = vmatpush1.bf16.xpose.msra.mxu0 0
        %1833 = vmatprep.subr.bf16.mxu0 0
        %1834 = vmatpush1.bf16.xpose.msra.mxu0 0
        %1835 = vmatprep.subr.bf16.mxu0 0
        %1836 = vmatpush1.bf16.xpose.msra.mxu0 0
        %1837 = vmatprep.subr.bf16.mxu0 0
        %1838 = vmatpush1.bf16.xpose.msra.mxu0 0
        %1839 = vmatprep.subr.bf16.mxu0 0
        %1840 = vmatpush1.bf16.xpose.msra.mxu0 %v1823
        %1841 = vmatprep.subr.bf16.mxu0 0
        %1842 = vmatpush2.bf16.xpose.msra.mxu0 0
        %1843 = vmatprep.subr.bf16.mxu0 0
        %1844 = vmatpush2.bf16.xpose.msra.mxu0 0
        %1845 = vmatprep.subr.bf16.mxu0 0
        %1846 = vmatpush2.bf16.xpose.msra.mxu0 0
        %1847 = vmatprep.subr.bf16.mxu0 0
        %1848 = vmatpush2.bf16.xpose.msra.mxu0 0
        %1849 = vmatprep.subr.bf16.mxu0 0
        %1850 = vmatpush2.bf16.xpose.msra.mxu0 0
        %1851 = vmatprep.subr.bf16.mxu0 0
        %1852 = vmatpush2.bf16.xpose.msra.mxu0 0
        %1853 = vmatprep.subr.bf16.mxu0 0
        %1854 = vmatpush2.bf16.xpose.msra.mxu0 0
        %1855 = vmatprep.subr.bf16.mxu0 0
        %1856 = vmatpush2.bf16.xpose.msra.mxu0 0
        %1857 = vmatprep.mubr.bf16.mxu0 0
        %1858 = vmatmul.mubr.bf16.gmra.mxu0 %v1729
        %v1859 = vpop.f32.mrf.mxu0
        %v1860 = vadd.f32 0.0, %v1859
        %v1861 = vpop.f32.mrf.mxu0
        %v1862 = vpop.f32.mrf.mxu0
        %v1863 = vpop.f32.mrf.mxu0
        %1864 = vdwg.mxu0
        %v1866 = vsel %vm1727, %v1602, 0
        %1868 = vmatprep.subr.bf16.mxu0 0
        %1869 = vmatpush1.bf16.xpose.msra.mxu0 0
        %1870 = vmatprep.subr.bf16.mxu0 0
        %1871 = vmatpush1.bf16.xpose.msra.mxu0 0
        %1872 = vmatprep.subr.bf16.mxu0 0
        %1873 = vmatpush1.bf16.xpose.msra.mxu0 0
        %1874 = vmatprep.subr.bf16.mxu0 0
        %1875 = vmatpush1.bf16.xpose.msra.mxu0 0
        %1876 = vmatprep.subr.bf16.mxu0 0
        %1877 = vmatpush1.bf16.xpose.msra.mxu0 0
        %1878 = vmatprep.subr.bf16.mxu0 0
        %1879 = vmatpush1.bf16.xpose.msra.mxu0 0
        %1880 = vmatprep.subr.bf16.mxu0 0
        %1881 = vmatpush1.bf16.xpose.msra.mxu0 0
        %1882 = vmatprep.subr.bf16.mxu0 0
        %1883 = vmatpush1.bf16.xpose.msra.mxu0 %v1866
        %1884 = vmatprep.subr.bf16.mxu0 0
        %1885 = vmatpush2.bf16.xpose.msra.mxu0 0
        %1886 = vmatprep.subr.bf16.mxu0 0
        %1887 = vmatpush2.bf16.xpose.msra.mxu0 0
        %1888 = vmatprep.subr.bf16.mxu0 0
        %1889 = vmatpush2.bf16.xpose.msra.mxu0 0
        %1890 = vmatprep.subr.bf16.mxu0 0
        %1891 = vmatpush2.bf16.xpose.msra.mxu0 0
        %1892 = vmatprep.subr.bf16.mxu0 0
        %1893 = vmatpush2.bf16.xpose.msra.mxu0 0
        %1894 = vmatprep.subr.bf16.mxu0 0
        %1895 = vmatpush2.bf16.xpose.msra.mxu0 0
        %1896 = vmatprep.subr.bf16.mxu0 0
        %1897 = vmatpush2.bf16.xpose.msra.mxu0 0
        %1898 = vmatprep.subr.bf16.mxu0 0
        %1899 = vmatpush2.bf16.xpose.msra.mxu0 0
        %1900 = vmatprep.mubr.bf16.mxu0 0
        %1901 = vmatmul.mubr.bf16.gmra.mxu0 %v1775
        %v1902 = vpop.f32.mrf.mxu0
        %v1903 = vadd.f32 0.0, %v1902
        %v1904 = vpop.f32.mrf.mxu0
        %v1905 = vpop.f32.mrf.mxu0
        %v1906 = vpop.f32.mrf.mxu0
        %1907 = vdwg.mxu0
        %v1908 = vmul.f32 %v1860, 0.17677669
        %v1909 = vmul.f32 %v1903, 0.17677669
        %vm1910 = vcmask 64512
        %v1911 = vsel %vm1910, %v1820, -inf
        %1912 = vmax.xlane.f32.xlu0 %v1911
        %v1913 = vpop.xlane.xlu0 %1912
        %v1914 = vsel %vm1910, %v1821, -inf
        %1915 = vmax.xlane.f32.xlu0 %v1914
        %v1916 = vpop.xlane.xlu0 %1915
        %v1917 = vsel %vm1910, %v1908, -inf
        %1918 = vmax.xlane.f32.xlu0 %v1917
        %v1919 = vpop.xlane.xlu0 %1918
        %v1920 = vsel %vm1910, %v1909, -inf
        %1921 = vmax.xlane.f32.xlu0 %v1920
        %v1922 = vpop.xlane.xlu0 %1921
        %v1923 = vmax.f32 %v1913, %v1919
        %v1924 = vmax.f32 %v1916, %v1922
        %v1925 = vsub.f32 %v1820, %v1923
        %v1926 = vsub.f32 %v1821, %v1924
        %v1927 = vmul.f32 %v1925, 1.442695
        %v1928 = vpow.pop %v1927
        %v1929 = vmul.f32 %v1926, 1.442695
        %v1930 = vpow.pop %v1929
        %v1931 = vsub.f32 %v1908, %v1923
        %v1932 = vsub.f32 %v1909, %v1924
        %v1933 = vmul.f32 %v1931, 1.442695
        %v1934 = vpow.pop %v1933
        %v1935 = vmul.f32 %v1932, 1.442695
        %v1936 = vpow.pop %v1935
        %v1937 = vsel %vm1910, %v1928, 0.0
        %1938 = vadd.xlane.f32.xlu0 %v1937
        %v1939 = vpop.xlane.xlu0 %1938
        %v1940 = vsel %vm1910, %v1930, 0.0
        %1941 = vadd.xlane.f32.xlu0 %v1940
        %v1942 = vpop.xlane.xlu0 %1941
        %v1943 = vsel %vm1910, %v1934, 0.0
        %1944 = vadd.xlane.f32.xlu0 %v1943
        %v1945 = vpop.xlane.xlu0 %1944
        %v1946 = vsel %vm1910, %v1936, 0.0
        %1947 = vadd.xlane.f32.xlu0 %v1946
        %v1948 = vpop.xlane.xlu0 %1947
        %v1949 = vadd.f32 %v1939, %v1945
        %v1950 = vadd.f32 %v1942, %v1948
        %v1951 = vpack.c.bf16 %v1928, %v1928
        %v1952 = vpack.c.bf16 %v1930, %v1930
        %v1953 = vpack.c.bf16 %v1934, %v1934
        %v1954 = vpack.c.bf16 %v1936, %v1936
        %v1956 = vsel %vm1910, %v1953, 0
        %vm1958 = vcmask 1043456
        %v1960 = vsel %vm1958, %v1725, 0
        %1962 = vmatprep.subr.bf16.mxu0 0
        %1963 = vmatpush1.bf16.msra.mxu0 0
        %1964 = vmatprep.subr.bf16.mxu0 0
        %1965 = vmatpush1.bf16.msra.mxu0 0
        %1966 = vmatprep.subr.bf16.mxu0 0
        %1967 = vmatpush1.bf16.msra.mxu0 0
        %1968 = vmatprep.subr.bf16.mxu0 0
        %1969 = vmatpush1.bf16.msra.mxu0 0
        %1970 = vmatprep.subr.bf16.mxu0 0
        %1971 = vmatpush1.bf16.msra.mxu0 0
        %1972 = vmatprep.subr.bf16.mxu0 0
        %1973 = vmatpush1.bf16.msra.mxu0 0
        %1974 = vmatprep.subr.bf16.mxu0 0
        %1975 = vmatpush1.bf16.msra.mxu0 0
        %1976 = vmatprep.subr.bf16.mxu0 0
        %1977 = vmatpush1.bf16.msra.mxu0 %v1960
        %1978 = vmatprep.subr.bf16.mxu0 0
        %1979 = vmatpush2.bf16.msra.mxu0 0
        %1980 = vmatprep.subr.bf16.mxu0 0
        %1981 = vmatpush2.bf16.msra.mxu0 0
        %1982 = vmatprep.subr.bf16.mxu0 0
        %1983 = vmatpush2.bf16.msra.mxu0 0
        %1984 = vmatprep.subr.bf16.mxu0 0
        %1985 = vmatpush2.bf16.msra.mxu0 0
        %1986 = vmatprep.subr.bf16.mxu0 0
        %1987 = vmatpush2.bf16.msra.mxu0 0
        %1988 = vmatprep.subr.bf16.mxu0 0
        %1989 = vmatpush2.bf16.msra.mxu0 0
        %1990 = vmatprep.subr.bf16.mxu0 0
        %1991 = vmatpush2.bf16.msra.mxu0 0
        %1992 = vmatprep.subr.bf16.mxu0 0
        %1993 = vmatpush2.bf16.msra.mxu0 0
        %1994 = vmatprep.mubr.bf16.mxu0 0
        %1995 = vmatmul.mubr.bf16.gmra.mxu0 %v1956
        %v1996 = vpop.f32.mrf.mxu0
        %v1997 = vadd.f32 0.0, %v1996
        %v1998 = vpop.f32.mrf.mxu0
        %v1999 = vpop.f32.mrf.mxu0
        %v2000 = vpop.f32.mrf.mxu0
        %2001 = vdwg.mxu0
        %v2003 = vsel %vm1910, %v1954, 0
        %v2006 = vsel %vm1958, %v1726, 0
        %2008 = vmatprep.subr.bf16.mxu0 0
        %2009 = vmatpush1.bf16.msra.mxu0 0
        %2010 = vmatprep.subr.bf16.mxu0 0
        %2011 = vmatpush1.bf16.msra.mxu0 0
        %2012 = vmatprep.subr.bf16.mxu0 0
        %2013 = vmatpush1.bf16.msra.mxu0 0
        %2014 = vmatprep.subr.bf16.mxu0 0
        %2015 = vmatpush1.bf16.msra.mxu0 0
        %2016 = vmatprep.subr.bf16.mxu0 0
        %2017 = vmatpush1.bf16.msra.mxu0 0
        %2018 = vmatprep.subr.bf16.mxu0 0
        %2019 = vmatpush1.bf16.msra.mxu0 0
        %2020 = vmatprep.subr.bf16.mxu0 0
        %2021 = vmatpush1.bf16.msra.mxu0 0
        %2022 = vmatprep.subr.bf16.mxu0 0
        %2023 = vmatpush1.bf16.msra.mxu0 %v2006
        %2024 = vmatprep.subr.bf16.mxu0 0
        %2025 = vmatpush2.bf16.msra.mxu0 0
        %2026 = vmatprep.subr.bf16.mxu0 0
        %2027 = vmatpush2.bf16.msra.mxu0 0
        %2028 = vmatprep.subr.bf16.mxu0 0
        %2029 = vmatpush2.bf16.msra.mxu0 0
        %2030 = vmatprep.subr.bf16.mxu0 0
        %2031 = vmatpush2.bf16.msra.mxu0 0
        %2032 = vmatprep.subr.bf16.mxu0 0
        %2033 = vmatpush2.bf16.msra.mxu0 0
        %2034 = vmatprep.subr.bf16.mxu0 0
        %2035 = vmatpush2.bf16.msra.mxu0 0
        %2036 = vmatprep.subr.bf16.mxu0 0
        %2037 = vmatpush2.bf16.msra.mxu0 0
        %2038 = vmatprep.subr.bf16.mxu0 0
        %2039 = vmatpush2.bf16.msra.mxu0 0
        %2040 = vmatprep.mubr.bf16.mxu0 0
        %2041 = vmatmul.mubr.bf16.gmra.mxu0 %v2003
        %v2042 = vpop.f32.mrf.mxu0
        %v2043 = vadd.f32 0.0, %v2042
        %v2044 = vpop.f32.mrf.mxu0
        %v2045 = vpop.f32.mrf.mxu0
        %v2046 = vpop.f32.mrf.mxu0
        %2047 = vdwg.mxu0
        %v2049 = vsel %vm1910, %v1951, 0
        %v2052 = vsel %vm1958, %v1479, 0
        %2054 = vmatprep.subr.bf16.mxu0 0
        %2055 = vmatpush1.bf16.msra.mxu0 0
        %2056 = vmatprep.subr.bf16.mxu0 0
        %2057 = vmatpush1.bf16.msra.mxu0 0
        %2058 = vmatprep.subr.bf16.mxu0 0
        %2059 = vmatpush1.bf16.msra.mxu0 0
        %2060 = vmatprep.subr.bf16.mxu0 0
        %2061 = vmatpush1.bf16.msra.mxu0 0
        %2062 = vmatprep.subr.bf16.mxu0 0
        %2063 = vmatpush1.bf16.msra.mxu0 0
        %2064 = vmatprep.subr.bf16.mxu0 0
        %2065 = vmatpush1.bf16.msra.mxu0 0
        %2066 = vmatprep.subr.bf16.mxu0 0
        %2067 = vmatpush1.bf16.msra.mxu0 0
        %2068 = vmatprep.subr.bf16.mxu0 0
        %2069 = vmatpush1.bf16.msra.mxu0 %v2052
        %2070 = vmatprep.subr.bf16.mxu0 0
        %2071 = vmatpush2.bf16.msra.mxu0 0
        %2072 = vmatprep.subr.bf16.mxu0 0
        %2073 = vmatpush2.bf16.msra.mxu0 0
        %2074 = vmatprep.subr.bf16.mxu0 0
        %2075 = vmatpush2.bf16.msra.mxu0 0
        %2076 = vmatprep.subr.bf16.mxu0 0
        %2077 = vmatpush2.bf16.msra.mxu0 0
        %2078 = vmatprep.subr.bf16.mxu0 0
        %2079 = vmatpush2.bf16.msra.mxu0 0
        %2080 = vmatprep.subr.bf16.mxu0 0
        %2081 = vmatpush2.bf16.msra.mxu0 0
        %2082 = vmatprep.subr.bf16.mxu0 0
        %2083 = vmatpush2.bf16.msra.mxu0 0
        %2084 = vmatprep.subr.bf16.mxu0 0
        %2085 = vmatpush2.bf16.msra.mxu0 0
        %2086 = vmatprep.mubr.bf16.mxu0 0
        %2087 = vmatmul.mubr.bf16.gmra.mxu0 %v2049
        %v2088 = vpop.f32.mrf.mxu0
        %v2089 = vadd.f32 %v1997, %v2088
        %v2090 = vpop.f32.mrf.mxu0
        %v2091 = vpop.f32.mrf.mxu0
        %v2092 = vpop.f32.mrf.mxu0
        %2093 = vdwg.mxu0
        %v2095 = vsel %vm1910, %v1952, 0
        %v2098 = vsel %vm1958, %v1480, 0
        %2100 = vmatprep.subr.bf16.mxu0 0
        %2101 = vmatpush1.bf16.msra.mxu0 0
        %2102 = vmatprep.subr.bf16.mxu0 0
        %2103 = vmatpush1.bf16.msra.mxu0 0
        %2104 = vmatprep.subr.bf16.mxu0 0
        %2105 = vmatpush1.bf16.msra.mxu0 0
        %2106 = vmatprep.subr.bf16.mxu0 0
        %2107 = vmatpush1.bf16.msra.mxu0 0
        %2108 = vmatprep.subr.bf16.mxu0 0
        %2109 = vmatpush1.bf16.msra.mxu0 0
        %2110 = vmatprep.subr.bf16.mxu0 0
        %2111 = vmatpush1.bf16.msra.mxu0 0
        %2112 = vmatprep.subr.bf16.mxu0 0
        %2113 = vmatpush1.bf16.msra.mxu0 0
        %2114 = vmatprep.subr.bf16.mxu0 0
        %2115 = vmatpush1.bf16.msra.mxu0 %v2098
        %2116 = vmatprep.subr.bf16.mxu0 0
        %2117 = vmatpush2.bf16.msra.mxu0 0
        %2118 = vmatprep.subr.bf16.mxu0 0
        %2119 = vmatpush2.bf16.msra.mxu0 0
        %2120 = vmatprep.subr.bf16.mxu0 0
        %2121 = vmatpush2.bf16.msra.mxu0 0
        %2122 = vmatprep.subr.bf16.mxu0 0
        %2123 = vmatpush2.bf16.msra.mxu0 0
        %2124 = vmatprep.subr.bf16.mxu0 0
        %2125 = vmatpush2.bf16.msra.mxu0 0
        %2126 = vmatprep.subr.bf16.mxu0 0
        %2127 = vmatpush2.bf16.msra.mxu0 0
        %2128 = vmatprep.subr.bf16.mxu0 0
        %2129 = vmatpush2.bf16.msra.mxu0 0
        %2130 = vmatprep.subr.bf16.mxu0 0
        %2131 = vmatpush2.bf16.msra.mxu0 0
        %2132 = vmatprep.mubr.bf16.mxu0 0
        %2133 = vmatmul.mubr.bf16.gmra.mxu0 %v2095
        %v2134 = vpop.f32.mrf.mxu0
        %v2135 = vadd.f32 %v2043, %v2134
        %v2136 = vpop.f32.mrf.mxu0
        %v2137 = vpop.f32.mrf.mxu0
        %v2138 = vpop.f32.mrf.mxu0
        %2139 = vdwg.mxu0
        %v2140 = vrcp.pop %v1949
        %v2141 = vrcp.pop %v1950
        %v2142 = vmul.f32 %v2089, %v2140
        %v2143 = vmul.f32 %v2135, %v2141
        %v2144 = vcombine.high %v2142, 0.0
        %v2146 = vunpack.c.l.s4 1983009808
        %v2147 = vunpack.c.0.s8 %v2146
        %v2148 = vlaneseq
        %v2149 = vshrl.u32 %v2148, 7
        %v2150 = vsub.s32 %v2147, %v2149
        %v2151 = vrot.slane %v2142, %v2150
        %v2153 = vunpack.c.l.s4 1983009808
        %v2154 = vunpack.c.0.s8 %v2153
        %v2155 = vlaneseq
        %v2156 = vshrl.u32 %v2155, 7
        %v2157 = vsub.s32 %v2154, %v2156
        %v2158 = vrot.slane %v2144, %v2157
        %v2159 = vcombine.high %v2143, 0.0
        %v2161 = vunpack.c.l.s4 1983009808
        %v2162 = vunpack.c.0.s8 %v2161
        %v2163 = vlaneseq
        %v2164 = vshrl.u32 %v2163, 7
        %v2165 = vsub.s32 %v2162, %v2164
        %v2166 = vrot.slane %v2143, %v2165
        %v2168 = vunpack.c.l.s4 1983009808
        %v2169 = vunpack.c.0.s8 %v2168
        %v2170 = vlaneseq
        %v2171 = vshrl.u32 %v2170, 7
        %v2172 = vsub.s32 %v2169, %v2171
        %v2173 = vrot.slane %v2159, %v2172
        %v2174 = vcombine.low %v2151, %v2166
        %v2175 = vcombine.high %v2151, %v2166
        %v2177 = vunpack.c.l.s4 1934713408
        %v2178 = vunpack.c.0.s8 %v2177
        %v2179 = vlaneseq
        %v2180 = vshrl.u32 %v2179, 7
        %v2181 = vsub.s32 %v2178, %v2180
        %v2182 = vrot.slane %v2174, %v2181
        %v2184 = vunpack.c.l.s4 1934713408
        %v2185 = vunpack.c.0.s8 %v2184
        %v2186 = vlaneseq
        %v2187 = vshrl.u32 %v2186, 7
        %v2188 = vsub.s32 %v2185, %v2187
        %v2189 = vrot.slane %v2175, %v2188
        %v2190 = vcombine.low %v2158, %v2173
        %v2191 = vcombine.high %v2158, %v2173
        %v2193 = vunpack.c.l.s4 1934713408
        %v2194 = vunpack.c.0.s8 %v2193
        %v2195 = vlaneseq
        %v2196 = vshrl.u32 %v2195, 7
        %v2197 = vsub.s32 %v2194, %v2196
        %v2198 = vrot.slane %v2190, %v2197
        %v2200 = vunpack.c.l.s4 1934713408
        %v2201 = vunpack.c.0.s8 %v2200
        %v2202 = vlaneseq
        %v2203 = vshrl.u32 %v2202, 7
        %v2204 = vsub.s32 %v2201, %v2203
        %v2205 = vrot.slane %v2191, %v2204
        %v2206 = vcombine.high %v2182, 0.0
        %v2207 = vcombine.high %v2189, 0.0
        %v2208 = vcombine.high %v2198, 0.0
        %v2209 = vcombine.high %v2205, 0.0
        %v2210 = vcombine.low %v2182, %v2189
        %v2212 = vunpack.c.l.s4 1983009808
        %v2213 = vunpack.c.0.s8 %v2212
        %v2214 = vlaneseq
        %v2215 = vshrl.u32 %v2214, 7
        %v2216 = vsub.s32 %v2213, %v2215
        %v2217 = vrot.slane %v2210, %v2216
        %v2218 = vcombine.low %v2206, %v2207
        %v2220 = vunpack.c.l.s4 1983009808
        %v2221 = vunpack.c.0.s8 %v2220
        %v2222 = vlaneseq
        %v2223 = vshrl.u32 %v2222, 7
        %v2224 = vsub.s32 %v2221, %v2223
        %v2225 = vrot.slane %v2218, %v2224
        %v2226 = vcombine.low %v2198, %v2205
        %v2228 = vunpack.c.l.s4 1983009808
        %v2229 = vunpack.c.0.s8 %v2228
        %v2230 = vlaneseq
        %v2231 = vshrl.u32 %v2230, 7
        %v2232 = vsub.s32 %v2229, %v2231
        %v2233 = vrot.slane %v2226, %v2232
        %v2234 = vcombine.low %v2208, %v2209
        %v2236 = vunpack.c.l.s4 1983009808
        %v2237 = vunpack.c.0.s8 %v2236
        %v2238 = vlaneseq
        %v2239 = vshrl.u32 %v2238, 7
        %v2240 = vsub.s32 %v2237, %v2239
        %v2241 = vrot.slane %v2234, %v2240
        %v2242 = vcombine.low %v2217, %v2225
        %v2244 = vunpack.c.l.s4 1934713408
        %v2245 = vunpack.c.0.s8 %v2244
        %v2246 = vlaneseq
        %v2247 = vshrl.u32 %v2246, 7
        %v2248 = vsub.s32 %v2245, %v2247
        %v2249 = vrot.slane %v2242, %v2248
        %v2250 = vcombine.low %v2233, %v2241
        %v2252 = vunpack.c.l.s4 1934713408
        %v2253 = vunpack.c.0.s8 %v2252
        %v2254 = vlaneseq
        %v2255 = vshrl.u32 %v2254, 7
        %v2256 = vsub.s32 %v2253, %v2255
        %v2257 = vrot.slane %v2250, %v2256
        %v2258 = vcombine.low %v2249, %v2257
        %v2259 = vcombine.high %v2249, %v2257
        %2261 = vrot.lane.b32.xlu0 %v2259, 32
        %v2262 = vpop.permute.xlu0 %2261
        %v2264 = vsel %vm1727, %v2258, %v2262
        %2266 = vrot.lane.b32.xlu0 %v825, 96
        %v2267 = vpop.permute.xlu0 %2266
        %v2269 = vcombine.high %v825, 0.0
        %v2271 = vunpack.c.l.s4 1983009808
        %v2272 = vunpack.c.0.s8 %v2271
        %v2273 = vlaneseq
        %v2274 = vshrl.u32 %v2273, 7
        %v2275 = vsub.s32 %v2272, %v2274
        %v2276 = vrot.slane %v825, %v2275
        %v2278 = vunpack.c.l.s4 1983009808
        %v2279 = vunpack.c.0.s8 %v2278
        %v2280 = vlaneseq
        %v2281 = vshrl.u32 %v2280, 7
        %v2282 = vsub.s32 %v2279, %v2281
        %v2283 = vrot.slane %v2269, %v2282
        %v2284 = vcombine.high %v2267, 0.0
        %v2286 = vunpack.c.l.s4 1983009808
        %v2287 = vunpack.c.0.s8 %v2286
        %v2288 = vlaneseq
        %v2289 = vshrl.u32 %v2288, 7
        %v2290 = vsub.s32 %v2287, %v2289
        %v2291 = vrot.slane %v2267, %v2290
        %v2293 = vunpack.c.l.s4 1983009808
        %v2294 = vunpack.c.0.s8 %v2293
        %v2295 = vlaneseq
        %v2296 = vshrl.u32 %v2295, 7
        %v2297 = vsub.s32 %v2294, %v2296
        %v2298 = vrot.slane %v2284, %v2297
        %v2299 = vcombine.low %v2276, %v2291
        %v2300 = vcombine.high %v2276, %v2291
        %v2302 = vunpack.c.l.s4 1934713408
        %v2303 = vunpack.c.0.s8 %v2302
        %v2304 = vlaneseq
        %v2305 = vshrl.u32 %v2304, 7
        %v2306 = vsub.s32 %v2303, %v2305
        %v2307 = vrot.slane %v2299, %v2306
        %v2309 = vunpack.c.l.s4 1934713408
        %v2310 = vunpack.c.0.s8 %v2309
        %v2311 = vlaneseq
        %v2312 = vshrl.u32 %v2311, 7
        %v2313 = vsub.s32 %v2310, %v2312
        %v2314 = vrot.slane %v2300, %v2313
        %v2315 = vcombine.low %v2283, %v2298
        %v2316 = vcombine.high %v2283, %v2298
        %v2318 = vunpack.c.l.s4 1934713408
        %v2319 = vunpack.c.0.s8 %v2318
        %v2320 = vlaneseq
        %v2321 = vshrl.u32 %v2320, 7
        %v2322 = vsub.s32 %v2319, %v2321
        %v2323 = vrot.slane %v2315, %v2322
        %v2325 = vunpack.c.l.s4 1934713408
        %v2326 = vunpack.c.0.s8 %v2325
        %v2327 = vlaneseq
        %v2328 = vshrl.u32 %v2327, 7
        %v2329 = vsub.s32 %v2326, %v2328
        %v2330 = vrot.slane %v2316, %v2329
        %v2331 = vcombine.high %v2307, 0.0
        %v2332 = vcombine.high %v2314, 0.0
        %v2333 = vcombine.high %v2323, 0.0
        %v2334 = vcombine.high %v2330, 0.0
        %v2335 = vcombine.low %v2307, %v2314
        %v2337 = vunpack.c.l.s4 1983009808
        %v2338 = vunpack.c.0.s8 %v2337
        %v2339 = vlaneseq
        %v2340 = vshrl.u32 %v2339, 7
        %v2341 = vsub.s32 %v2338, %v2340
        %v2342 = vrot.slane %v2335, %v2341
        %v2343 = vcombine.low %v2331, %v2332
        %v2345 = vunpack.c.l.s4 1983009808
        %v2346 = vunpack.c.0.s8 %v2345
        %v2347 = vlaneseq
        %v2348 = vshrl.u32 %v2347, 7
        %v2349 = vsub.s32 %v2346, %v2348
        %v2350 = vrot.slane %v2343, %v2349
        %v2351 = vcombine.low %v2323, %v2330
        %v2353 = vunpack.c.l.s4 1983009808
        %v2354 = vunpack.c.0.s8 %v2353
        %v2355 = vlaneseq
        %v2356 = vshrl.u32 %v2355, 7
        %v2357 = vsub.s32 %v2354, %v2356
        %v2358 = vrot.slane %v2351, %v2357
        %v2359 = vcombine.low %v2333, %v2334
        %v2361 = vunpack.c.l.s4 1983009808
        %v2362 = vunpack.c.0.s8 %v2361
        %v2363 = vlaneseq
        %v2364 = vshrl.u32 %v2363, 7
        %v2365 = vsub.s32 %v2362, %v2364
        %v2366 = vrot.slane %v2359, %v2365
        %v2367 = vcombine.low %v2342, %v2350
        %v2369 = vunpack.c.l.s4 1934713408
        %v2370 = vunpack.c.0.s8 %v2369
        %v2371 = vlaneseq
        %v2372 = vshrl.u32 %v2371, 7
        %v2373 = vsub.s32 %v2370, %v2372
        %v2374 = vrot.slane %v2367, %v2373
        %v2375 = vcombine.low %v2358, %v2366
        %v2377 = vunpack.c.l.s4 1934713408
        %v2378 = vunpack.c.0.s8 %v2377
        %v2379 = vlaneseq
        %v2380 = vshrl.u32 %v2379, 7
        %v2381 = vsub.s32 %v2378, %v2380
        %v2382 = vrot.slane %v2375, %v2381
        %v2383 = vcombine.low %v2374, %v2382
        %v2384 = vcombine.high %v2374, %v2382
        %v2385 = vpack.c.bf16 %v2383, %v2383
        %v2386 = vpack.c.bf16 %v2384, %v2384
        %2387 = vrot.lane.b32.xlu0 %v825, 64
        %v2388 = vpop.permute.xlu0 %2387
        %2389 = vrot.lane.b32.xlu0 %v2267, 64
        %v2390 = vpop.permute.xlu0 %2389
        %v2393 = vcombine.high %v2388, 0.0
        %v2395 = vunpack.c.l.s4 1983009808
        %v2396 = vunpack.c.0.s8 %v2395
        %v2397 = vlaneseq
        %v2398 = vshrl.u32 %v2397, 7
        %v2399 = vsub.s32 %v2396, %v2398
        %v2400 = vrot.slane %v2388, %v2399
        %v2402 = vunpack.c.l.s4 1983009808
        %v2403 = vunpack.c.0.s8 %v2402
        %v2404 = vlaneseq
        %v2405 = vshrl.u32 %v2404, 7
        %v2406 = vsub.s32 %v2403, %v2405
        %v2407 = vrot.slane %v2393, %v2406
        %v2408 = vcombine.high %v2390, 0.0
        %v2410 = vunpack.c.l.s4 1983009808
        %v2411 = vunpack.c.0.s8 %v2410
        %v2412 = vlaneseq
        %v2413 = vshrl.u32 %v2412, 7
        %v2414 = vsub.s32 %v2411, %v2413
        %v2415 = vrot.slane %v2390, %v2414
        %v2417 = vunpack.c.l.s4 1983009808
        %v2418 = vunpack.c.0.s8 %v2417
        %v2419 = vlaneseq
        %v2420 = vshrl.u32 %v2419, 7
        %v2421 = vsub.s32 %v2418, %v2420
        %v2422 = vrot.slane %v2408, %v2421
        %v2423 = vcombine.low %v2400, %v2415
        %v2424 = vcombine.high %v2400, %v2415
        %v2426 = vunpack.c.l.s4 1934713408
        %v2427 = vunpack.c.0.s8 %v2426
        %v2428 = vlaneseq
        %v2429 = vshrl.u32 %v2428, 7
        %v2430 = vsub.s32 %v2427, %v2429
        %v2431 = vrot.slane %v2423, %v2430
        %v2433 = vunpack.c.l.s4 1934713408
        %v2434 = vunpack.c.0.s8 %v2433
        %v2435 = vlaneseq
        %v2436 = vshrl.u32 %v2435, 7
        %v2437 = vsub.s32 %v2434, %v2436
        %v2438 = vrot.slane %v2424, %v2437
        %v2439 = vcombine.low %v2407, %v2422
        %v2440 = vcombine.high %v2407, %v2422
        %v2442 = vunpack.c.l.s4 1934713408
        %v2443 = vunpack.c.0.s8 %v2442
        %v2444 = vlaneseq
        %v2445 = vshrl.u32 %v2444, 7
        %v2446 = vsub.s32 %v2443, %v2445
        %v2447 = vrot.slane %v2439, %v2446
        %v2449 = vunpack.c.l.s4 1934713408
        %v2450 = vunpack.c.0.s8 %v2449
        %v2451 = vlaneseq
        %v2452 = vshrl.u32 %v2451, 7
        %v2453 = vsub.s32 %v2450, %v2452
        %v2454 = vrot.slane %v2440, %v2453
        %v2455 = vcombine.high %v2431, 0.0
        %v2456 = vcombine.high %v2438, 0.0
        %v2457 = vcombine.high %v2447, 0.0
        %v2458 = vcombine.high %v2454, 0.0
        %v2459 = vcombine.low %v2431, %v2438
        %v2461 = vunpack.c.l.s4 1983009808
        %v2462 = vunpack.c.0.s8 %v2461
        %v2463 = vlaneseq
        %v2464 = vshrl.u32 %v2463, 7
        %v2465 = vsub.s32 %v2462, %v2464
        %v2466 = vrot.slane %v2459, %v2465
        %v2467 = vcombine.low %v2455, %v2456
        %v2469 = vunpack.c.l.s4 1983009808
        %v2470 = vunpack.c.0.s8 %v2469
        %v2471 = vlaneseq
        %v2472 = vshrl.u32 %v2471, 7
        %v2473 = vsub.s32 %v2470, %v2472
        %v2474 = vrot.slane %v2467, %v2473
        %v2475 = vcombine.low %v2447, %v2454
        %v2477 = vunpack.c.l.s4 1983009808
        %v2478 = vunpack.c.0.s8 %v2477
        %v2479 = vlaneseq
        %v2480 = vshrl.u32 %v2479, 7
        %v2481 = vsub.s32 %v2478, %v2480
        %v2482 = vrot.slane %v2475, %v2481
        %v2483 = vcombine.low %v2457, %v2458
        %v2485 = vunpack.c.l.s4 1983009808
        %v2486 = vunpack.c.0.s8 %v2485
        %v2487 = vlaneseq
        %v2488 = vshrl.u32 %v2487, 7
        %v2489 = vsub.s32 %v2486, %v2488
        %v2490 = vrot.slane %v2483, %v2489
        %v2491 = vcombine.low %v2466, %v2474
        %v2493 = vunpack.c.l.s4 1934713408
        %v2494 = vunpack.c.0.s8 %v2493
        %v2495 = vlaneseq
        %v2496 = vshrl.u32 %v2495, 7
        %v2497 = vsub.s32 %v2494, %v2496
        %v2498 = vrot.slane %v2491, %v2497
        %v2499 = vcombine.low %v2482, %v2490
        %v2501 = vunpack.c.l.s4 1934713408
        %v2502 = vunpack.c.0.s8 %v2501
        %v2503 = vlaneseq
        %v2504 = vshrl.u32 %v2503, 7
        %v2505 = vsub.s32 %v2502, %v2504
        %v2506 = vrot.slane %v2499, %v2505
        %v2507 = vcombine.low %v2498, %v2506
        %v2508 = vcombine.high %v2498, %v2506
        %v2509 = vpack.c.bf16 %v2507, %v2507
        %v2510 = vpack.c.bf16 %v2508, %v2508
        %2512 = vrot.lane.b32.xlu0 %v827, 96
        %v2513 = vpop.permute.xlu0 %2512
        %v2515 = vcombine.high %v827, 0.0
        %v2517 = vunpack.c.l.s4 1983009808
        %v2518 = vunpack.c.0.s8 %v2517
        %v2519 = vlaneseq
        %v2520 = vshrl.u32 %v2519, 7
        %v2521 = vsub.s32 %v2518, %v2520
        %v2522 = vrot.slane %v827, %v2521
        %v2524 = vunpack.c.l.s4 1983009808
        %v2525 = vunpack.c.0.s8 %v2524
        %v2526 = vlaneseq
        %v2527 = vshrl.u32 %v2526, 7
        %v2528 = vsub.s32 %v2525, %v2527
        %v2529 = vrot.slane %v2515, %v2528
        %v2530 = vcombine.high %v2513, 0.0
        %v2532 = vunpack.c.l.s4 1983009808
        %v2533 = vunpack.c.0.s8 %v2532
        %v2534 = vlaneseq
        %v2535 = vshrl.u32 %v2534, 7
        %v2536 = vsub.s32 %v2533, %v2535
        %v2537 = vrot.slane %v2513, %v2536
        %v2539 = vunpack.c.l.s4 1983009808
        %v2540 = vunpack.c.0.s8 %v2539
        %v2541 = vlaneseq
        %v2542 = vshrl.u32 %v2541, 7
        %v2543 = vsub.s32 %v2540, %v2542
        %v2544 = vrot.slane %v2530, %v2543
        %v2545 = vcombine.low %v2522, %v2537
        %v2546 = vcombine.high %v2522, %v2537
        %v2548 = vunpack.c.l.s4 1934713408
        %v2549 = vunpack.c.0.s8 %v2548
        %v2550 = vlaneseq
        %v2551 = vshrl.u32 %v2550, 7
        %v2552 = vsub.s32 %v2549, %v2551
        %v2553 = vrot.slane %v2545, %v2552
        %v2555 = vunpack.c.l.s4 1934713408
        %v2556 = vunpack.c.0.s8 %v2555
        %v2557 = vlaneseq
        %v2558 = vshrl.u32 %v2557, 7
        %v2559 = vsub.s32 %v2556, %v2558
        %v2560 = vrot.slane %v2546, %v2559
        %v2561 = vcombine.low %v2529, %v2544
        %v2562 = vcombine.high %v2529, %v2544
        %v2564 = vunpack.c.l.s4 1934713408
        %v2565 = vunpack.c.0.s8 %v2564
        %v2566 = vlaneseq
        %v2567 = vshrl.u32 %v2566, 7
        %v2568 = vsub.s32 %v2565, %v2567
        %v2569 = vrot.slane %v2561, %v2568
        %v2571 = vunpack.c.l.s4 1934713408
        %v2572 = vunpack.c.0.s8 %v2571
        %v2573 = vlaneseq
        %v2574 = vshrl.u32 %v2573, 7
        %v2575 = vsub.s32 %v2572, %v2574
        %v2576 = vrot.slane %v2562, %v2575
        %v2577 = vcombine.high %v2553, 0.0
        %v2578 = vcombine.high %v2560, 0.0
        %v2579 = vcombine.high %v2569, 0.0
        %v2580 = vcombine.high %v2576, 0.0
        %v2581 = vcombine.low %v2553, %v2560
        %v2583 = vunpack.c.l.s4 1983009808
        %v2584 = vunpack.c.0.s8 %v2583
        %v2585 = vlaneseq
        %v2586 = vshrl.u32 %v2585, 7
        %v2587 = vsub.s32 %v2584, %v2586
        %v2588 = vrot.slane %v2581, %v2587
        %v2589 = vcombine.low %v2577, %v2578
        %v2591 = vunpack.c.l.s4 1983009808
        %v2592 = vunpack.c.0.s8 %v2591
        %v2593 = vlaneseq
        %v2594 = vshrl.u32 %v2593, 7
        %v2595 = vsub.s32 %v2592, %v2594
        %v2596 = vrot.slane %v2589, %v2595
        %v2597 = vcombine.low %v2569, %v2576
        %v2599 = vunpack.c.l.s4 1983009808
        %v2600 = vunpack.c.0.s8 %v2599
        %v2601 = vlaneseq
        %v2602 = vshrl.u32 %v2601, 7
        %v2603 = vsub.s32 %v2600, %v2602
        %v2604 = vrot.slane %v2597, %v2603
        %v2605 = vcombine.low %v2579, %v2580
        %v2607 = vunpack.c.l.s4 1983009808
        %v2608 = vunpack.c.0.s8 %v2607
        %v2609 = vlaneseq
        %v2610 = vshrl.u32 %v2609, 7
        %v2611 = vsub.s32 %v2608, %v2610
        %v2612 = vrot.slane %v2605, %v2611
        %v2613 = vcombine.low %v2588, %v2596
        %v2615 = vunpack.c.l.s4 1934713408
        %v2616 = vunpack.c.0.s8 %v2615
        %v2617 = vlaneseq
        %v2618 = vshrl.u32 %v2617, 7
        %v2619 = vsub.s32 %v2616, %v2618
        %v2620 = vrot.slane %v2613, %v2619
        %v2621 = vcombine.low %v2604, %v2612
        %v2623 = vunpack.c.l.s4 1934713408
        %v2624 = vunpack.c.0.s8 %v2623
        %v2625 = vlaneseq
        %v2626 = vshrl.u32 %v2625, 7
        %v2627 = vsub.s32 %v2624, %v2626
        %v2628 = vrot.slane %v2621, %v2627
        %v2629 = vcombine.low %v2620, %v2628
        %v2630 = vcombine.high %v2620, %v2628
        %v2631 = vpack.c.bf16 %v2629, %v2629
        %v2632 = vpack.c.bf16 %v2630, %v2630
        %2634 = vrot.lane.b32.xlu0 %v1110, 96
        %v2635 = vpop.permute.xlu0 %2634
        %v2637 = vcombine.high %v1110, 0.0
        %v2639 = vunpack.c.l.s4 1983009808
        %v2640 = vunpack.c.0.s8 %v2639
        %v2641 = vlaneseq
        %v2642 = vshrl.u32 %v2641, 7
        %v2643 = vsub.s32 %v2640, %v2642
        %v2644 = vrot.slane %v1110, %v2643
        %v2646 = vunpack.c.l.s4 1983009808
        %v2647 = vunpack.c.0.s8 %v2646
        %v2648 = vlaneseq
        %v2649 = vshrl.u32 %v2648, 7
        %v2650 = vsub.s32 %v2647, %v2649
        %v2651 = vrot.slane %v2637, %v2650
        %v2652 = vcombine.high %v2635, 0.0
        %v2654 = vunpack.c.l.s4 1983009808
        %v2655 = vunpack.c.0.s8 %v2654
        %v2656 = vlaneseq
        %v2657 = vshrl.u32 %v2656, 7
        %v2658 = vsub.s32 %v2655, %v2657
        %v2659 = vrot.slane %v2635, %v2658
        %v2661 = vunpack.c.l.s4 1983009808
        %v2662 = vunpack.c.0.s8 %v2661
        %v2663 = vlaneseq
        %v2664 = vshrl.u32 %v2663, 7
        %v2665 = vsub.s32 %v2662, %v2664
        %v2666 = vrot.slane %v2652, %v2665
        %v2667 = vcombine.low %v2644, %v2659
        %v2668 = vcombine.high %v2644, %v2659
        %v2670 = vunpack.c.l.s4 1934713408
        %v2671 = vunpack.c.0.s8 %v2670
        %v2672 = vlaneseq
        %v2673 = vshrl.u32 %v2672, 7
        %v2674 = vsub.s32 %v2671, %v2673
        %v2675 = vrot.slane %v2667, %v2674
        %v2677 = vunpack.c.l.s4 1934713408
        %v2678 = vunpack.c.0.s8 %v2677
        %v2679 = vlaneseq
        %v2680 = vshrl.u32 %v2679, 7
        %v2681 = vsub.s32 %v2678, %v2680
        %v2682 = vrot.slane %v2668, %v2681
        %v2683 = vcombine.low %v2651, %v2666
        %v2684 = vcombine.high %v2651, %v2666
        %v2686 = vunpack.c.l.s4 1934713408
        %v2687 = vunpack.c.0.s8 %v2686
        %v2688 = vlaneseq
        %v2689 = vshrl.u32 %v2688, 7
        %v2690 = vsub.s32 %v2687, %v2689
        %v2691 = vrot.slane %v2683, %v2690
        %v2693 = vunpack.c.l.s4 1934713408
        %v2694 = vunpack.c.0.s8 %v2693
        %v2695 = vlaneseq
        %v2696 = vshrl.u32 %v2695, 7
        %v2697 = vsub.s32 %v2694, %v2696
        %v2698 = vrot.slane %v2684, %v2697
        %v2699 = vcombine.high %v2675, 0.0
        %v2700 = vcombine.high %v2682, 0.0
        %v2701 = vcombine.high %v2691, 0.0
        %v2702 = vcombine.high %v2698, 0.0
        %v2703 = vcombine.low %v2675, %v2682
        %v2705 = vunpack.c.l.s4 1983009808
        %v2706 = vunpack.c.0.s8 %v2705
        %v2707 = vlaneseq
        %v2708 = vshrl.u32 %v2707, 7
        %v2709 = vsub.s32 %v2706, %v2708
        %v2710 = vrot.slane %v2703, %v2709
        %v2711 = vcombine.low %v2699, %v2700
        %v2713 = vunpack.c.l.s4 1983009808
        %v2714 = vunpack.c.0.s8 %v2713
        %v2715 = vlaneseq
        %v2716 = vshrl.u32 %v2715, 7
        %v2717 = vsub.s32 %v2714, %v2716
        %v2718 = vrot.slane %v2711, %v2717
        %v2719 = vcombine.low %v2691, %v2698
        %v2721 = vunpack.c.l.s4 1983009808
        %v2722 = vunpack.c.0.s8 %v2721
        %v2723 = vlaneseq
        %v2724 = vshrl.u32 %v2723, 7
        %v2725 = vsub.s32 %v2722, %v2724
        %v2726 = vrot.slane %v2719, %v2725
        %v2727 = vcombine.low %v2701, %v2702
        %v2729 = vunpack.c.l.s4 1983009808
        %v2730 = vunpack.c.0.s8 %v2729
        %v2731 = vlaneseq
        %v2732 = vshrl.u32 %v2731, 7
        %v2733 = vsub.s32 %v2730, %v2732
        %v2734 = vrot.slane %v2727, %v2733
        %v2735 = vcombine.low %v2710, %v2718
        %v2737 = vunpack.c.l.s4 1934713408
        %v2738 = vunpack.c.0.s8 %v2737
        %v2739 = vlaneseq
        %v2740 = vshrl.u32 %v2739, 7
        %v2741 = vsub.s32 %v2738, %v2740
        %v2742 = vrot.slane %v2735, %v2741
        %v2743 = vcombine.low %v2726, %v2734
        %v2745 = vunpack.c.l.s4 1934713408
        %v2746 = vunpack.c.0.s8 %v2745
        %v2747 = vlaneseq
        %v2748 = vshrl.u32 %v2747, 7
        %v2749 = vsub.s32 %v2746, %v2748
        %v2750 = vrot.slane %v2743, %v2749
        %v2751 = vcombine.low %v2742, %v2750
        %v2752 = vcombine.high %v2742, %v2750
        %v2753 = vpack.c.bf16 %v2751, %v2751
        %v2754 = vpack.c.bf16 %v2752, %v2752
        %2755 = vrot.lane.b32.xlu0 %v1110, 64
        %v2756 = vpop.permute.xlu0 %2755
        %2757 = vrot.lane.b32.xlu0 %v2635, 64
        %v2758 = vpop.permute.xlu0 %2757
        %v2761 = vcombine.high %v2756, 0.0
        %v2763 = vunpack.c.l.s4 1983009808
        %v2764 = vunpack.c.0.s8 %v2763
        %v2765 = vlaneseq
        %v2766 = vshrl.u32 %v2765, 7
        %v2767 = vsub.s32 %v2764, %v2766
        %v2768 = vrot.slane %v2756, %v2767
        %v2770 = vunpack.c.l.s4 1983009808
        %v2771 = vunpack.c.0.s8 %v2770
        %v2772 = vlaneseq
        %v2773 = vshrl.u32 %v2772, 7
        %v2774 = vsub.s32 %v2771, %v2773
        %v2775 = vrot.slane %v2761, %v2774
        %v2776 = vcombine.high %v2758, 0.0
        %v2778 = vunpack.c.l.s4 1983009808
        %v2779 = vunpack.c.0.s8 %v2778
        %v2780 = vlaneseq
        %v2781 = vshrl.u32 %v2780, 7
        %v2782 = vsub.s32 %v2779, %v2781
        %v2783 = vrot.slane %v2758, %v2782
        %v2785 = vunpack.c.l.s4 1983009808
        %v2786 = vunpack.c.0.s8 %v2785
        %v2787 = vlaneseq
        %v2788 = vshrl.u32 %v2787, 7
        %v2789 = vsub.s32 %v2786, %v2788
        %v2790 = vrot.slane %v2776, %v2789
        %v2791 = vcombine.low %v2768, %v2783
        %v2792 = vcombine.high %v2768, %v2783
        %v2794 = vunpack.c.l.s4 1934713408
        %v2795 = vunpack.c.0.s8 %v2794
        %v2796 = vlaneseq
        %v2797 = vshrl.u32 %v2796, 7
        %v2798 = vsub.s32 %v2795, %v2797
        %v2799 = vrot.slane %v2791, %v2798
        %v2801 = vunpack.c.l.s4 1934713408
        %v2802 = vunpack.c.0.s8 %v2801
        %v2803 = vlaneseq
        %v2804 = vshrl.u32 %v2803, 7
        %v2805 = vsub.s32 %v2802, %v2804
        %v2806 = vrot.slane %v2792, %v2805
        %v2807 = vcombine.low %v2775, %v2790
        %v2808 = vcombine.high %v2775, %v2790
        %v2810 = vunpack.c.l.s4 1934713408
        %v2811 = vunpack.c.0.s8 %v2810
        %v2812 = vlaneseq
        %v2813 = vshrl.u32 %v2812, 7
        %v2814 = vsub.s32 %v2811, %v2813
        %v2815 = vrot.slane %v2807, %v2814
        %v2817 = vunpack.c.l.s4 1934713408
        %v2818 = vunpack.c.0.s8 %v2817
        %v2819 = vlaneseq
        %v2820 = vshrl.u32 %v2819, 7
        %v2821 = vsub.s32 %v2818, %v2820
        %v2822 = vrot.slane %v2808, %v2821
        %v2823 = vcombine.high %v2799, 0.0
        %v2824 = vcombine.high %v2806, 0.0
        %v2825 = vcombine.high %v2815, 0.0
        %v2826 = vcombine.high %v2822, 0.0
        %v2827 = vcombine.low %v2799, %v2806
        %v2829 = vunpack.c.l.s4 1983009808
        %v2830 = vunpack.c.0.s8 %v2829
        %v2831 = vlaneseq
        %v2832 = vshrl.u32 %v2831, 7
        %v2833 = vsub.s32 %v2830, %v2832
        %v2834 = vrot.slane %v2827, %v2833
        %v2835 = vcombine.low %v2823, %v2824
        %v2837 = vunpack.c.l.s4 1983009808
        %v2838 = vunpack.c.0.s8 %v2837
        %v2839 = vlaneseq
        %v2840 = vshrl.u32 %v2839, 7
        %v2841 = vsub.s32 %v2838, %v2840
        %v2842 = vrot.slane %v2835, %v2841
        %v2843 = vcombine.low %v2815, %v2822
        %v2845 = vunpack.c.l.s4 1983009808
        %v2846 = vunpack.c.0.s8 %v2845
        %v2847 = vlaneseq
        %v2848 = vshrl.u32 %v2847, 7
        %v2849 = vsub.s32 %v2846, %v2848
        %v2850 = vrot.slane %v2843, %v2849
        %v2851 = vcombine.low %v2825, %v2826
        %v2853 = vunpack.c.l.s4 1983009808
        %v2854 = vunpack.c.0.s8 %v2853
        %v2855 = vlaneseq
        %v2856 = vshrl.u32 %v2855, 7
        %v2857 = vsub.s32 %v2854, %v2856
        %v2858 = vrot.slane %v2851, %v2857
        %v2859 = vcombine.low %v2834, %v2842
        %v2861 = vunpack.c.l.s4 1934713408
        %v2862 = vunpack.c.0.s8 %v2861
        %v2863 = vlaneseq
        %v2864 = vshrl.u32 %v2863, 7
        %v2865 = vsub.s32 %v2862, %v2864
        %v2866 = vrot.slane %v2859, %v2865
        %v2867 = vcombine.low %v2850, %v2858
        %v2869 = vunpack.c.l.s4 1934713408
        %v2870 = vunpack.c.0.s8 %v2869
        %v2871 = vlaneseq
        %v2872 = vshrl.u32 %v2871, 7
        %v2873 = vsub.s32 %v2870, %v2872
        %v2874 = vrot.slane %v2867, %v2873
        %v2875 = vcombine.low %v2866, %v2874
        %v2876 = vcombine.high %v2866, %v2874
        %v2877 = vpack.c.bf16 %v2875, %v2875
        %v2878 = vpack.c.bf16 %v2876, %v2876
        %v2880 = vsel %vm1727, %v2385, 0
        %v2883 = vsel %vm1727, %v2509, 0
        %2885 = vmatprep.subr.bf16.mxu0 0
        %2886 = vmatpush1.bf16.xpose.msra.mxu0 0
        %2887 = vmatprep.subr.bf16.mxu0 0
        %2888 = vmatpush1.bf16.xpose.msra.mxu0 0
        %2889 = vmatprep.subr.bf16.mxu0 0
        %2890 = vmatpush1.bf16.xpose.msra.mxu0 0
        %2891 = vmatprep.subr.bf16.mxu0 0
        %2892 = vmatpush1.bf16.xpose.msra.mxu0 0
        %2893 = vmatprep.subr.bf16.mxu0 0
        %2894 = vmatpush1.bf16.xpose.msra.mxu0 0
        %2895 = vmatprep.subr.bf16.mxu0 0
        %2896 = vmatpush1.bf16.xpose.msra.mxu0 0
        %2897 = vmatprep.subr.bf16.mxu0 0
        %2898 = vmatpush1.bf16.xpose.msra.mxu0 0
        %2899 = vmatprep.subr.bf16.mxu0 0
        %2900 = vmatpush1.bf16.xpose.msra.mxu0 %v2883
        %2901 = vmatprep.subr.bf16.mxu0 0
        %2902 = vmatpush2.bf16.xpose.msra.mxu0 0
        %2903 = vmatprep.subr.bf16.mxu0 0
        %2904 = vmatpush2.bf16.xpose.msra.mxu0 0
        %2905 = vmatprep.subr.bf16.mxu0 0
        %2906 = vmatpush2.bf16.xpose.msra.mxu0 0
        %2907 = vmatprep.subr.bf16.mxu0 0
        %2908 = vmatpush2.bf16.xpose.msra.mxu0 0
        %2909 = vmatprep.subr.bf16.mxu0 0
        %2910 = vmatpush2.bf16.xpose.msra.mxu0 0
        %2911 = vmatprep.subr.bf16.mxu0 0
        %2912 = vmatpush2.bf16.xpose.msra.mxu0 0
        %2913 = vmatprep.subr.bf16.mxu0 0
        %2914 = vmatpush2.bf16.xpose.msra.mxu0 0
        %2915 = vmatprep.subr.bf16.mxu0 0
        %2916 = vmatpush2.bf16.xpose.msra.mxu0 0
        %2917 = vmatprep.mubr.bf16.mxu0 0
        %2918 = vmatmul.mubr.bf16.gmra.mxu0 %v2880
        %v2919 = vpop.f32.mrf.mxu0
        %v2920 = vadd.f32 0.0, %v2919
        %v2921 = vpop.f32.mrf.mxu0
        %v2922 = vpop.f32.mrf.mxu0
        %v2923 = vpop.f32.mrf.mxu0
        %2924 = vdwg.mxu0
        %v2926 = vsel %vm1727, %v2386, 0
        %v2929 = vsel %vm1727, %v2510, 0
        %2931 = vmatprep.subr.bf16.mxu0 0
        %2932 = vmatpush1.bf16.xpose.msra.mxu0 0
        %2933 = vmatprep.subr.bf16.mxu0 0
        %2934 = vmatpush1.bf16.xpose.msra.mxu0 0
        %2935 = vmatprep.subr.bf16.mxu0 0
        %2936 = vmatpush1.bf16.xpose.msra.mxu0 0
        %2937 = vmatprep.subr.bf16.mxu0 0
        %2938 = vmatpush1.bf16.xpose.msra.mxu0 0
        %2939 = vmatprep.subr.bf16.mxu0 0
        %2940 = vmatpush1.bf16.xpose.msra.mxu0 0
        %2941 = vmatprep.subr.bf16.mxu0 0
        %2942 = vmatpush1.bf16.xpose.msra.mxu0 0
        %2943 = vmatprep.subr.bf16.mxu0 0
        %2944 = vmatpush1.bf16.xpose.msra.mxu0 0
        %2945 = vmatprep.subr.bf16.mxu0 0
        %2946 = vmatpush1.bf16.xpose.msra.mxu0 %v2929
        %2947 = vmatprep.subr.bf16.mxu0 0
        %2948 = vmatpush2.bf16.xpose.msra.mxu0 0
        %2949 = vmatprep.subr.bf16.mxu0 0
        %2950 = vmatpush2.bf16.xpose.msra.mxu0 0
        %2951 = vmatprep.subr.bf16.mxu0 0
        %2952 = vmatpush2.bf16.xpose.msra.mxu0 0
        %2953 = vmatprep.subr.bf16.mxu0 0
        %2954 = vmatpush2.bf16.xpose.msra.mxu0 0
        %2955 = vmatprep.subr.bf16.mxu0 0
        %2956 = vmatpush2.bf16.xpose.msra.mxu0 0
        %2957 = vmatprep.subr.bf16.mxu0 0
        %2958 = vmatpush2.bf16.xpose.msra.mxu0 0
        %2959 = vmatprep.subr.bf16.mxu0 0
        %2960 = vmatpush2.bf16.xpose.msra.mxu0 0
        %2961 = vmatprep.subr.bf16.mxu0 0
        %2962 = vmatpush2.bf16.xpose.msra.mxu0 0
        %2963 = vmatprep.mubr.bf16.mxu0 0
        %2964 = vmatmul.mubr.bf16.gmra.mxu0 %v2926
        %v2965 = vpop.f32.mrf.mxu0
        %v2966 = vadd.f32 0.0, %v2965
        %v2967 = vpop.f32.mrf.mxu0
        %v2968 = vpop.f32.mrf.mxu0
        %v2969 = vpop.f32.mrf.mxu0
        %2970 = vdwg.mxu0
        %v2971 = vmul.f32 %v2920, 0.17677669
        %v2972 = vmul.f32 %v2966, 0.17677669
        %v2974 = vsel %vm1727, %v2753, 0
        %2976 = vmatprep.subr.bf16.mxu0 0
        %2977 = vmatpush1.bf16.xpose.msra.mxu0 0
        %2978 = vmatprep.subr.bf16.mxu0 0
        %2979 = vmatpush1.bf16.xpose.msra.mxu0 0
        %2980 = vmatprep.subr.bf16.mxu0 0
        %2981 = vmatpush1.bf16.xpose.msra.mxu0 0
        %2982 = vmatprep.subr.bf16.mxu0 0
        %2983 = vmatpush1.bf16.xpose.msra.mxu0 0
        %2984 = vmatprep.subr.bf16.mxu0 0
        %2985 = vmatpush1.bf16.xpose.msra.mxu0 0
        %2986 = vmatprep.subr.bf16.mxu0 0
        %2987 = vmatpush1.bf16.xpose.msra.mxu0 0
        %2988 = vmatprep.subr.bf16.mxu0 0
        %2989 = vmatpush1.bf16.xpose.msra.mxu0 0
        %2990 = vmatprep.subr.bf16.mxu0 0
        %2991 = vmatpush1.bf16.xpose.msra.mxu0 %v2974
        %2992 = vmatprep.subr.bf16.mxu0 0
        %2993 = vmatpush2.bf16.xpose.msra.mxu0 0
        %2994 = vmatprep.subr.bf16.mxu0 0
        %2995 = vmatpush2.bf16.xpose.msra.mxu0 0
        %2996 = vmatprep.subr.bf16.mxu0 0
        %2997 = vmatpush2.bf16.xpose.msra.mxu0 0
        %2998 = vmatprep.subr.bf16.mxu0 0
        %2999 = vmatpush2.bf16.xpose.msra.mxu0 0
        %3000 = vmatprep.subr.bf16.mxu0 0
        %3001 = vmatpush2.bf16.xpose.msra.mxu0 0
        %3002 = vmatprep.subr.bf16.mxu0 0
        %3003 = vmatpush2.bf16.xpose.msra.mxu0 0
        %3004 = vmatprep.subr.bf16.mxu0 0
        %3005 = vmatpush2.bf16.xpose.msra.mxu0 0
        %3006 = vmatprep.subr.bf16.mxu0 0
        %3007 = vmatpush2.bf16.xpose.msra.mxu0 0
        %3008 = vmatprep.mubr.bf16.mxu0 0
        %3009 = vmatmul.mubr.bf16.gmra.mxu0 %v2880
        %v3010 = vpop.f32.mrf.mxu0
        %v3011 = vadd.f32 0.0, %v3010
        %v3012 = vpop.f32.mrf.mxu0
        %v3013 = vpop.f32.mrf.mxu0
        %v3014 = vpop.f32.mrf.mxu0
        %3015 = vdwg.mxu0
        %v3017 = vsel %vm1727, %v2754, 0
        %3019 = vmatprep.subr.bf16.mxu0 0
        %3020 = vmatpush1.bf16.xpose.msra.mxu0 0
        %3021 = vmatprep.subr.bf16.mxu0 0
        %3022 = vmatpush1.bf16.xpose.msra.mxu0 0
        %3023 = vmatprep.subr.bf16.mxu0 0
        %3024 = vmatpush1.bf16.xpose.msra.mxu0 0
        %3025 = vmatprep.subr.bf16.mxu0 0
        %3026 = vmatpush1.bf16.xpose.msra.mxu0 0
        %3027 = vmatprep.subr.bf16.mxu0 0
        %3028 = vmatpush1.bf16.xpose.msra.mxu0 0
        %3029 = vmatprep.subr.bf16.mxu0 0
        %3030 = vmatpush1.bf16.xpose.msra.mxu0 0
        %3031 = vmatprep.subr.bf16.mxu0 0
        %3032 = vmatpush1.bf16.xpose.msra.mxu0 0
        %3033 = vmatprep.subr.bf16.mxu0 0
        %3034 = vmatpush1.bf16.xpose.msra.mxu0 %v3017
        %3035 = vmatprep.subr.bf16.mxu0 0
        %3036 = vmatpush2.bf16.xpose.msra.mxu0 0
        %3037 = vmatprep.subr.bf16.mxu0 0
        %3038 = vmatpush2.bf16.xpose.msra.mxu0 0
        %3039 = vmatprep.subr.bf16.mxu0 0
        %3040 = vmatpush2.bf16.xpose.msra.mxu0 0
        %3041 = vmatprep.subr.bf16.mxu0 0
        %3042 = vmatpush2.bf16.xpose.msra.mxu0 0
        %3043 = vmatprep.subr.bf16.mxu0 0
        %3044 = vmatpush2.bf16.xpose.msra.mxu0 0
        %3045 = vmatprep.subr.bf16.mxu0 0
        %3046 = vmatpush2.bf16.xpose.msra.mxu0 0
        %3047 = vmatprep.subr.bf16.mxu0 0
        %3048 = vmatpush2.bf16.xpose.msra.mxu0 0
        %3049 = vmatprep.subr.bf16.mxu0 0
        %3050 = vmatpush2.bf16.xpose.msra.mxu0 0
        %3051 = vmatprep.mubr.bf16.mxu0 0
        %3052 = vmatmul.mubr.bf16.gmra.mxu0 %v2926
        %v3053 = vpop.f32.mrf.mxu0
        %v3054 = vadd.f32 0.0, %v3053
        %v3055 = vpop.f32.mrf.mxu0
        %v3056 = vpop.f32.mrf.mxu0
        %v3057 = vpop.f32.mrf.mxu0
        %3058 = vdwg.mxu0
        %v3059 = vmul.f32 %v3011, 0.17677669
        %v3060 = vmul.f32 %v3054, 0.17677669
        %v3061 = vsel %vm1910, %v2971, -inf
        %3062 = vmax.xlane.f32.xlu0 %v3061
        %v3063 = vpop.xlane.xlu0 %3062
        %v3064 = vsel %vm1910, %v2972, -inf
        %3065 = vmax.xlane.f32.xlu0 %v3064
        %v3066 = vpop.xlane.xlu0 %3065
        %v3067 = vsel %vm1910, %v3059, -inf
        %3068 = vmax.xlane.f32.xlu0 %v3067
        %v3069 = vpop.xlane.xlu0 %3068
        %v3070 = vsel %vm1910, %v3060, -inf
        %3071 = vmax.xlane.f32.xlu0 %v3070
        %v3072 = vpop.xlane.xlu0 %3071
        %v3073 = vmax.f32 %v3063, %v3069
        %v3074 = vmax.f32 %v3066, %v3072
        %v3075 = vsub.f32 %v2971, %v3073
        %v3076 = vsub.f32 %v2972, %v3074
        %v3077 = vmul.f32 %v3075, 1.442695
        %v3078 = vpow.pop %v3077
        %v3079 = vmul.f32 %v3076, 1.442695
        %v3080 = vpow.pop %v3079
        %v3081 = vsub.f32 %v3059, %v3073
        %v3082 = vsub.f32 %v3060, %v3074
        %v3083 = vmul.f32 %v3081, 1.442695
        %v3084 = vpow.pop %v3083
        %v3085 = vmul.f32 %v3082, 1.442695
        %v3086 = vpow.pop %v3085
        %v3087 = vsel %vm1910, %v3078, 0.0
        %3088 = vadd.xlane.f32.xlu0 %v3087
        %v3089 = vpop.xlane.xlu0 %3088
        %v3090 = vsel %vm1910, %v3080, 0.0
        %3091 = vadd.xlane.f32.xlu0 %v3090
        %v3092 = vpop.xlane.xlu0 %3091
        %v3093 = vsel %vm1910, %v3084, 0.0
        %3094 = vadd.xlane.f32.xlu0 %v3093
        %v3095 = vpop.xlane.xlu0 %3094
        %v3096 = vsel %vm1910, %v3086, 0.0
        %3097 = vadd.xlane.f32.xlu0 %v3096
        %v3098 = vpop.xlane.xlu0 %3097
        %v3099 = vadd.f32 %v3089, %v3095
        %v3100 = vadd.f32 %v3092, %v3098
        %v3101 = vpack.c.bf16 %v3078, %v3078
        %v3102 = vpack.c.bf16 %v3080, %v3080
        %v3103 = vpack.c.bf16 %v3084, %v3084
        %v3104 = vpack.c.bf16 %v3086, %v3086
        %v3106 = vsel %vm1910, %v3103, 0
        %v3109 = vsel %vm1958, %v2877, 0
        %3111 = vmatprep.subr.bf16.mxu0 0
        %3112 = vmatpush1.bf16.msra.mxu0 0
        %3113 = vmatprep.subr.bf16.mxu0 0
        %3114 = vmatpush1.bf16.msra.mxu0 0
        %3115 = vmatprep.subr.bf16.mxu0 0
        %3116 = vmatpush1.bf16.msra.mxu0 0
        %3117 = vmatprep.subr.bf16.mxu0 0
        %3118 = vmatpush1.bf16.msra.mxu0 0
        %3119 = vmatprep.subr.bf16.mxu0 0
        %3120 = vmatpush1.bf16.msra.mxu0 0
        %3121 = vmatprep.subr.bf16.mxu0 0
        %3122 = vmatpush1.bf16.msra.mxu0 0
        %3123 = vmatprep.subr.bf16.mxu0 0
        %3124 = vmatpush1.bf16.msra.mxu0 0
        %3125 = vmatprep.subr.bf16.mxu0 0
        %3126 = vmatpush1.bf16.msra.mxu0 %v3109
        %3127 = vmatprep.subr.bf16.mxu0 0
        %3128 = vmatpush2.bf16.msra.mxu0 0
        %3129 = vmatprep.subr.bf16.mxu0 0
        %3130 = vmatpush2.bf16.msra.mxu0 0
        %3131 = vmatprep.subr.bf16.mxu0 0
        %3132 = vmatpush2.bf16.msra.mxu0 0
        %3133 = vmatprep.subr.bf16.mxu0 0
        %3134 = vmatpush2.bf16.msra.mxu0 0
        %3135 = vmatprep.subr.bf16.mxu0 0
        %3136 = vmatpush2.bf16.msra.mxu0 0
        %3137 = vmatprep.subr.bf16.mxu0 0
        %3138 = vmatpush2.bf16.msra.mxu0 0
        %3139 = vmatprep.subr.bf16.mxu0 0
        %3140 = vmatpush2.bf16.msra.mxu0 0
        %3141 = vmatprep.subr.bf16.mxu0 0
        %3142 = vmatpush2.bf16.msra.mxu0 0
        %3143 = vmatprep.mubr.bf16.mxu0 0
        %3144 = vmatmul.mubr.bf16.gmra.mxu0 %v3106
        %v3145 = vpop.f32.mrf.mxu0
        %v3146 = vadd.f32 0.0, %v3145
        %v3147 = vpop.f32.mrf.mxu0
        %v3148 = vpop.f32.mrf.mxu0
        %v3149 = vpop.f32.mrf.mxu0
        %3150 = vdwg.mxu0
        %v3152 = vsel %vm1910, %v3104, 0
        %v3155 = vsel %vm1958, %v2878, 0
        %3157 = vmatprep.subr.bf16.mxu0 0
        %3158 = vmatpush1.bf16.msra.mxu0 0
        %3159 = vmatprep.subr.bf16.mxu0 0
        %3160 = vmatpush1.bf16.msra.mxu0 0
        %3161 = vmatprep.subr.bf16.mxu0 0
        %3162 = vmatpush1.bf16.msra.mxu0 0
        %3163 = vmatprep.subr.bf16.mxu0 0
        %3164 = vmatpush1.bf16.msra.mxu0 0
        %3165 = vmatprep.subr.bf16.mxu0 0
        %3166 = vmatpush1.bf16.msra.mxu0 0
        %3167 = vmatprep.subr.bf16.mxu0 0
        %3168 = vmatpush1.bf16.msra.mxu0 0
        %3169 = vmatprep.subr.bf16.mxu0 0
        %3170 = vmatpush1.bf16.msra.mxu0 0
        %3171 = vmatprep.subr.bf16.mxu0 0
        %3172 = vmatpush1.bf16.msra.mxu0 %v3155
        %3173 = vmatprep.subr.bf16.mxu0 0
        %3174 = vmatpush2.bf16.msra.mxu0 0
        %3175 = vmatprep.subr.bf16.mxu0 0
        %3176 = vmatpush2.bf16.msra.mxu0 0
        %3177 = vmatprep.subr.bf16.mxu0 0
        %3178 = vmatpush2.bf16.msra.mxu0 0
        %3179 = vmatprep.subr.bf16.mxu0 0
        %3180 = vmatpush2.bf16.msra.mxu0 0
        %3181 = vmatprep.subr.bf16.mxu0 0
        %3182 = vmatpush2.bf16.msra.mxu0 0
        %3183 = vmatprep.subr.bf16.mxu0 0
        %3184 = vmatpush2.bf16.msra.mxu0 0
        %3185 = vmatprep.subr.bf16.mxu0 0
        %3186 = vmatpush2.bf16.msra.mxu0 0
        %3187 = vmatprep.subr.bf16.mxu0 0
        %3188 = vmatpush2.bf16.msra.mxu0 0
        %3189 = vmatprep.mubr.bf16.mxu0 0
        %3190 = vmatmul.mubr.bf16.gmra.mxu0 %v3152
        %v3191 = vpop.f32.mrf.mxu0
        %v3192 = vadd.f32 0.0, %v3191
        %v3193 = vpop.f32.mrf.mxu0
        %v3194 = vpop.f32.mrf.mxu0
        %v3195 = vpop.f32.mrf.mxu0
        %3196 = vdwg.mxu0
        %v3198 = vsel %vm1910, %v3101, 0
        %v3201 = vsel %vm1958, %v2631, 0
        %3203 = vmatprep.subr.bf16.mxu0 0
        %3204 = vmatpush1.bf16.msra.mxu0 0
        %3205 = vmatprep.subr.bf16.mxu0 0
        %3206 = vmatpush1.bf16.msra.mxu0 0
        %3207 = vmatprep.subr.bf16.mxu0 0
        %3208 = vmatpush1.bf16.msra.mxu0 0
        %3209 = vmatprep.subr.bf16.mxu0 0
        %3210 = vmatpush1.bf16.msra.mxu0 0
        %3211 = vmatprep.subr.bf16.mxu0 0
        %3212 = vmatpush1.bf16.msra.mxu0 0
        %3213 = vmatprep.subr.bf16.mxu0 0
        %3214 = vmatpush1.bf16.msra.mxu0 0
        %3215 = vmatprep.subr.bf16.mxu0 0
        %3216 = vmatpush1.bf16.msra.mxu0 0
        %3217 = vmatprep.subr.bf16.mxu0 0
        %3218 = vmatpush1.bf16.msra.mxu0 %v3201
        %3219 = vmatprep.subr.bf16.mxu0 0
        %3220 = vmatpush2.bf16.msra.mxu0 0
        %3221 = vmatprep.subr.bf16.mxu0 0
        %3222 = vmatpush2.bf16.msra.mxu0 0
        %3223 = vmatprep.subr.bf16.mxu0 0
        %3224 = vmatpush2.bf16.msra.mxu0 0
        %3225 = vmatprep.subr.bf16.mxu0 0
        %3226 = vmatpush2.bf16.msra.mxu0 0
        %3227 = vmatprep.subr.bf16.mxu0 0
        %3228 = vmatpush2.bf16.msra.mxu0 0
        %3229 = vmatprep.subr.bf16.mxu0 0
        %3230 = vmatpush2.bf16.msra.mxu0 0
        %3231 = vmatprep.subr.bf16.mxu0 0
        %3232 = vmatpush2.bf16.msra.mxu0 0
        %3233 = vmatprep.subr.bf16.mxu0 0
        %3234 = vmatpush2.bf16.msra.mxu0 0
        %3235 = vmatprep.mubr.bf16.mxu0 0
        %3236 = vmatmul.mubr.bf16.gmra.mxu0 %v3198
        %v3237 = vpop.f32.mrf.mxu0
        %v3238 = vadd.f32 %v3146, %v3237
        %v3239 = vpop.f32.mrf.mxu0
        %v3240 = vpop.f32.mrf.mxu0
        %v3241 = vpop.f32.mrf.mxu0
        %3242 = vdwg.mxu0
        %v3244 = vsel %vm1910, %v3102, 0
        %v3247 = vsel %vm1958, %v2632, 0
        %3249 = vmatprep.subr.bf16.mxu0 0
        %3250 = vmatpush1.bf16.msra.mxu0 0
        %3251 = vmatprep.subr.bf16.mxu0 0
        %3252 = vmatpush1.bf16.msra.mxu0 0
        %3253 = vmatprep.subr.bf16.mxu0 0
        %3254 = vmatpush1.bf16.msra.mxu0 0
        %3255 = vmatprep.subr.bf16.mxu0 0
        %3256 = vmatpush1.bf16.msra.mxu0 0
        %3257 = vmatprep.subr.bf16.mxu0 0
        %3258 = vmatpush1.bf16.msra.mxu0 0
        %3259 = vmatprep.subr.bf16.mxu0 0
        %3260 = vmatpush1.bf16.msra.mxu0 0
        %3261 = vmatprep.subr.bf16.mxu0 0
        %3262 = vmatpush1.bf16.msra.mxu0 0
        %3263 = vmatprep.subr.bf16.mxu0 0
        %3264 = vmatpush1.bf16.msra.mxu0 %v3247
        %3265 = vmatprep.subr.bf16.mxu0 0
        %3266 = vmatpush2.bf16.msra.mxu0 0
        %3267 = vmatprep.subr.bf16.mxu0 0
        %3268 = vmatpush2.bf16.msra.mxu0 0
        %3269 = vmatprep.subr.bf16.mxu0 0
        %3270 = vmatpush2.bf16.msra.mxu0 0
        %3271 = vmatprep.subr.bf16.mxu0 0
        %3272 = vmatpush2.bf16.msra.mxu0 0
        %3273 = vmatprep.subr.bf16.mxu0 0
        %3274 = vmatpush2.bf16.msra.mxu0 0
        %3275 = vmatprep.subr.bf16.mxu0 0
        %3276 = vmatpush2.bf16.msra.mxu0 0
        %3277 = vmatprep.subr.bf16.mxu0 0
        %3278 = vmatpush2.bf16.msra.mxu0 0
        %3279 = vmatprep.subr.bf16.mxu0 0
        %3280 = vmatpush2.bf16.msra.mxu0 0
        %3281 = vmatprep.mubr.bf16.mxu0 0
        %3282 = vmatmul.mubr.bf16.gmra.mxu0 %v3244
        %v3283 = vpop.f32.mrf.mxu0
        %v3284 = vadd.f32 %v3192, %v3283
        %v3285 = vpop.f32.mrf.mxu0
        %v3286 = vpop.f32.mrf.mxu0
        %v3287 = vpop.f32.mrf.mxu0
        %3288 = vdwg.mxu0
        %v3289 = vrcp.pop %v3099
        %v3290 = vrcp.pop %v3100
        %v3291 = vmul.f32 %v3238, %v3289
        %v3292 = vmul.f32 %v3284, %v3290
        %v3293 = vcombine.high %v3291, 0.0
        %v3295 = vunpack.c.l.s4 1983009808
        %v3296 = vunpack.c.0.s8 %v3295
        %v3297 = vlaneseq
        %v3298 = vshrl.u32 %v3297, 7
        %v3299 = vsub.s32 %v3296, %v3298
        %v3300 = vrot.slane %v3291, %v3299
        %v3302 = vunpack.c.l.s4 1983009808
        %v3303 = vunpack.c.0.s8 %v3302
        %v3304 = vlaneseq
        %v3305 = vshrl.u32 %v3304, 7
        %v3306 = vsub.s32 %v3303, %v3305
        %v3307 = vrot.slane %v3293, %v3306
        %v3308 = vcombine.high %v3292, 0.0
        %v3310 = vunpack.c.l.s4 1983009808
        %v3311 = vunpack.c.0.s8 %v3310
        %v3312 = vlaneseq
        %v3313 = vshrl.u32 %v3312, 7
        %v3314 = vsub.s32 %v3311, %v3313
        %v3315 = vrot.slane %v3292, %v3314
        %v3317 = vunpack.c.l.s4 1983009808
        %v3318 = vunpack.c.0.s8 %v3317
        %v3319 = vlaneseq
        %v3320 = vshrl.u32 %v3319, 7
        %v3321 = vsub.s32 %v3318, %v3320
        %v3322 = vrot.slane %v3308, %v3321
        %v3323 = vcombine.low %v3300, %v3315
        %v3324 = vcombine.high %v3300, %v3315
        %v3326 = vunpack.c.l.s4 1934713408
        %v3327 = vunpack.c.0.s8 %v3326
        %v3328 = vlaneseq
        %v3329 = vshrl.u32 %v3328, 7
        %v3330 = vsub.s32 %v3327, %v3329
        %v3331 = vrot.slane %v3323, %v3330
        %v3333 = vunpack.c.l.s4 1934713408
        %v3334 = vunpack.c.0.s8 %v3333
        %v3335 = vlaneseq
        %v3336 = vshrl.u32 %v3335, 7
        %v3337 = vsub.s32 %v3334, %v3336
        %v3338 = vrot.slane %v3324, %v3337
        %v3339 = vcombine.low %v3307, %v3322
        %v3340 = vcombine.high %v3307, %v3322
        %v3342 = vunpack.c.l.s4 1934713408
        %v3343 = vunpack.c.0.s8 %v3342
        %v3344 = vlaneseq
        %v3345 = vshrl.u32 %v3344, 7
        %v3346 = vsub.s32 %v3343, %v3345
        %v3347 = vrot.slane %v3339, %v3346
        %v3349 = vunpack.c.l.s4 1934713408
        %v3350 = vunpack.c.0.s8 %v3349
        %v3351 = vlaneseq
        %v3352 = vshrl.u32 %v3351, 7
        %v3353 = vsub.s32 %v3350, %v3352
        %v3354 = vrot.slane %v3340, %v3353
        %v3355 = vcombine.high %v3331, 0.0
        %v3356 = vcombine.high %v3338, 0.0
        %v3357 = vcombine.high %v3347, 0.0
        %v3358 = vcombine.high %v3354, 0.0
        %v3359 = vcombine.low %v3331, %v3338
        %v3361 = vunpack.c.l.s4 1983009808
        %v3362 = vunpack.c.0.s8 %v3361
        %v3363 = vlaneseq
        %v3364 = vshrl.u32 %v3363, 7
        %v3365 = vsub.s32 %v3362, %v3364
        %v3366 = vrot.slane %v3359, %v3365
        %v3367 = vcombine.low %v3355, %v3356
        %v3369 = vunpack.c.l.s4 1983009808
        %v3370 = vunpack.c.0.s8 %v3369
        %v3371 = vlaneseq
        %v3372 = vshrl.u32 %v3371, 7
        %v3373 = vsub.s32 %v3370, %v3372
        %v3374 = vrot.slane %v3367, %v3373
        %v3375 = vcombine.low %v3347, %v3354
        %v3377 = vunpack.c.l.s4 1983009808
        %v3378 = vunpack.c.0.s8 %v3377
        %v3379 = vlaneseq
        %v3380 = vshrl.u32 %v3379, 7
        %v3381 = vsub.s32 %v3378, %v3380
        %v3382 = vrot.slane %v3375, %v3381
        %v3383 = vcombine.low %v3357, %v3358
        %v3385 = vunpack.c.l.s4 1983009808
        %v3386 = vunpack.c.0.s8 %v3385
        %v3387 = vlaneseq
        %v3388 = vshrl.u32 %v3387, 7
        %v3389 = vsub.s32 %v3386, %v3388
        %v3390 = vrot.slane %v3383, %v3389
        %v3391 = vcombine.low %v3366, %v3374
        %v3393 = vunpack.c.l.s4 1934713408
        %v3394 = vunpack.c.0.s8 %v3393
        %v3395 = vlaneseq
        %v3396 = vshrl.u32 %v3395, 7
        %v3397 = vsub.s32 %v3394, %v3396
        %v3398 = vrot.slane %v3391, %v3397
        %v3399 = vcombine.low %v3382, %v3390
        %v3401 = vunpack.c.l.s4 1934713408
        %v3402 = vunpack.c.0.s8 %v3401
        %v3403 = vlaneseq
        %v3404 = vshrl.u32 %v3403, 7
        %v3405 = vsub.s32 %v3402, %v3404
        %v3406 = vrot.slane %v3399, %v3405
        %v3407 = vcombine.low %v3398, %v3406
        %v3408 = vcombine.high %v3398, %v3406
        %3410 = vrot.lane.b32.xlu0 %v3408, 32
        %v3411 = vpop.permute.xlu0 %3410
        %v3413 = vsel %vm1727, %v3407, %v3411
        %v3414 = vpack.c.bf16 %v3413, %v2264
        %v3423 = vunpack.c.l.b16 %v671
        %v3424 = vunpack.c.l.b16 %v672
        %v3425 = vunpack.c.l.b16 %v673
        %v3426 = vunpack.c.l.b16 %v674
        %v3427 = vunpack.c.l.b16 %v675
        %v3428 = vunpack.c.l.b16 %v676
        %v3429 = vunpack.c.l.b16 %v677
        %v3430 = vunpack.c.l.b16 %v678
        %v3431 = vpack.c.b16 %v3424, %v3423
        %v3432 = vpack.c.b16 %v3426, %v3425
        %v3433 = vpack.c.b16 %v3428, %v3427
        %v3434 = vpack.c.b16 %v3430, %v3429
        %v3440 = vsel %vm782, %v3414, 0
        %3442 = vmatprep.subr.bf16.mxu0 0
        %3443 = vmatpush1.bf16.msra.mxu0 0
        %3444 = vmatprep.subr.bf16.mxu0 0
        %3445 = vmatpush1.bf16.msra.mxu0 0
        %3446 = vmatprep.subr.bf16.mxu0 0
        %3447 = vmatpush1.bf16.msra.mxu0 0
        %3448 = vmatprep.subr.bf16.mxu0 0
        %3449 = vmatpush1.bf16.msra.mxu0 0
        %3450 = vmatprep.subr.bf16.mxu0 0
        %3451 = vmatpush1.bf16.msra.mxu0 %v3434
        %3452 = vmatprep.subr.bf16.mxu0 0
        %3453 = vmatpush1.bf16.msra.mxu0 %v3433
        %3454 = vmatprep.subr.bf16.mxu0 0
        %3455 = vmatpush1.bf16.msra.mxu0 %v3432
        %3456 = vmatprep.subr.bf16.mxu0 0
        %3457 = vmatpush1.bf16.msra.mxu0 %v3431
        %3458 = vmatprep.subr.bf16.mxu0 0
        %3459 = vmatpush2.bf16.msra.mxu0 0
        %3460 = vmatprep.subr.bf16.mxu0 0
        %3461 = vmatpush2.bf16.msra.mxu0 0
        %3462 = vmatprep.subr.bf16.mxu0 0
        %3463 = vmatpush2.bf16.msra.mxu0 0
        %3464 = vmatprep.subr.bf16.mxu0 0
        %3465 = vmatpush2.bf16.msra.mxu0 0
        %3466 = vmatprep.subr.bf16.mxu0 0
        %3467 = vmatpush2.bf16.msra.mxu0 0
        %3468 = vmatprep.subr.bf16.mxu0 0
        %3469 = vmatpush2.bf16.msra.mxu0 0
        %3470 = vmatprep.subr.bf16.mxu0 0
        %3471 = vmatpush2.bf16.msra.mxu0 0
        %3472 = vmatprep.subr.bf16.mxu0 0
        %3473 = vmatpush2.bf16.msra.mxu0 0
        %3474 = vmatprep.mubr.bf16.mxu0 0
        %3475 = vmatmul.mubr.bf16.gmra.mxu0 %v3440
        %v3476 = vpop.f32.mrf.mxu0
        %v3477 = vadd.f32 0.0, %v3476
        %v3478 = vpop.f32.mrf.mxu0
        %v3479 = vpop.f32.mrf.mxu0
        %v3480 = vadd.f32 0.0, %v3479
        %v3481 = vpop.f32.mrf.mxu0
        %3482 = vdwg.mxu0
        %vm3483 = vcmp.ge.f32.partialorder %v3477, 0.0
        %vm3484 = vcmp.ge.f32.partialorder %v3480, 0.0
        %v3485 = vmul.f32 %v3477, 0.2
        %v3486 = vmul.f32 %v3480, 0.2
        %v3487 = vsel %vm3483, %v3477, %v3485
        %v3488 = vsel %vm3484, %v3480, %v3486
        %v3489 = vadd.f32 %v3487, %v645
        %v3490 = vadd.f32 %v3488, %v646
        %v3491 = vsel %vm782, %v3489, 0.0
        %3492 = vadd.xlane.f32.xlu0 %v3491
        %v3493 = vpop.xlane.xlu0 %3492
        %v3494 = vsel %vm782, %v3490, 0.0
        %3495 = vadd.xlane.f32.xlu0 %v3494
        %v3496 = vpop.xlane.xlu0 %3495
        %v3497 = vrcp.pop 64.0
        %v3498 = vmul.f32 %v3493, %v3497
        %v3499 = vmul.f32 %v3496, %v3497
        %v3500 = vsub.f32 %v3489, %v3498
        %v3501 = vsub.f32 %v3490, %v3499
        %v3502 = vmul.f32 %v3500, %v3500
        %v3503 = vmul.f32 %v3501, %v3501
        %v3504 = vsel %vm782, %v3502, 0.0
        %3505 = vadd.xlane.f32.xlu0 %v3504
        %v3506 = vpop.xlane.xlu0 %3505
        %v3507 = vsel %vm782, %v3503, 0.0
        %3508 = vadd.xlane.f32.xlu0 %v3507
        %v3509 = vpop.xlane.xlu0 %3508
        %v3510 = vmul.f32 %v3506, %v3497
        %v3511 = vmul.f32 %v3509, %v3497
        %v3512 = vadd.f32 %v3510, 1e-05
        %v3513 = vadd.f32 %v3511, 1e-05
        %v3514 = vrsqrt.pop %v3512
        %v3515 = vrsqrt.pop %v3513
        %v3516 = vmul.f32 %v3500, %v3514
        %v3517 = vmul.f32 %v3501, %v3515
        %v3519 = vlaneseq
        %v3520 = vshrl.u32 %v3519, 7
        %v3521 = vsub.s32 0, %v3520
        %v3522 = vrot.slane %v704, %v3521
        %v3524 = vmul.f32 %v3516, %v3522
        %v3525 = vmul.f32 %v3517, %v3522
        %v3527 = vlaneseq
        %v3528 = vshrl.u32 %v3527, 7
        %v3529 = vsub.s32 0, %v3528
        %v3530 = vrot.slane %v706, %v3529
        %v3532 = vadd.f32 %v3524, %v3530
        %v3533 = vadd.f32 %v3525, %v3530
        %v3534 = vpack.c.bf16 %v3533, %v3532
        %v3536 = vlaneseq
        %v3537 = vshrl.u32 %v3536, 7
        %v3538 = vsub.s32 0, %v3537
        %v3539 = vrot.slane %v690, %v3538
        %v3549 = vunpack.c.l.b16 %v681
        %v3550 = vunpack.c.l.b16 %v682
        %v3551 = vunpack.c.l.b16 %v683
        %v3552 = vunpack.c.l.b16 %v684
        %v3553 = vunpack.c.l.b16 %v685
        %v3554 = vunpack.c.l.b16 %v686
        %v3555 = vunpack.c.l.b16 %v687
        %v3556 = vunpack.c.l.b16 %v688
        %v3557 = vpack.c.b16 %v3550, %v3549
        %v3558 = vpack.c.b16 %v3552, %v3551
        %v3559 = vpack.c.b16 %v3554, %v3553
        %v3560 = vpack.c.b16 %v3556, %v3555
        %v3566 = vsel %vm782, %v3534, 0
        %3568 = vmatprep.subr.bf16.mxu0 0
        %3569 = vmatpush1.bf16.msra.mxu0 0
        %3570 = vmatprep.subr.bf16.mxu0 0
        %3571 = vmatpush1.bf16.msra.mxu0 0
        %3572 = vmatprep.subr.bf16.mxu0 0
        %3573 = vmatpush1.bf16.msra.mxu0 0
        %3574 = vmatprep.subr.bf16.mxu0 0
        %3575 = vmatpush1.bf16.msra.mxu0 0
        %3576 = vmatprep.subr.bf16.mxu0 0
        %3577 = vmatpush1.bf16.msra.mxu0 %v3560
        %3578 = vmatprep.subr.bf16.mxu0 0
        %3579 = vmatpush1.bf16.msra.mxu0 %v3559
        %3580 = vmatprep.subr.bf16.mxu0 0
        %3581 = vmatpush1.bf16.msra.mxu0 %v3558
        %3582 = vmatprep.subr.bf16.mxu0 0
        %3583 = vmatpush1.bf16.msra.mxu0 %v3557
        %3584 = vmatprep.subr.bf16.mxu0 0
        %3585 = vmatpush2.bf16.msra.mxu0 0
        %3586 = vmatprep.subr.bf16.mxu0 0
        %3587 = vmatpush2.bf16.msra.mxu0 0
        %3588 = vmatprep.subr.bf16.mxu0 0
        %3589 = vmatpush2.bf16.msra.mxu0 0
        %3590 = vmatprep.subr.bf16.mxu0 0
        %3591 = vmatpush2.bf16.msra.mxu0 0
        %3592 = vmatprep.subr.bf16.mxu0 0
        %3593 = vmatpush2.bf16.msra.mxu0 0
        %3594 = vmatprep.subr.bf16.mxu0 0
        %3595 = vmatpush2.bf16.msra.mxu0 0
        %3596 = vmatprep.subr.bf16.mxu0 0
        %3597 = vmatpush2.bf16.msra.mxu0 0
        %3598 = vmatprep.subr.bf16.mxu0 0
        %3599 = vmatpush2.bf16.msra.mxu0 0
        %3600 = vmatprep.mubr.bf16.mxu0 0
        %3601 = vmatmul.mubr.bf16.gmra.mxu0 %v3566
        %v3602 = vpop.f32.mrf.mxu0
        %v3603 = vadd.f32 %v3539, %v3602
        %v3604 = vpop.f32.mrf.mxu0
        %v3605 = vpop.f32.mrf.mxu0
        %v3606 = vadd.f32 %v3539, %v3605
        %v3607 = vpop.f32.mrf.mxu0
        %3608 = vdwg.mxu0
        %vm3609 = vcmp.ge.f32.partialorder %v3603, 0.0
        %vm3610 = vcmp.ge.f32.partialorder %v3606, 0.0
        %v3611 = vmul.f32 %v3603, 0.2
        %v3612 = vmul.f32 %v3606, 0.2
        %v3613 = vsel %vm3609, %v3603, %v3611
        %v3614 = vsel %vm3610, %v3606, %v3612
        %v3615 = vpack.c.bf16 %v3614, %v3613
        %v3617 = vlaneseq
        %v3618 = vshrl.u32 %v3617, 7
        %v3619 = vsub.s32 0, %v3618
        %v3620 = vrot.slane %v702, %v3619
        %v3630 = vunpack.c.l.b16 %v693
        %v3631 = vunpack.c.l.b16 %v694
        %v3632 = vunpack.c.l.b16 %v695
        %v3633 = vunpack.c.l.b16 %v696
        %v3634 = vunpack.c.l.b16 %v697
        %v3635 = vunpack.c.l.b16 %v698
        %v3636 = vunpack.c.l.b16 %v699
        %v3637 = vunpack.c.l.b16 %v700
        %v3638 = vpack.c.b16 %v3631, %v3630
        %v3639 = vpack.c.b16 %v3633, %v3632
        %v3640 = vpack.c.b16 %v3635, %v3634
        %v3641 = vpack.c.b16 %v3637, %v3636
        %v3647 = vsel %vm782, %v3615, 0
        %3649 = vmatprep.subr.bf16.mxu0 0
        %3650 = vmatpush1.bf16.msra.mxu0 0
        %3651 = vmatprep.subr.bf16.mxu0 0
        %3652 = vmatpush1.bf16.msra.mxu0 0
        %3653 = vmatprep.subr.bf16.mxu0 0
        %3654 = vmatpush1.bf16.msra.mxu0 0
        %3655 = vmatprep.subr.bf16.mxu0 0
        %3656 = vmatpush1.bf16.msra.mxu0 0
        %3657 = vmatprep.subr.bf16.mxu0 0
        %3658 = vmatpush1.bf16.msra.mxu0 %v3641
        %3659 = vmatprep.subr.bf16.mxu0 0
        %3660 = vmatpush1.bf16.msra.mxu0 %v3640
        %3661 = vmatprep.subr.bf16.mxu0 0
        %3662 = vmatpush1.bf16.msra.mxu0 %v3639
        %3663 = vmatprep.subr.bf16.mxu0 0
        %3664 = vmatpush1.bf16.msra.mxu0 %v3638
        %3665 = vmatprep.subr.bf16.mxu0 0
        %3666 = vmatpush2.bf16.msra.mxu0 0
        %3667 = vmatprep.subr.bf16.mxu0 0
        %3668 = vmatpush2.bf16.msra.mxu0 0
        %3669 = vmatprep.subr.bf16.mxu0 0
        %3670 = vmatpush2.bf16.msra.mxu0 0
        %3671 = vmatprep.subr.bf16.mxu0 0
        %3672 = vmatpush2.bf16.msra.mxu0 0
        %3673 = vmatprep.subr.bf16.mxu0 0
        %3674 = vmatpush2.bf16.msra.mxu0 0
        %3675 = vmatprep.subr.bf16.mxu0 0
        %3676 = vmatpush2.bf16.msra.mxu0 0
        %3677 = vmatprep.subr.bf16.mxu0 0
        %3678 = vmatpush2.bf16.msra.mxu0 0
        %3679 = vmatprep.subr.bf16.mxu0 0
        %3680 = vmatpush2.bf16.msra.mxu0 0
        %3681 = vmatprep.mubr.bf16.mxu0 0
        %3682 = vmatmul.mubr.bf16.gmra.mxu0 %v3647
        %v3683 = vpop.f32.mrf.mxu0
        %v3684 = vadd.f32 %v3620, %v3683
        %v3685 = vpop.f32.mrf.mxu0
        %v3686 = vpop.f32.mrf.mxu0
        %v3687 = vadd.f32 %v3620, %v3686
        %v3688 = vpop.f32.mrf.mxu0
        %3689 = vdwg.mxu0
        %v3690 = vadd.f32 %v3532, %v3684
        %v3691 = vadd.f32 %v3533, %v3687
        %v3692 = vsel %vm782, %v3690, 0.0
        %3693 = vadd.xlane.f32.xlu0 %v3692
        %v3694 = vpop.xlane.xlu0 %3693
        %v3695 = vsel %vm782, %v3691, 0.0
        %3696 = vadd.xlane.f32.xlu0 %v3695
        %v3697 = vpop.xlane.xlu0 %3696
        %v3698 = vmul.f32 %v3694, %v3497
        %v3699 = vmul.f32 %v3697, %v3497
        %v3700 = vsub.f32 %v3690, %v3698
        %v3701 = vsub.f32 %v3691, %v3699
        %v3702 = vmul.f32 %v3700, %v3700
        %v3703 = vmul.f32 %v3701, %v3701
        %v3704 = vsel %vm782, %v3702, 0.0
        %3705 = vadd.xlane.f32.xlu0 %v3704
        %v3706 = vpop.xlane.xlu0 %3705
        %v3707 = vsel %vm782, %v3703, 0.0
        %3708 = vadd.xlane.f32.xlu0 %v3707
        %v3709 = vpop.xlane.xlu0 %3708
        %v3710 = vmul.f32 %v3706, %v3497
        %v3711 = vmul.f32 %v3709, %v3497
        %v3712 = vadd.f32 %v3710, 1e-05
        %v3713 = vadd.f32 %v3711, 1e-05
        %v3714 = vrsqrt.pop %v3712
        %v3715 = vrsqrt.pop %v3713
        %v3716 = vmul.f32 %v3700, %v3714
        %v3717 = vmul.f32 %v3701, %v3715
        %v3719 = vlaneseq
        %v3720 = vshrl.u32 %v3719, 7
        %v3721 = vsub.s32 0, %v3720
        %v3722 = vrot.slane %v708, %v3721
        %v3724 = vmul.f32 %v3716, %v3722
        %v3725 = vmul.f32 %v3717, %v3722
        %v3727 = vlaneseq
        %v3728 = vshrl.u32 %v3727, 7
        %v3729 = vsub.s32 0, %v3728
        %v3730 = vrot.slane %v710, %v3729
        %v3732 = vadd.f32 %v3724, %v3730
        %v3733 = vadd.f32 %v3725, %v3730
        %3734 = vst.msk [vmem:[#allocation2] sm:$0xff] %vm782, %v3732
        %3735 = vst.msk [vmem:[#allocation2 + $0x8] sm:$0xff] %vm782, %v3733
        %p3736 = scmp.eq.s32.totalorder %s40, 1
        // Predicated region
        $region113: #{tpu_custom_call.1} parent=83 // pred_check
          %p3737 = pneg %p3736
        $region114: #{tpu_custom_call.1} parent=83 // pred_check_branch
          %3739 = sbr.rel (%p3737) target = $region116
        $region115: #{tpu_custom_call.1} parent=83 // pred_region
          %v3741 = vrot.slane %v3733, 7
          %vm3743 = vcmask 1040384
          %v3744 = vsel %vm3743, %v3732, %v3741
          %v3745 = vld [vmem:[#allocation12] sm:$0xf]
          %v3746 = vld [vmem:[#allocation12 + $0x4] sm:$0xf]
          %v3747 = vld [vmem:[#allocation12 + $0x8] sm:$0xf]
          %v3748 = vld [vmem:[#allocation12 + $0xc] sm:$0xf]
          %v3749 = vld [vmem:[#allocation12 + $0x10] sm:$0xf]
          %v3750 = vld [vmem:[#allocation12 + $0x14] sm:$0xf]
          %v3751 = vld [vmem:[#allocation12 + $0x18] sm:$0xf]
          %v3752 = vld [vmem:[#allocation12 + $0x1c] sm:$0xf]
          %v3753 = vpack.c.bf16 %v3744, %v3744
          %v3762 = vunpack.c.l.b16 %v3745
          %v3763 = vunpack.c.l.b16 %v3746
          %v3764 = vunpack.c.l.b16 %v3747
          %v3765 = vunpack.c.l.b16 %v3748
          %v3766 = vunpack.c.l.b16 %v3749
          %v3767 = vunpack.c.l.b16 %v3750
          %v3768 = vunpack.c.l.b16 %v3751
          %v3769 = vunpack.c.l.b16 %v3752
          %v3770 = vpack.c.b16 %v3763, %v3762
          %v3771 = vpack.c.b16 %v3765, %v3764
          %v3772 = vpack.c.b16 %v3767, %v3766
          %v3773 = vpack.c.b16 %v3769, %v3768
          %v3779 = vsel %vm782, %v3753, 0
          %3781 = vmatprep.subr.bf16.mxu0 0
          %3782 = vmatpush1.bf16.msra.mxu0 0
          %3783 = vmatprep.subr.bf16.mxu0 0
          %3784 = vmatpush1.bf16.msra.mxu0 0
          %3785 = vmatprep.subr.bf16.mxu0 0
          %3786 = vmatpush1.bf16.msra.mxu0 0
          %3787 = vmatprep.subr.bf16.mxu0 0
          %3788 = vmatpush1.bf16.msra.mxu0 0
          %3789 = vmatprep.subr.bf16.mxu0 0
          %3790 = vmatpush1.bf16.msra.mxu0 %v3773
          %3791 = vmatprep.subr.bf16.mxu0 0
          %3792 = vmatpush1.bf16.msra.mxu0 %v3772
          %3793 = vmatprep.subr.bf16.mxu0 0
          %3794 = vmatpush1.bf16.msra.mxu0 %v3771
          %3795 = vmatprep.subr.bf16.mxu0 0
          %3796 = vmatpush1.bf16.msra.mxu0 %v3770
          %3797 = vmatprep.subr.bf16.mxu0 0
          %3798 = vmatpush2.bf16.msra.mxu0 0
          %3799 = vmatprep.subr.bf16.mxu0 0
          %3800 = vmatpush2.bf16.msra.mxu0 0
          %3801 = vmatprep.subr.bf16.mxu0 0
          %3802 = vmatpush2.bf16.msra.mxu0 0
          %3803 = vmatprep.subr.bf16.mxu0 0
          %3804 = vmatpush2.bf16.msra.mxu0 0
          %3805 = vmatprep.subr.bf16.mxu0 0
          %3806 = vmatpush2.bf16.msra.mxu0 0
          %3807 = vmatprep.subr.bf16.mxu0 0
          %3808 = vmatpush2.bf16.msra.mxu0 0
          %3809 = vmatprep.subr.bf16.mxu0 0
          %3810 = vmatpush2.bf16.msra.mxu0 0
          %3811 = vmatprep.subr.bf16.mxu0 0
          %3812 = vmatpush2.bf16.msra.mxu0 0
          %3813 = vmatprep.mubr.bf16.mxu0 0
          %3814 = vmatmul.mubr.bf16.gmra.mxu0 %v3779
          %v3815 = vpop.f32.mrf.mxu0
          %v3816 = vadd.f32 0.0, %v3815
          %v3817 = vpop.f32.mrf.mxu0
          %v3818 = vpop.f32.mrf.mxu0
          %v3819 = vpop.f32.mrf.mxu0
          %3820 = vdwg.mxu0
          %3821 = vst [vmem:[#allocation14] sm:$0x3] %v3816
        $region116: #{tpu_custom_call.1} parent=83 // pred_fallthru
          _
        // Predicated region
        $region117: #{tpu_custom_call.1} parent=83 // pred_check
          %p3822 = pneg %p406
        $region118: #{tpu_custom_call.1} parent=83 // pred_check_branch
          %3824 = sbr.rel (%p3822) target = $region120
        $region119: #{tpu_custom_call.1} parent=83 // pred_region
          %s3826 = ssub.s32 32, 32
          %3827 = vsyncadd [#allocation5], %s3826
          %s3828 = smul.addr %s39, 32
          %s3829 = scalar_lea.hbm %s16, %s3828
          %s3831 = sshll.u32 [#allocation14], 4
          %s3832 = int_to_ptr.vmem [resolvable:$true] %s3831
          %3834 = dma.vmem_to_hbm [thread:$0]  %s3832, 32, %s3829, [#allocation5]
        $region120: #{tpu_custom_call.1} parent=83 // pred_fallthru
          _
        // Predicated region
        $region121: #{tpu_custom_call.1} parent=83 // pred_check
          %p3835 = pneg %p432
        $region122: #{tpu_custom_call.1} parent=83 // pred_check_branch
          %3837 = sbr.rel (%p3835) target = $region124
        $region123: #{tpu_custom_call.1} parent=83 // pred_region
          %s3839 = ssub.s32 16, 16
          %3840 = vsyncadd [#allocation16], %s3839
          %s3841 = smul.addr %s39, 16
          %s3842 = scalar_lea.hbm %s17, %s3841
          %s3844 = sshll.u32 [#allocation15], 4
          %s3845 = int_to_ptr.vmem [resolvable:$true] %s3844
          %3847 = dma.vmem_to_hbm [thread:$0]  %s3845, 16, %s3842, [#allocation16]
        $region124: #{tpu_custom_call.1} parent=83 // pred_fallthru
          _
        // Predicated region
        $region125: #{tpu_custom_call.1} parent=83 // pred_check
          %p3848 = pneg %p406
        $region126: #{tpu_custom_call.1} parent=83 // pred_check_branch
          %3850 = sbr.rel (%p3848) target = $region128
        $region127: #{tpu_custom_call.1} parent=83 // pred_region
          %3851 = dma.done [#allocation5], 32
        $region128: #{tpu_custom_call.1} parent=83 // pred_fallthru
          _
        // Predicated region
        $region129: #{tpu_custom_call.1} parent=83 // pred_check
          %p3852 = pneg %p432
        $region130: #{tpu_custom_call.1} parent=83 // pred_check_branch
          %3854 = sbr.rel (%p3852) target = $region132
        $region131: #{tpu_custom_call.1} parent=83 // pred_region
          %3855 = dma.done [#allocation16], 16
        $region132: #{tpu_custom_call.1} parent=83 // pred_fallthru
          _
      $region84: #{tpu_custom_call.1} parent=5 // pred_fallthru
        _
      %p3856 = scmp.le.s32.totalorder 2, %s30
      // Predicated region
      $region133: #{tpu_custom_call.1} parent=5 // pred_check
        %p3857 = pneg %p3856
      $region134: #{tpu_custom_call.1} parent=5 // pred_check_branch
        %3859 = sbr.rel (%p3857) target = $region136
      $region135: #{tpu_custom_call.1} parent=5 // pred_region
        %s3860 = ssub.s32 %s30, 2
      $region136: #{tpu_custom_call.1} parent=5 // pred_fallthru
        _
    $region6: #{tpu_custom_call.1} parent=1 // loop_footer
      %s34 = sadd.s32 1, %s30
    $region7: #{tpu_custom_call.1} parent=1 // loop_footer_branch
      %29 = sbr.rel target = $region3
    $region8: #{tpu_custom_call.1} parent=1 // loop_exit
      _
    %3861 = vsyncpa [#allocation4], 1
    %s3862 = scalar_lea.sflag [#allocation4], 1
    %3863 = vsyncpa %s3862, 1
    %3864 = vsyncpa [#allocation7], 1
    %3865 = vsyncpa [#allocation10], 1
    %3866 = vsyncpa [#allocation13], 1
    %3867 = vsyncpa [#allocation5], 1
    %s3868 = scalar_lea.sflag [#allocation5], 1
    %3869 = vsyncpa %s3868, 1
    %3870 = vsyncpa [#allocation16], 1

</llo_original>
